<compile_context>
chip_gen: v7x
topology: tpu7x:2x2x1
jax: 0.10.0
libtpu: 0.0.40
codegen_flags: <defaults>
</compile_context>

<pallas_src>
import functools

import numpy as np
import jax
import jax.numpy as jnp
from jax import lax
from jax.experimental import pallas as pl
from jax.experimental.pallas import tpu as pltpu


# ----------------------------------------------------------------------------
# Static layer / shape bookkeeping (mirrors GeneticDiscriminator.__init__)
# ----------------------------------------------------------------------------
def build_layer_specs(genome):
    """[(c_in, c_out, kernel, activation-or-None), ...].  Note: the PyTorch loop reuses
    D_kernels[layer] for the (layer+1)-th conv -- replicated faithfully here."""
    filters = genome["D_filters"]
    kernels = genome["D_kernels"]
    acts = genome["D_activations"]
    specs = [(genome["num_channels"], filters[0], kernels[0], None)]
    for layer in range(len(filters) - 1):
        a = acts[layer] if layer < len(acts) else None
        if a == "prelu":
            # TODO(synk): PReLU (learnable per-channel slope) is not implemented in the kernel.
            raise NotImplementedError("prelu activation not implemented")
        act = a if a in ("relu", "selu") else None
        specs.append((filters[layer], filters[layer + 1], kernels[layer], act))
    return specs


def _shape_schedule(genome, h0, w0):
    """Static spatial bookkeeping for the flat (C, H*W0 + slack) activation layout."""
    specs = build_layer_specs(genome)
    L = len(specs)
    ks = [k for (_, _, k, _) in specs]
    slack = [0] * (L + 1)
    for l in range(L - 1, -1, -1):
        slack[l] = slack[l + 1] + (ks[l] - 1)
    H, Wd = [h0], [w0]
    for (_, _, k, _) in specs:
        H.append(H[-1] - k + 1)
        Wd.append(Wd[-1] - k + 1)
    assert H[-1] >= 1 and Wd[-1] >= 1, "conv stack shrinks the feature map below 1x1"
    F = [H[l] * w0 + slack[l] for l in range(L + 1)]
    chans = [specs[0][0]] + [co for (_, co, _, _) in specs]
    return specs, H, Wd, F, slack, chans


def _adaptive_pool_matrix(in_size, out_size):
    """Exact PyTorch adaptive-average-pool window arithmetic as an averaging matrix."""
    A = np.zeros((out_size, in_size), np.float32)
    for i in range(out_size):
        s = (i * in_size) // out_size
        e = -((-(i + 1) * in_size) // out_size)  # ceil((i+1)*in/out)
        A[i, s:e] = 1.0 / (e - s)
    return A


def _flat_pool_matrix(h_last, w_valid, row_stride, out_hw, f_last):
    """(f_last, out_hw^2) matrix P with x_flat @ P == AdaptiveAvgPool2d(x) flattened (i-major,
    j-minor); garbage columns (>= w_valid within each row) map to zero."""
    Ah = _adaptive_pool_matrix(h_last, out_hw)
    Aw = _adaptive_pool_matrix(w_valid, out_hw)
    P = np.zeros((f_last, out_hw * out_hw), np.float32)
    for oh in range(h_last):
        for ow in range(w_valid):
            P[oh * row_stride + ow, :] = np.outer(Ah[:, oh], Aw[:, ow]).reshape(-1)
    return P


# ----------------------------------------------------------------------------
# Fused discriminator kernel: conv stack -> (pool+flatten+linear) -> sigmoid
# ----------------------------------------------------------------------------
def _disc_fwd_kernel(*refs, meta, n_layers, c_last, row_stride):
    # refs: x, (w, b) * n_layers, q, b_clf, out, scratch_0..scratch_n_layers
    x_ref = refs[0]
    q_ref = refs[1 + 2 * n_layers]
    bclf_ref = refs[2 + 2 * n_layers]
    o_ref = refs[3 + 2 * n_layers]
    scr = refs[4 + 2 * n_layers:]

    # Stage this image's flat (C0, F0) activation into VMEM scratch 0.
    scr[0][...] = x_ref[0]

    # Conv stack: k*k tiny (C_out, C_in) @ (C_in, F_out) MXU dots over lane-shifted
    # views of the VMEM-resident activation, f32 accumulate, fused bias + activation.
    for l in range(n_layers):
        k, f_out, act = meta[l]
        w_ref = refs[1 + 2 * l]          # (k*k, C_out, C_in)
        b_ref = refs[2 + 2 * l]          # (C_out, 1)
        src = scr[l]
        acc = None
        for dy in range(k):
            for dx in range(k):
                sh = dy * row_stride + dx
                xs = src[:, pl.ds(sh, f_out)]                    # (C_in, F_out)
                wk = w_ref[dy * k + dx]                          # (C_out, C_in)
                t = jnp.dot(wk, xs, preferred_element_type=jnp.float32)
                acc = t if acc is None else acc + t
        acc = acc + b_ref[...]                                   # (C_out, 1) lane-broadcast
        if act == "relu":
            acc = jnp.maximum(acc, 0.0)
        elif act == "selu":
            alpha = 1.6732632423543772
            scale = 1.0507009873554805
            neg = alpha * (jnp.exp(jnp.minimum(acc, 0.0)) - 1.0)  # clamped: no transient inf
            acc = scale * jnp.where(acc > 0.0, acc, neg)
        scr[l + 1][...] = acc

    # Fused AdaptiveAvgPool2d + flatten + Linear + sigmoid.
    logits = bclf_ref[...]                                       # (1, 2)
    last = scr[n_layers]                                         # (C_last, F_last)
    for c in range(c_last):
        xrow = last[pl.ds(c, 1), :]                              # (1, F_last)
        logits = logits + jnp.dot(xrow, q_ref[c], preferred_element_type=jnp.float32)
    o_ref[0] = (1.0 / (1.0 + jnp.exp(-logits))).astype(o_ref.dtype)


def genetic_discriminator_forward(x_nchw, params, genome):
    if genome["adaptive_type"] == "max":
        # TODO(synk): AdaptiveMaxPool2d is not implemented (only 'avg' is fused here).
        raise NotImplementedError("adaptive_type='max' not implemented")

    N, C0, H0, W0 = x_nchw.shape
    assert C0 == genome["num_channels"]
    specs, H, Wd, F, slack, chans = _shape_schedule(genome, H0, W0)
    L = len(specs)
    A = genome["adaptive_size"]
    c_last = chans[-1]

    # Guard: the fused design keeps all activations VMEM-resident.
    scratch_bytes = sum(((chans[l] + 7) // 8) * 8 * ((F[l] + 127) // 128) * 128 * 4
                        for l in range(L + 1))
    assert scratch_bytes < 8 * 1024 * 1024, "genome too large for fused VMEM-resident kernel"

    # --- tiny host-side packing (weights are KB-scale; activations never touch HBM) ---
    x_flat = jnp.pad(x_nchw.astype(jnp.float32).reshape(N, C0, H0 * W0),
                     ((0, 0), (0, 0), (0, slack[0])))

    conv_args, conv_specs, meta = [], [], []
    for l, (ci, co, k, act) in enumerate(specs):
        w, b = params["conv"][l]
        w3 = jnp.transpose(w.astype(jnp.float32), (2, 3, 0, 1)).reshape(k * k, co, ci)
        b2 = b.astype(jnp.float32).reshape(co, 1)
        conv_args += [w3, b2]
        conv_specs += [pl.BlockSpec((k * k, co, ci), lambda n: (0, 0, 0)),
                       pl.BlockSpec((co, 1), lambda n: (0, 0))]
        meta.append((k, F[l + 1], act))

    # Compose avg-pool + flatten + Linear into one exact linear map Q[c, p, k].
    w_clf, b_clf = params["clf"]
    P = jnp.asarray(_flat_pool_matrix(H[L], Wd[L], W0, A, F[L]))       # (F_L, A*A)
    q = jnp.einsum("pm,kcm->cpk", P,
                   w_clf.astype(jnp.float32).reshape(2, c_last, A * A))
    b_clf2 = b_clf.astype(jnp.float32).reshape(1, 2)

    kernel = functools.partial(_disc_fwd_kernel, meta=tuple(meta), n_layers=L,
                               c_last=c_last, row_stride=W0)

    # Advisory cost estimate (per review): conv MACs + fused classifier contraction.
    flops = sum(2 * ci * co * k * k * H[l + 1] * Wd[l + 1]
                for l, (ci, co, k, act) in enumerate(specs))
    flops = N * (flops + 2 * c_last * F[L] * 2)
    transc = N * (2 + sum(co * H[l + 1] * Wd[l + 1]
                          for l, (ci, co, k, act) in enumerate(specs) if act == "selu"))
    bytes_acc = 4 * (x_flat.size + q.size + b_clf2.size + N * 2
                     + sum(a.size for a in conv_args))

    out = pl.pallas_call(
        kernel,
        out_shape=jax.ShapeDtypeStruct((N, 1, 2), jnp.float32),
        grid_spec=pltpu.PrefetchScalarGridSpec(
            num_scalar_prefetch=0,
            grid=(N,),
            in_specs=[pl.BlockSpec((1, C0, F[0]), lambda n: (n, 0, 0))]
                     + conv_specs
                     + [pl.BlockSpec((c_last, F[L], 2), lambda n: (0, 0, 0)),
                        pl.BlockSpec((1, 2), lambda n: (0, 0))],
            out_specs=pl.BlockSpec((1, 1, 2), lambda n: (n, 0, 0)),
            scratch_shapes=[pltpu.VMEM((chans[l], F[l]), jnp.float32)
                            for l in range(L + 1)],
        ),
        compiler_params=pltpu.CompilerParams(
            dimension_semantics=("parallel",),
            vmem_limit_bytes=32 * 1024 * 1024,
        ),
        cost_estimate=pl.CostEstimate(flops=int(flops), transcendentals=int(transc),
                                      bytes_accessed=int(bytes_acc)),
    )(x_flat, *conv_args, q, b_clf2)

    return out.reshape(N, 2)


# ----------------------------------------------------------------------------
# Parameter init (PyTorch default uniform +-1/sqrt(fan_in)) and pure-JAX reference
# ----------------------------------------------------------------------------
def init_params(genome, key):
    specs = build_layer_specs(genome)
    conv = []
    for i, (ci, co, k, _) in enumerate(specs):
        wkey, bkey = jax.random.split(jax.random.fold_in(key, i))
        bound = 1.0 / np.sqrt(ci * k * k)
        w = jax.random.uniform(wkey, (co, ci, k, k), jnp.float32, -bound, bound)
        b = jax.random.uniform(bkey, (co,), jnp.float32, -bound, bound)
        conv.append((w, b))
    A = genome["adaptive_size"]
    clf_feat = specs[-1][1] * A * A
    wkey, bkey = jax.random.split(jax.random.fold_in(key, 10_000))
    bound = 1.0 / np.sqrt(clf_feat)
    w_clf = jax.random.uniform(wkey, (2, clf_feat), jnp.float32, -bound, bound)
    b_clf = jax.random.uniform(bkey, (2,), jnp.float32, -bound, bound)
    return {"conv": conv, "clf": (w_clf, b_clf)}


def reference_forward(x, params, genome):
    """Pure-JAX/XLA reference of GeneticDiscriminator.forward (for validation)."""
    specs = build_layer_specs(genome)
    h = x.astype(jnp.float32)
    for (w, b), (ci, co, k, act) in zip(params["conv"], specs):
        h = lax.conv_general_dilated(h, w.astype(jnp.float32), (1, 1), "VALID",
                                     dimension_numbers=("NCHW", "OIHW", "NCHW"),
                                     precision=lax.Precision.HIGHEST)
        h = h + b.reshape(1, -1, 1, 1)
        if act == "relu":
            h = jax.nn.relu(h)
        elif act == "selu":
            h = jax.nn.selu(h)
    A = genome["adaptive_size"]
    n, c, hh, ww = h.shape
    ah = jnp.asarray(_adaptive_pool_matrix(hh, A))
    aw = jnp.asarray(_adaptive_pool_matrix(ww, A))
    pooled = jnp.einsum("nchw,ih,jw->ncij", h, ah, aw, precision=lax.Precision.HIGHEST)
    feat = pooled.reshape(n, -1)
    w_clf, b_clf = params["clf"]
    logits = jnp.dot(feat, w_clf.T, precision=lax.Precision.HIGHEST) + b_clf
    return jax.nn.sigmoid(logits)


if __name__ == "__main__":
    genome = {
        "num_channels": 3,
        "D_filters": [8, 8, 16],
        "D_kernels": [3, 3, 3],
        "D_activations": ["relu", "selu"],
        "adaptive_size": 4,
        "adaptive_type": "avg",
    }
    key = jax.random.PRNGKey(0)
    xkey, pkey = jax.random.split(key)
    x = jax.random.normal(xkey, (2, genome["num_channels"], 16, 16), jnp.float32)
    params = init_params(genome, pkey)

    fwd = jax.jit(lambda xx, pp: genetic_discriminator_forward(xx, pp, genome))
    out = jax.block_until_ready(fwd(x, params))

    assert out.shape == (2, 2), out.shape
    assert bool(jnp.all(jnp.isfinite(out)))

    ref = jax.block_until_ready(reference_forward(x, params, genome))
    np.testing.assert_allclose(np.asarray(out), np.asarray(ref), rtol=5e-3, atol=5e-3)

    print("KERNEL_OK")
</pallas_src>

<mosaic_0001>
module attributes {stable_mosaic.version = 11 : i64} {
  func.func @_disc_fwd_kernel(%arg0: i32, %arg1: memref<1x3x262xf32, #tpu.memory_space<vmem>>, %arg2: memref<9x8x3xf32, #tpu.memory_space<vmem>>, %arg3: memref<8x1xf32, #tpu.memory_space<vmem>>, %arg4: memref<9x8x8xf32, #tpu.memory_space<vmem>>, %arg5: memref<8x1xf32, #tpu.memory_space<vmem>>, %arg6: memref<9x16x8xf32, #tpu.memory_space<vmem>>, %arg7: memref<16x1xf32, #tpu.memory_space<vmem>>, %arg8: memref<16x160x2xf32, #tpu.memory_space<vmem>>, %arg9: memref<1x2xf32, #tpu.memory_space<vmem>>, %arg10: memref<1x1x2xf32, #tpu.memory_space<vmem>>, %arg11: memref<3x262xf32, #tpu.memory_space<vmem>>, %arg12: memref<8x228xf32, #tpu.memory_space<vmem>>, %arg13: memref<8x194xf32, #tpu.memory_space<vmem>>, %arg14: memref<16x160xf32, #tpu.memory_space<vmem>>) attributes {dimension_semantics = [#tpu.dimension_semantics<parallel>], iteration_bounds = array<i64: 2>, scalar_prefetch = 0 : i64, scratch_operands = 4 : i64, tpu.core_type = #tpu.core_type<tc>, window_params = [{transform_indices = @transform_0, window_bounds = array<i64: 1, 3, 262>}, {pipeline_mode = #tpu.pipeline_mode<synchronous>, transform_indices = @transform_1, window_bounds = array<i64: 9, 8, 3>}, {pipeline_mode = #tpu.pipeline_mode<synchronous>, transform_indices = @transform_2, window_bounds = array<i64: 8, 1>}, {pipeline_mode = #tpu.pipeline_mode<synchronous>, transform_indices = @transform_3, window_bounds = array<i64: 9, 8, 8>}, {pipeline_mode = #tpu.pipeline_mode<synchronous>, transform_indices = @transform_4, window_bounds = array<i64: 8, 1>}, {pipeline_mode = #tpu.pipeline_mode<synchronous>, transform_indices = @transform_5, window_bounds = array<i64: 9, 16, 8>}, {pipeline_mode = #tpu.pipeline_mode<synchronous>, transform_indices = @transform_6, window_bounds = array<i64: 16, 1>}, {pipeline_mode = #tpu.pipeline_mode<synchronous>, transform_indices = @transform_7, window_bounds = array<i64: 16, 160, 2>}, {pipeline_mode = #tpu.pipeline_mode<synchronous>, transform_indices = @transform_8, window_bounds = array<i64: 1, 2>}, {transform_indices = @transform_9, window_bounds = array<i64: 1, 1, 2>}]} {
    %c0 = arith.constant 0 : index
    %c0_0 = arith.constant 0 : index
    %c0_1 = arith.constant 0 : index
    %0 = vector.load %arg1[%c0, %c0_0, %c0_1] : memref<1x3x262xf32, #tpu.memory_space<vmem>>, vector<1x3x262xf32>
    %1 = vector.shape_cast %0 : vector<1x3x262xf32> to vector<3x262xf32>
    %c0_2 = arith.constant 0 : index
    %c0_3 = arith.constant 0 : index
    %2 = vector.load %arg11[%c0_2, %c0_3] : memref<3x262xf32, #tpu.memory_space<vmem>>, vector<3x262xf32>
    tpu.vector_store %arg11[%c0_2, %c0_3], %1 {strides = array<i32>} : memref<3x262xf32, #tpu.memory_space<vmem>>, vector<3x262xf32>,
    %c0_4 = arith.constant 0 : index
    %c0_5 = arith.constant 0 : index
    %3 = vector.load %arg11[%c0_4, %c0_5] : memref<3x262xf32, #tpu.memory_space<vmem>>, vector<3x228xf32>
    %c0_6 = arith.constant 0 : index
    %c0_7 = arith.constant 0 : index
    %c0_8 = arith.constant 0 : index
    %4 = vector.load %arg2[%c0_6, %c0_7, %c0_8] : memref<9x8x3xf32, #tpu.memory_space<vmem>>, vector<1x8x3xf32>
    %5 = vector.shape_cast %4 : vector<1x8x3xf32> to vector<8x3xf32>
    %cst = arith.constant dense<0.000000e+00> : vector<8x228xf32>
    %6 = tpu.matmul %5, %3, %cst {dimension_numbers = #tpu.dot_dimension_numbers<[1], [0], [0], [1], [0, 0, 1, 1], [], []>} : vector<8x3xf32>, vector<3x228xf32>, vector<8x228xf32> -> vector<8x228xf32>
    %c0_9 = arith.constant 0 : index
    %c1 = arith.constant 1 : index
    %7 = vector.load %arg11[%c0_9, %c1] : memref<3x262xf32, #tpu.memory_space<vmem>>, vector<3x228xf32>
    %c1_10 = arith.constant 1 : index
    %c0_11 = arith.constant 0 : index
    %c0_12 = arith.constant 0 : index
    %8 = vector.load %arg2[%c1_10, %c0_11, %c0_12] : memref<9x8x3xf32, #tpu.memory_space<vmem>>, vector<1x8x3xf32>
    %9 = vector.shape_cast %8 : vector<1x8x3xf32> to vector<8x3xf32>
    %cst_13 = arith.constant dense<0.000000e+00> : vector<8x228xf32>
    %10 = tpu.matmul %9, %7, %cst_13 {dimension_numbers = #tpu.dot_dimension_numbers<[1], [0], [0], [1], [0, 0, 1, 1], [], []>} : vector<8x3xf32>, vector<3x228xf32>, vector<8x228xf32> -> vector<8x228xf32>
    %11 = arith.addf %6, %10 : vector<8x228xf32>
    %c0_14 = arith.constant 0 : index
    %c2 = arith.constant 2 : index
    %12 = vector.load %arg11[%c0_14, %c2] : memref<3x262xf32, #tpu.memory_space<vmem>>, vector<3x228xf32>
    %c2_15 = arith.constant 2 : index
    %c0_16 = arith.constant 0 : index
    %c0_17 = arith.constant 0 : index
    %13 = vector.load %arg2[%c2_15, %c0_16, %c0_17] : memref<9x8x3xf32, #tpu.memory_space<vmem>>, vector<1x8x3xf32>
    %14 = vector.shape_cast %13 : vector<1x8x3xf32> to vector<8x3xf32>
    %cst_18 = arith.constant dense<0.000000e+00> : vector<8x228xf32>
    %15 = tpu.matmul %14, %12, %cst_18 {dimension_numbers = #tpu.dot_dimension_numbers<[1], [0], [0], [1], [0, 0, 1, 1], [], []>} : vector<8x3xf32>, vector<3x228xf32>, vector<8x228xf32> -> vector<8x228xf32>
    %16 = arith.addf %11, %15 : vector<8x228xf32>
    %c0_19 = arith.constant 0 : index
    %c16 = arith.constant 16 : index
    %17 = vector.load %arg11[%c0_19, %c16] : memref<3x262xf32, #tpu.memory_space<vmem>>, vector<3x228xf32>
    %c3 = arith.constant 3 : index
    %c0_20 = arith.constant 0 : index
    %c0_21 = arith.constant 0 : index
    %18 = vector.load %arg2[%c3, %c0_20, %c0_21] : memref<9x8x3xf32, #tpu.memory_space<vmem>>, vector<1x8x3xf32>
    %19 = vector.shape_cast %18 : vector<1x8x3xf32> to vector<8x3xf32>
    %cst_22 = arith.constant dense<0.000000e+00> : vector<8x228xf32>
    %20 = tpu.matmul %19, %17, %cst_22 {dimension_numbers = #tpu.dot_dimension_numbers<[1], [0], [0], [1], [0, 0, 1, 1], [], []>} : vector<8x3xf32>, vector<3x228xf32>, vector<8x228xf32> -> vector<8x228xf32>
    %21 = arith.addf %16, %20 : vector<8x228xf32>
    %c0_23 = arith.constant 0 : index
    %c17 = arith.constant 17 : index
    %22 = vector.load %arg11[%c0_23, %c17] : memref<3x262xf32, #tpu.memory_space<vmem>>, vector<3x228xf32>
    %c4 = arith.constant 4 : index
    %c0_24 = arith.constant 0 : index
    %c0_25 = arith.constant 0 : index
    %23 = vector.load %arg2[%c4, %c0_24, %c0_25] : memref<9x8x3xf32, #tpu.memory_space<vmem>>, vector<1x8x3xf32>
    %24 = vector.shape_cast %23 : vector<1x8x3xf32> to vector<8x3xf32>
    %cst_26 = arith.constant dense<0.000000e+00> : vector<8x228xf32>
    %25 = tpu.matmul %24, %22, %cst_26 {dimension_numbers = #tpu.dot_dimension_numbers<[1], [0], [0], [1], [0, 0, 1, 1], [], []>} : vector<8x3xf32>, vector<3x228xf32>, vector<8x228xf32> -> vector<8x228xf32>
    %26 = arith.addf %21, %25 : vector<8x228xf32>
    %c0_27 = arith.constant 0 : index
    %c18 = arith.constant 18 : index
    %27 = vector.load %arg11[%c0_27, %c18] : memref<3x262xf32, #tpu.memory_space<vmem>>, vector<3x228xf32>
    %c5 = arith.constant 5 : index
    %c0_28 = arith.constant 0 : index
    %c0_29 = arith.constant 0 : index
    %28 = vector.load %arg2[%c5, %c0_28, %c0_29] : memref<9x8x3xf32, #tpu.memory_space<vmem>>, vector<1x8x3xf32>
    %29 = vector.shape_cast %28 : vector<1x8x3xf32> to vector<8x3xf32>
    %cst_30 = arith.constant dense<0.000000e+00> : vector<8x228xf32>
    %30 = tpu.matmul %29, %27, %cst_30 {dimension_numbers = #tpu.dot_dimension_numbers<[1], [0], [0], [1], [0, 0, 1, 1], [], []>} : vector<8x3xf32>, vector<3x228xf32>, vector<8x228xf32> -> vector<8x228xf32>
    %31 = arith.addf %26, %30 : vector<8x228xf32>
    %c0_31 = arith.constant 0 : index
    %c32 = arith.constant 32 : index
    %32 = vector.load %arg11[%c0_31, %c32] : memref<3x262xf32, #tpu.memory_space<vmem>>, vector<3x228xf32>
    %c6 = arith.constant 6 : index
    %c0_32 = arith.constant 0 : index
    %c0_33 = arith.constant 0 : index
    %33 = vector.load %arg2[%c6, %c0_32, %c0_33] : memref<9x8x3xf32, #tpu.memory_space<vmem>>, vector<1x8x3xf32>
    %34 = vector.shape_cast %33 : vector<1x8x3xf32> to vector<8x3xf32>
    %cst_34 = arith.constant dense<0.000000e+00> : vector<8x228xf32>
    %35 = tpu.matmul %34, %32, %cst_34 {dimension_numbers = #tpu.dot_dimension_numbers<[1], [0], [0], [1], [0, 0, 1, 1], [], []>} : vector<8x3xf32>, vector<3x228xf32>, vector<8x228xf32> -> vector<8x228xf32>
    %36 = arith.addf %31, %35 : vector<8x228xf32>
    %c0_35 = arith.constant 0 : index
    %c33 = arith.constant 33 : index
    %37 = vector.load %arg11[%c0_35, %c33] : memref<3x262xf32, #tpu.memory_space<vmem>>, vector<3x228xf32>
    %c7 = arith.constant 7 : index
    %c0_36 = arith.constant 0 : index
    %c0_37 = arith.constant 0 : index
    %38 = vector.load %arg2[%c7, %c0_36, %c0_37] : memref<9x8x3xf32, #tpu.memory_space<vmem>>, vector<1x8x3xf32>
    %39 = vector.shape_cast %38 : vector<1x8x3xf32> to vector<8x3xf32>
    %cst_38 = arith.constant dense<0.000000e+00> : vector<8x228xf32>
    %40 = tpu.matmul %39, %37, %cst_38 {dimension_numbers = #tpu.dot_dimension_numbers<[1], [0], [0], [1], [0, 0, 1, 1], [], []>} : vector<8x3xf32>, vector<3x228xf32>, vector<8x228xf32> -> vector<8x228xf32>
    %41 = arith.addf %36, %40 : vector<8x228xf32>
    %c0_39 = arith.constant 0 : index
    %c34 = arith.constant 34 : index
    %42 = vector.load %arg11[%c0_39, %c34] : memref<3x262xf32, #tpu.memory_space<vmem>>, vector<3x228xf32>
    %c8 = arith.constant 8 : index
    %c0_40 = arith.constant 0 : index
    %c0_41 = arith.constant 0 : index
    %43 = vector.load %arg2[%c8, %c0_40, %c0_41] : memref<9x8x3xf32, #tpu.memory_space<vmem>>, vector<1x8x3xf32>
    %44 = vector.shape_cast %43 : vector<1x8x3xf32> to vector<8x3xf32>
    %cst_42 = arith.constant dense<0.000000e+00> : vector<8x228xf32>
    %45 = tpu.matmul %44, %42, %cst_42 {dimension_numbers = #tpu.dot_dimension_numbers<[1], [0], [0], [1], [0, 0, 1, 1], [], []>} : vector<8x3xf32>, vector<3x228xf32>, vector<8x228xf32> -> vector<8x228xf32>
    %46 = arith.addf %41, %45 : vector<8x228xf32>
    %c0_43 = arith.constant 0 : index
    %c0_44 = arith.constant 0 : index
    %47 = vector.load %arg3[%c0_43, %c0_44] : memref<8x1xf32, #tpu.memory_space<vmem>>, vector<8x1xf32>
    %48 = vector.broadcast %47 : vector<8x1xf32> to vector<8x228xf32>
    %49 = arith.addf %46, %48 : vector<8x228xf32>
    %c0_45 = arith.constant 0 : index
    %c0_46 = arith.constant 0 : index
    %50 = vector.load %arg12[%c0_45, %c0_46] : memref<8x228xf32, #tpu.memory_space<vmem>>, vector<8x228xf32>
    tpu.vector_store %arg12[%c0_45, %c0_46], %49 {strides = array<i32>} : memref<8x228xf32, #tpu.memory_space<vmem>>, vector<8x228xf32>,
    %c0_47 = arith.constant 0 : index
    %c0_48 = arith.constant 0 : index
    %51 = vector.load %arg12[%c0_47, %c0_48] : memref<8x228xf32, #tpu.memory_space<vmem>>, vector<8x194xf32>
    %c0_49 = arith.constant 0 : index
    %c0_50 = arith.constant 0 : index
    %c0_51 = arith.constant 0 : index
    %52 = vector.load %arg4[%c0_49, %c0_50, %c0_51] : memref<9x8x8xf32, #tpu.memory_space<vmem>>, vector<1x8x8xf32>
    %53 = vector.shape_cast %52 : vector<1x8x8xf32> to vector<8x8xf32>
    %cst_52 = arith.constant dense<0.000000e+00> : vector<8x194xf32>
    %54 = tpu.matmul %53, %51, %cst_52 {dimension_numbers = #tpu.dot_dimension_numbers<[1], [0], [0], [1], [0, 0, 1, 1], [], []>} : vector<8x8xf32>, vector<8x194xf32>, vector<8x194xf32> -> vector<8x194xf32>
    %c0_53 = arith.constant 0 : index
    %c1_54 = arith.constant 1 : index
    %55 = vector.load %arg12[%c0_53, %c1_54] : memref<8x228xf32, #tpu.memory_space<vmem>>, vector<8x194xf32>
    %c1_55 = arith.constant 1 : index
    %c0_56 = arith.constant 0 : index
    %c0_57 = arith.constant 0 : index
    %56 = vector.load %arg4[%c1_55, %c0_56, %c0_57] : memref<9x8x8xf32, #tpu.memory_space<vmem>>, vector<1x8x8xf32>
    %57 = vector.shape_cast %56 : vector<1x8x8xf32> to vector<8x8xf32>
    %cst_58 = arith.constant dense<0.000000e+00> : vector<8x194xf32>
    %58 = tpu.matmul %57, %55, %cst_58 {dimension_numbers = #tpu.dot_dimension_numbers<[1], [0], [0], [1], [0, 0, 1, 1], [], []>} : vector<8x8xf32>, vector<8x194xf32>, vector<8x194xf32> -> vector<8x194xf32>
    %59 = arith.addf %54, %58 : vector<8x194xf32>
    %c0_59 = arith.constant 0 : index
    %c2_60 = arith.constant 2 : index
    %60 = vector.load %arg12[%c0_59, %c2_60] : memref<8x228xf32, #tpu.memory_space<vmem>>, vector<8x194xf32>
    %c2_61 = arith.constant 2 : index
    %c0_62 = arith.constant 0 : index
    %c0_63 = arith.constant 0 : index
    %61 = vector.load %arg4[%c2_61, %c0_62, %c0_63] : memref<9x8x8xf32, #tpu.memory_space<vmem>>, vector<1x8x8xf32>
    %62 = vector.shape_cast %61 : vector<1x8x8xf32> to vector<8x8xf32>
    %cst_64 = arith.constant dense<0.000000e+00> : vector<8x194xf32>
    %63 = tpu.matmul %62, %60, %cst_64 {dimension_numbers = #tpu.dot_dimension_numbers<[1], [0], [0], [1], [0, 0, 1, 1], [], []>} : vector<8x8xf32>, vector<8x194xf32>, vector<8x194xf32> -> vector<8x194xf32>
    %64 = arith.addf %59, %63 : vector<8x194xf32>
    %c0_65 = arith.constant 0 : index
    %c16_66 = arith.constant 16 : index
    %65 = vector.load %arg12[%c0_65, %c16_66] : memref<8x228xf32, #tpu.memory_space<vmem>>, vector<8x194xf32>
    %c3_67 = arith.constant 3 : index
    %c0_68 = arith.constant 0 : index
    %c0_69 = arith.constant 0 : index
    %66 = vector.load %arg4[%c3_67, %c0_68, %c0_69] : memref<9x8x8xf32, #tpu.memory_space<vmem>>, vector<1x8x8xf32>
    %67 = vector.shape_cast %66 : vector<1x8x8xf32> to vector<8x8xf32>
    %cst_70 = arith.constant dense<0.000000e+00> : vector<8x194xf32>
    %68 = tpu.matmul %67, %65, %cst_70 {dimension_numbers = #tpu.dot_dimension_numbers<[1], [0], [0], [1], [0, 0, 1, 1], [], []>} : vector<8x8xf32>, vector<8x194xf32>, vector<8x194xf32> -> vector<8x194xf32>
    %69 = arith.addf %64, %68 : vector<8x194xf32>
    %c0_71 = arith.constant 0 : index
    %c17_72 = arith.constant 17 : index
    %70 = vector.load %arg12[%c0_71, %c17_72] : memref<8x228xf32, #tpu.memory_space<vmem>>, vector<8x194xf32>
    %c4_73 = arith.constant 4 : index
    %c0_74 = arith.constant 0 : index
    %c0_75 = arith.constant 0 : index
    %71 = vector.load %arg4[%c4_73, %c0_74, %c0_75] : memref<9x8x8xf32, #tpu.memory_space<vmem>>, vector<1x8x8xf32>
    %72 = vector.shape_cast %71 : vector<1x8x8xf32> to vector<8x8xf32>
    %cst_76 = arith.constant dense<0.000000e+00> : vector<8x194xf32>
    %73 = tpu.matmul %72, %70, %cst_76 {dimension_numbers = #tpu.dot_dimension_numbers<[1], [0], [0], [1], [0, 0, 1, 1], [], []>} : vector<8x8xf32>, vector<8x194xf32>, vector<8x194xf32> -> vector<8x194xf32>
    %74 = arith.addf %69, %73 : vector<8x194xf32>
    %c0_77 = arith.constant 0 : index
    %c18_78 = arith.constant 18 : index
    %75 = vector.load %arg12[%c0_77, %c18_78] : memref<8x228xf32, #tpu.memory_space<vmem>>, vector<8x194xf32>
    %c5_79 = arith.constant 5 : index
    %c0_80 = arith.constant 0 : index
    %c0_81 = arith.constant 0 : index
    %76 = vector.load %arg4[%c5_79, %c0_80, %c0_81] : memref<9x8x8xf32, #tpu.memory_space<vmem>>, vector<1x8x8xf32>
    %77 = vector.shape_cast %76 : vector<1x8x8xf32> to vector<8x8xf32>
    %cst_82 = arith.constant dense<0.000000e+00> : vector<8x194xf32>
    %78 = tpu.matmul %77, %75, %cst_82 {dimension_numbers = #tpu.dot_dimension_numbers<[1], [0], [0], [1], [0, 0, 1, 1], [], []>} : vector<8x8xf32>, vector<8x194xf32>, vector<8x194xf32> -> vector<8x194xf32>
    %79 = arith.addf %74, %78 : vector<8x194xf32>
    %c0_83 = arith.constant 0 : index
    %c32_84 = arith.constant 32 : index
    %80 = vector.load %arg12[%c0_83, %c32_84] : memref<8x228xf32, #tpu.memory_space<vmem>>, vector<8x194xf32>
    %c6_85 = arith.constant 6 : index
    %c0_86 = arith.constant 0 : index
    %c0_87 = arith.constant 0 : index
    %81 = vector.load %arg4[%c6_85, %c0_86, %c0_87] : memref<9x8x8xf32, #tpu.memory_space<vmem>>, vector<1x8x8xf32>
    %82 = vector.shape_cast %81 : vector<1x8x8xf32> to vector<8x8xf32>
    %cst_88 = arith.constant dense<0.000000e+00> : vector<8x194xf32>
    %83 = tpu.matmul %82, %80, %cst_88 {dimension_numbers = #tpu.dot_dimension_numbers<[1], [0], [0], [1], [0, 0, 1, 1], [], []>} : vector<8x8xf32>, vector<8x194xf32>, vector<8x194xf32> -> vector<8x194xf32>
    %84 = arith.addf %79, %83 : vector<8x194xf32>
    %c0_89 = arith.constant 0 : index
    %c33_90 = arith.constant 33 : index
    %85 = vector.load %arg12[%c0_89, %c33_90] : memref<8x228xf32, #tpu.memory_space<vmem>>, vector<8x194xf32>
    %c7_91 = arith.constant 7 : index
    %c0_92 = arith.constant 0 : index
    %c0_93 = arith.constant 0 : index
    %86 = vector.load %arg4[%c7_91, %c0_92, %c0_93] : memref<9x8x8xf32, #tpu.memory_space<vmem>>, vector<1x8x8xf32>
    %87 = vector.shape_cast %86 : vector<1x8x8xf32> to vector<8x8xf32>
    %cst_94 = arith.constant dense<0.000000e+00> : vector<8x194xf32>
    %88 = tpu.matmul %87, %85, %cst_94 {dimension_numbers = #tpu.dot_dimension_numbers<[1], [0], [0], [1], [0, 0, 1, 1], [], []>} : vector<8x8xf32>, vector<8x194xf32>, vector<8x194xf32> -> vector<8x194xf32>
    %89 = arith.addf %84, %88 : vector<8x194xf32>
    %c0_95 = arith.constant 0 : index
    %c34_96 = arith.constant 34 : index
    %90 = vector.load %arg12[%c0_95, %c34_96] : memref<8x228xf32, #tpu.memory_space<vmem>>, vector<8x194xf32>
    %c8_97 = arith.constant 8 : index
    %c0_98 = arith.constant 0 : index
    %c0_99 = arith.constant 0 : index
    %91 = vector.load %arg4[%c8_97, %c0_98, %c0_99] : memref<9x8x8xf32, #tpu.memory_space<vmem>>, vector<1x8x8xf32>
    %92 = vector.shape_cast %91 : vector<1x8x8xf32> to vector<8x8xf32>
    %cst_100 = arith.constant dense<0.000000e+00> : vector<8x194xf32>
    %93 = tpu.matmul %92, %90, %cst_100 {dimension_numbers = #tpu.dot_dimension_numbers<[1], [0], [0], [1], [0, 0, 1, 1], [], []>} : vector<8x8xf32>, vector<8x194xf32>, vector<8x194xf32> -> vector<8x194xf32>
    %94 = arith.addf %89, %93 : vector<8x194xf32>
    %c0_101 = arith.constant 0 : index
    %c0_102 = arith.constant 0 : index
    %95 = vector.load %arg5[%c0_101, %c0_102] : memref<8x1xf32, #tpu.memory_space<vmem>>, vector<8x1xf32>
    %96 = vector.broadcast %95 : vector<8x1xf32> to vector<8x194xf32>
    %97 = arith.addf %94, %96 : vector<8x194xf32>
    %cst_103 = arith.constant 0.000000e+00 : f32
    %98 = vector.broadcast %cst_103 : f32 to vector<8x194xf32>
    %99 = arith.maximumf %97, %98 : vector<8x194xf32>
    %c0_104 = arith.constant 0 : index
    %c0_105 = arith.constant 0 : index
    %100 = vector.load %arg13[%c0_104, %c0_105] : memref<8x194xf32, #tpu.memory_space<vmem>>, vector<8x194xf32>
    tpu.vector_store %arg13[%c0_104, %c0_105], %99 {strides = array<i32>} : memref<8x194xf32, #tpu.memory_space<vmem>>, vector<8x194xf32>,
    %c0_106 = arith.constant 0 : index
    %c0_107 = arith.constant 0 : index
    %101 = vector.load %arg13[%c0_106, %c0_107] : memref<8x194xf32, #tpu.memory_space<vmem>>, vector<8x160xf32>
    %c0_108 = arith.constant 0 : index
    %c0_109 = arith.constant 0 : index
    %c0_110 = arith.constant 0 : index
    %102 = vector.load %arg6[%c0_108, %c0_109, %c0_110] : memref<9x16x8xf32, #tpu.memory_space<vmem>>, vector<1x16x8xf32>
    %103 = vector.shape_cast %102 : vector<1x16x8xf32> to vector<16x8xf32>
    %cst_111 = arith.constant dense<0.000000e+00> : vector<16x160xf32>
    %104 = tpu.matmul %103, %101, %cst_111 {dimension_numbers = #tpu.dot_dimension_numbers<[1], [0], [0], [1], [0, 0, 1, 1], [], []>} : vector<16x8xf32>, vector<8x160xf32>, vector<16x160xf32> -> vector<16x160xf32>
    %c0_112 = arith.constant 0 : index
    %c1_113 = arith.constant 1 : index
    %105 = vector.load %arg13[%c0_112, %c1_113] : memref<8x194xf32, #tpu.memory_space<vmem>>, vector<8x160xf32>
    %c1_114 = arith.constant 1 : index
    %c0_115 = arith.constant 0 : index
    %c0_116 = arith.constant 0 : index
    %106 = vector.load %arg6[%c1_114, %c0_115, %c0_116] : memref<9x16x8xf32, #tpu.memory_space<vmem>>, vector<1x16x8xf32>
    %107 = vector.shape_cast %106 : vector<1x16x8xf32> to vector<16x8xf32>
    %cst_117 = arith.constant dense<0.000000e+00> : vector<16x160xf32>
    %108 = tpu.matmul %107, %105, %cst_117 {dimension_numbers = #tpu.dot_dimension_numbers<[1], [0], [0], [1], [0, 0, 1, 1], [], []>} : vector<16x8xf32>, vector<8x160xf32>, vector<16x160xf32> -> vector<16x160xf32>
    %109 = arith.addf %104, %108 : vector<16x160xf32>
    %c0_118 = arith.constant 0 : index
    %c2_119 = arith.constant 2 : index
    %110 = vector.load %arg13[%c0_118, %c2_119] : memref<8x194xf32, #tpu.memory_space<vmem>>, vector<8x160xf32>
    %c2_120 = arith.constant 2 : index
    %c0_121 = arith.constant 0 : index
    %c0_122 = arith.constant 0 : index
    %111 = vector.load %arg6[%c2_120, %c0_121, %c0_122] : memref<9x16x8xf32, #tpu.memory_space<vmem>>, vector<1x16x8xf32>
    %112 = vector.shape_cast %111 : vector<1x16x8xf32> to vector<16x8xf32>
    %cst_123 = arith.constant dense<0.000000e+00> : vector<16x160xf32>
    %113 = tpu.matmul %112, %110, %cst_123 {dimension_numbers = #tpu.dot_dimension_numbers<[1], [0], [0], [1], [0, 0, 1, 1], [], []>} : vector<16x8xf32>, vector<8x160xf32>, vector<16x160xf32> -> vector<16x160xf32>
    %114 = arith.addf %109, %113 : vector<16x160xf32>
    %c0_124 = arith.constant 0 : index
    %c16_125 = arith.constant 16 : index
    %115 = vector.load %arg13[%c0_124, %c16_125] : memref<8x194xf32, #tpu.memory_space<vmem>>, vector<8x160xf32>
    %c3_126 = arith.constant 3 : index
    %c0_127 = arith.constant 0 : index
    %c0_128 = arith.constant 0 : index
    %116 = vector.load %arg6[%c3_126, %c0_127, %c0_128] : memref<9x16x8xf32, #tpu.memory_space<vmem>>, vector<1x16x8xf32>
    %117 = vector.shape_cast %116 : vector<1x16x8xf32> to vector<16x8xf32>
    %cst_129 = arith.constant dense<0.000000e+00> : vector<16x160xf32>
    %118 = tpu.matmul %117, %115, %cst_129 {dimension_numbers = #tpu.dot_dimension_numbers<[1], [0], [0], [1], [0, 0, 1, 1], [], []>} : vector<16x8xf32>, vector<8x160xf32>, vector<16x160xf32> -> vector<16x160xf32>
    %119 = arith.addf %114, %118 : vector<16x160xf32>
    %c0_130 = arith.constant 0 : index
    %c17_131 = arith.constant 17 : index
    %120 = vector.load %arg13[%c0_130, %c17_131] : memref<8x194xf32, #tpu.memory_space<vmem>>, vector<8x160xf32>
    %c4_132 = arith.constant 4 : index
    %c0_133 = arith.constant 0 : index
    %c0_134 = arith.constant 0 : index
    %121 = vector.load %arg6[%c4_132, %c0_133, %c0_134] : memref<9x16x8xf32, #tpu.memory_space<vmem>>, vector<1x16x8xf32>
    %122 = vector.shape_cast %121 : vector<1x16x8xf32> to vector<16x8xf32>
    %cst_135 = arith.constant dense<0.000000e+00> : vector<16x160xf32>
    %123 = tpu.matmul %122, %120, %cst_135 {dimension_numbers = #tpu.dot_dimension_numbers<[1], [0], [0], [1], [0, 0, 1, 1], [], []>} : vector<16x8xf32>, vector<8x160xf32>, vector<16x160xf32> -> vector<16x160xf32>
    %124 = arith.addf %119, %123 : vector<16x160xf32>
    %c0_136 = arith.constant 0 : index
    %c18_137 = arith.constant 18 : index
    %125 = vector.load %arg13[%c0_136, %c18_137] : memref<8x194xf32, #tpu.memory_space<vmem>>, vector<8x160xf32>
    %c5_138 = arith.constant 5 : index
    %c0_139 = arith.constant 0 : index
    %c0_140 = arith.constant 0 : index
    %126 = vector.load %arg6[%c5_138, %c0_139, %c0_140] : memref<9x16x8xf32, #tpu.memory_space<vmem>>, vector<1x16x8xf32>
    %127 = vector.shape_cast %126 : vector<1x16x8xf32> to vector<16x8xf32>
    %cst_141 = arith.constant dense<0.000000e+00> : vector<16x160xf32>
    %128 = tpu.matmul %127, %125, %cst_141 {dimension_numbers = #tpu.dot_dimension_numbers<[1], [0], [0], [1], [0, 0, 1, 1], [], []>} : vector<16x8xf32>, vector<8x160xf32>, vector<16x160xf32> -> vector<16x160xf32>
    %129 = arith.addf %124, %128 : vector<16x160xf32>
    %c0_142 = arith.constant 0 : index
    %c32_143 = arith.constant 32 : index
    %130 = vector.load %arg13[%c0_142, %c32_143] : memref<8x194xf32, #tpu.memory_space<vmem>>, vector<8x160xf32>
    %c6_144 = arith.constant 6 : index
    %c0_145 = arith.constant 0 : index
    %c0_146 = arith.constant 0 : index
    %131 = vector.load %arg6[%c6_144, %c0_145, %c0_146] : memref<9x16x8xf32, #tpu.memory_space<vmem>>, vector<1x16x8xf32>
    %132 = vector.shape_cast %131 : vector<1x16x8xf32> to vector<16x8xf32>
    %cst_147 = arith.constant dense<0.000000e+00> : vector<16x160xf32>
    %133 = tpu.matmul %132, %130, %cst_147 {dimension_numbers = #tpu.dot_dimension_numbers<[1], [0], [0], [1], [0, 0, 1, 1], [], []>} : vector<16x8xf32>, vector<8x160xf32>, vector<16x160xf32> -> vector<16x160xf32>
    %134 = arith.addf %129, %133 : vector<16x160xf32>
    %c0_148 = arith.constant 0 : index
    %c33_149 = arith.constant 33 : index
    %135 = vector.load %arg13[%c0_148, %c33_149] : memref<8x194xf32, #tpu.memory_space<vmem>>, vector<8x160xf32>
    %c7_150 = arith.constant 7 : index
    %c0_151 = arith.constant 0 : index
    %c0_152 = arith.constant 0 : index
    %136 = vector.load %arg6[%c7_150, %c0_151, %c0_152] : memref<9x16x8xf32, #tpu.memory_space<vmem>>, vector<1x16x8xf32>
    %137 = vector.shape_cast %136 : vector<1x16x8xf32> to vector<16x8xf32>
    %cst_153 = arith.constant dense<0.000000e+00> : vector<16x160xf32>
    %138 = tpu.matmul %137, %135, %cst_153 {dimension_numbers = #tpu.dot_dimension_numbers<[1], [0], [0], [1], [0, 0, 1, 1], [], []>} : vector<16x8xf32>, vector<8x160xf32>, vector<16x160xf32> -> vector<16x160xf32>
    %139 = arith.addf %134, %138 : vector<16x160xf32>
    %c0_154 = arith.constant 0 : index
    %c34_155 = arith.constant 34 : index
    %140 = vector.load %arg13[%c0_154, %c34_155] : memref<8x194xf32, #tpu.memory_space<vmem>>, vector<8x160xf32>
    %c8_156 = arith.constant 8 : index
    %c0_157 = arith.constant 0 : index
    %c0_158 = arith.constant 0 : index
    %141 = vector.load %arg6[%c8_156, %c0_157, %c0_158] : memref<9x16x8xf32, #tpu.memory_space<vmem>>, vector<1x16x8xf32>
    %142 = vector.shape_cast %141 : vector<1x16x8xf32> to vector<16x8xf32>
    %cst_159 = arith.constant dense<0.000000e+00> : vector<16x160xf32>
    %143 = tpu.matmul %142, %140, %cst_159 {dimension_numbers = #tpu.dot_dimension_numbers<[1], [0], [0], [1], [0, 0, 1, 1], [], []>} : vector<16x8xf32>, vector<8x160xf32>, vector<16x160xf32> -> vector<16x160xf32>
    %144 = arith.addf %139, %143 : vector<16x160xf32>
    %c0_160 = arith.constant 0 : index
    %c0_161 = arith.constant 0 : index
    %145 = vector.load %arg7[%c0_160, %c0_161] : memref<16x1xf32, #tpu.memory_space<vmem>>, vector<16x1xf32>
    %146 = vector.broadcast %145 : vector<16x1xf32> to vector<16x160xf32>
    %147 = arith.addf %144, %146 : vector<16x160xf32>
    %cst_162 = arith.constant 0.000000e+00 : f32
    %148 = vector.broadcast %cst_162 : f32 to vector<16x160xf32>
    %149 = arith.minimumf %147, %148 : vector<16x160xf32>
    %150 = math.exp %149 : vector<16x160xf32>
    %cst_163 = arith.constant 1.000000e+00 : f32
    %151 = vector.broadcast %cst_163 : f32 to vector<16x160xf32>
    %152 = arith.subf %150, %151 : vector<16x160xf32>
    %cst_164 = arith.constant 1.67326319 : f32
    %153 = vector.broadcast %cst_164 : f32 to vector<16x160xf32>
    %154 = arith.mulf %153, %152 : vector<16x160xf32>
    %cst_165 = arith.constant 0.000000e+00 : f32
    %155 = vector.broadcast %cst_165 : f32 to vector<16x160xf32>
    %156 = arith.cmpf ogt, %147, %155 : vector<16x160xf32>
    %157 = arith.select %156, %147, %154 : vector<16x160xi1>, vector<16x160xf32>
    %cst_166 = arith.constant 1.05070102 : f32
    %158 = vector.broadcast %cst_166 : f32 to vector<16x160xf32>
    %159 = arith.mulf %158, %157 : vector<16x160xf32>
    %c0_167 = arith.constant 0 : index
    %c0_168 = arith.constant 0 : index
    %160 = vector.load %arg14[%c0_167, %c0_168] : memref<16x160xf32, #tpu.memory_space<vmem>>, vector<16x160xf32>
    tpu.vector_store %arg14[%c0_167, %c0_168], %159 {strides = array<i32>} : memref<16x160xf32, #tpu.memory_space<vmem>>, vector<16x160xf32>,
    %c0_169 = arith.constant 0 : index
    %c0_170 = arith.constant 0 : index
    %161 = vector.load %arg9[%c0_169, %c0_170] : memref<1x2xf32, #tpu.memory_space<vmem>>, vector<1x2xf32>
    %c0_171 = arith.constant 0 : index
    %c0_172 = arith.constant 0 : index
    %162 = vector.load %arg14[%c0_171, %c0_172] : memref<16x160xf32, #tpu.memory_space<vmem>>, vector<1x160xf32>
    %c0_173 = arith.constant 0 : index
    %c0_174 = arith.constant 0 : index
    %c0_175 = arith.constant 0 : index
    %163 = vector.load %arg8[%c0_173, %c0_174, %c0_175] : memref<16x160x2xf32, #tpu.memory_space<vmem>>, vector<1x160x2xf32>
    %164 = vector.shape_cast %163 : vector<1x160x2xf32> to vector<160x2xf32>
    %cst_176 = arith.constant dense<0.000000e+00> : vector<1x2xf32>
    %165 = tpu.matmul %162, %164, %cst_176 {dimension_numbers = #tpu.dot_dimension_numbers<[1], [0], [0], [1], [0, 0, 1, 1], [], []>} : vector<1x160xf32>, vector<160x2xf32>, vector<1x2xf32> -> vector<1x2xf32>
    %166 = arith.addf %161, %165 : vector<1x2xf32>
    %c1_177 = arith.constant 1 : index
    %c0_178 = arith.constant 0 : index
    %167 = vector.load %arg14[%c1_177, %c0_178] : memref<16x160xf32, #tpu.memory_space<vmem>>, vector<1x160xf32>
    %c1_179 = arith.constant 1 : index
    %c0_180 = arith.constant 0 : index
    %c0_181 = arith.constant 0 : index
    %168 = vector.load %arg8[%c1_179, %c0_180, %c0_181] : memref<16x160x2xf32, #tpu.memory_space<vmem>>, vector<1x160x2xf32>
    %169 = vector.shape_cast %168 : vector<1x160x2xf32> to vector<160x2xf32>
    %cst_182 = arith.constant dense<0.000000e+00> : vector<1x2xf32>
    %170 = tpu.matmul %167, %169, %cst_182 {dimension_numbers = #tpu.dot_dimension_numbers<[1], [0], [0], [1], [0, 0, 1, 1], [], []>} : vector<1x160xf32>, vector<160x2xf32>, vector<1x2xf32> -> vector<1x2xf32>
    %171 = arith.addf %166, %170 : vector<1x2xf32>
    %c2_183 = arith.constant 2 : index
    %c0_184 = arith.constant 0 : index
    %172 = vector.load %arg14[%c2_183, %c0_184] : memref<16x160xf32, #tpu.memory_space<vmem>>, vector<1x160xf32>
    %c2_185 = arith.constant 2 : index
    %c0_186 = arith.constant 0 : index
    %c0_187 = arith.constant 0 : index
    %173 = vector.load %arg8[%c2_185, %c0_186, %c0_187] : memref<16x160x2xf32, #tpu.memory_space<vmem>>, vector<1x160x2xf32>
    %174 = vector.shape_cast %173 : vector<1x160x2xf32> to vector<160x2xf32>
    %cst_188 = arith.constant dense<0.000000e+00> : vector<1x2xf32>
    %175 = tpu.matmul %172, %174, %cst_188 {dimension_numbers = #tpu.dot_dimension_numbers<[1], [0], [0], [1], [0, 0, 1, 1], [], []>} : vector<1x160xf32>, vector<160x2xf32>, vector<1x2xf32> -> vector<1x2xf32>
    %176 = arith.addf %171, %175 : vector<1x2xf32>
    %c3_189 = arith.constant 3 : index
    %c0_190 = arith.constant 0 : index
    %177 = vector.load %arg14[%c3_189, %c0_190] : memref<16x160xf32, #tpu.memory_space<vmem>>, vector<1x160xf32>
    %c3_191 = arith.constant 3 : index
    %c0_192 = arith.constant 0 : index
    %c0_193 = arith.constant 0 : index
    %178 = vector.load %arg8[%c3_191, %c0_192, %c0_193] : memref<16x160x2xf32, #tpu.memory_space<vmem>>, vector<1x160x2xf32>
    %179 = vector.shape_cast %178 : vector<1x160x2xf32> to vector<160x2xf32>
    %cst_194 = arith.constant dense<0.000000e+00> : vector<1x2xf32>
    %180 = tpu.matmul %177, %179, %cst_194 {dimension_numbers = #tpu.dot_dimension_numbers<[1], [0], [0], [1], [0, 0, 1, 1], [], []>} : vector<1x160xf32>, vector<160x2xf32>, vector<1x2xf32> -> vector<1x2xf32>
    %181 = arith.addf %176, %180 : vector<1x2xf32>
    %c4_195 = arith.constant 4 : index
    %c0_196 = arith.constant 0 : index
    %182 = vector.load %arg14[%c4_195, %c0_196] : memref<16x160xf32, #tpu.memory_space<vmem>>, vector<1x160xf32>
    %c4_197 = arith.constant 4 : index
    %c0_198 = arith.constant 0 : index
    %c0_199 = arith.constant 0 : index
    %183 = vector.load %arg8[%c4_197, %c0_198, %c0_199] : memref<16x160x2xf32, #tpu.memory_space<vmem>>, vector<1x160x2xf32>
    %184 = vector.shape_cast %183 : vector<1x160x2xf32> to vector<160x2xf32>
    %cst_200 = arith.constant dense<0.000000e+00> : vector<1x2xf32>
    %185 = tpu.matmul %182, %184, %cst_200 {dimension_numbers = #tpu.dot_dimension_numbers<[1], [0], [0], [1], [0, 0, 1, 1], [], []>} : vector<1x160xf32>, vector<160x2xf32>, vector<1x2xf32> -> vector<1x2xf32>
    %186 = arith.addf %181, %185 : vector<1x2xf32>
    %c5_201 = arith.constant 5 : index
    %c0_202 = arith.constant 0 : index
    %187 = vector.load %arg14[%c5_201, %c0_202] : memref<16x160xf32, #tpu.memory_space<vmem>>, vector<1x160xf32>
    %c5_203 = arith.constant 5 : index
    %c0_204 = arith.constant 0 : index
    %c0_205 = arith.constant 0 : index
    %188 = vector.load %arg8[%c5_203, %c0_204, %c0_205] : memref<16x160x2xf32, #tpu.memory_space<vmem>>, vector<1x160x2xf32>
    %189 = vector.shape_cast %188 : vector<1x160x2xf32> to vector<160x2xf32>
    %cst_206 = arith.constant dense<0.000000e+00> : vector<1x2xf32>
    %190 = tpu.matmul %187, %189, %cst_206 {dimension_numbers = #tpu.dot_dimension_numbers<[1], [0], [0], [1], [0, 0, 1, 1], [], []>} : vector<1x160xf32>, vector<160x2xf32>, vector<1x2xf32> -> vector<1x2xf32>
    %191 = arith.addf %186, %190 : vector<1x2xf32>
    %c6_207 = arith.constant 6 : index
    %c0_208 = arith.constant 0 : index
    %192 = vector.load %arg14[%c6_207, %c0_208] : memref<16x160xf32, #tpu.memory_space<vmem>>, vector<1x160xf32>
    %c6_209 = arith.constant 6 : index
    %c0_210 = arith.constant 0 : index
    %c0_211 = arith.constant 0 : index
    %193 = vector.load %arg8[%c6_209, %c0_210, %c0_211] : memref<16x160x2xf32, #tpu.memory_space<vmem>>, vector<1x160x2xf32>
    %194 = vector.shape_cast %193 : vector<1x160x2xf32> to vector<160x2xf32>
    %cst_212 = arith.constant dense<0.000000e+00> : vector<1x2xf32>
    %195 = tpu.matmul %192, %194, %cst_212 {dimension_numbers = #tpu.dot_dimension_numbers<[1], [0], [0], [1], [0, 0, 1, 1], [], []>} : vector<1x160xf32>, vector<160x2xf32>, vector<1x2xf32> -> vector<1x2xf32>
    %196 = arith.addf %191, %195 : vector<1x2xf32>
    %c7_213 = arith.constant 7 : index
    %c0_214 = arith.constant 0 : index
    %197 = vector.load %arg14[%c7_213, %c0_214] : memref<16x160xf32, #tpu.memory_space<vmem>>, vector<1x160xf32>
    %c7_215 = arith.constant 7 : index
    %c0_216 = arith.constant 0 : index
    %c0_217 = arith.constant 0 : index
    %198 = vector.load %arg8[%c7_215, %c0_216, %c0_217] : memref<16x160x2xf32, #tpu.memory_space<vmem>>, vector<1x160x2xf32>
    %199 = vector.shape_cast %198 : vector<1x160x2xf32> to vector<160x2xf32>
    %cst_218 = arith.constant dense<0.000000e+00> : vector<1x2xf32>
    %200 = tpu.matmul %197, %199, %cst_218 {dimension_numbers = #tpu.dot_dimension_numbers<[1], [0], [0], [1], [0, 0, 1, 1], [], []>} : vector<1x160xf32>, vector<160x2xf32>, vector<1x2xf32> -> vector<1x2xf32>
    %201 = arith.addf %196, %200 : vector<1x2xf32>
    %c8_219 = arith.constant 8 : index
    %c0_220 = arith.constant 0 : index
    %202 = vector.load %arg14[%c8_219, %c0_220] : memref<16x160xf32, #tpu.memory_space<vmem>>, vector<1x160xf32>
    %c8_221 = arith.constant 8 : index
    %c0_222 = arith.constant 0 : index
    %c0_223 = arith.constant 0 : index
    %203 = vector.load %arg8[%c8_221, %c0_222, %c0_223] : memref<16x160x2xf32, #tpu.memory_space<vmem>>, vector<1x160x2xf32>
    %204 = vector.shape_cast %203 : vector<1x160x2xf32> to vector<160x2xf32>
    %cst_224 = arith.constant dense<0.000000e+00> : vector<1x2xf32>
    %205 = tpu.matmul %202, %204, %cst_224 {dimension_numbers = #tpu.dot_dimension_numbers<[1], [0], [0], [1], [0, 0, 1, 1], [], []>} : vector<1x160xf32>, vector<160x2xf32>, vector<1x2xf32> -> vector<1x2xf32>
    %206 = arith.addf %201, %205 : vector<1x2xf32>
    %c9 = arith.constant 9 : index
    %c0_225 = arith.constant 0 : index
    %207 = vector.load %arg14[%c9, %c0_225] : memref<16x160xf32, #tpu.memory_space<vmem>>, vector<1x160xf32>
    %c9_226 = arith.constant 9 : index
    %c0_227 = arith.constant 0 : index
    %c0_228 = arith.constant 0 : index
    %208 = vector.load %arg8[%c9_226, %c0_227, %c0_228] : memref<16x160x2xf32, #tpu.memory_space<vmem>>, vector<1x160x2xf32>
    %209 = vector.shape_cast %208 : vector<1x160x2xf32> to vector<160x2xf32>
    %cst_229 = arith.constant dense<0.000000e+00> : vector<1x2xf32>
    %210 = tpu.matmul %207, %209, %cst_229 {dimension_numbers = #tpu.dot_dimension_numbers<[1], [0], [0], [1], [0, 0, 1, 1], [], []>} : vector<1x160xf32>, vector<160x2xf32>, vector<1x2xf32> -> vector<1x2xf32>
    %211 = arith.addf %206, %210 : vector<1x2xf32>
    %c10 = arith.constant 10 : index
    %c0_230 = arith.constant 0 : index
    %212 = vector.load %arg14[%c10, %c0_230] : memref<16x160xf32, #tpu.memory_space<vmem>>, vector<1x160xf32>
    %c10_231 = arith.constant 10 : index
    %c0_232 = arith.constant 0 : index
    %c0_233 = arith.constant 0 : index
    %213 = vector.load %arg8[%c10_231, %c0_232, %c0_233] : memref<16x160x2xf32, #tpu.memory_space<vmem>>, vector<1x160x2xf32>
    %214 = vector.shape_cast %213 : vector<1x160x2xf32> to vector<160x2xf32>
    %cst_234 = arith.constant dense<0.000000e+00> : vector<1x2xf32>
    %215 = tpu.matmul %212, %214, %cst_234 {dimension_numbers = #tpu.dot_dimension_numbers<[1], [0], [0], [1], [0, 0, 1, 1], [], []>} : vector<1x160xf32>, vector<160x2xf32>, vector<1x2xf32> -> vector<1x2xf32>
    %216 = arith.addf %211, %215 : vector<1x2xf32>
    %c11 = arith.constant 11 : index
    %c0_235 = arith.constant 0 : index
    %217 = vector.load %arg14[%c11, %c0_235] : memref<16x160xf32, #tpu.memory_space<vmem>>, vector<1x160xf32>
    %c11_236 = arith.constant 11 : index
    %c0_237 = arith.constant 0 : index
    %c0_238 = arith.constant 0 : index
    %218 = vector.load %arg8[%c11_236, %c0_237, %c0_238] : memref<16x160x2xf32, #tpu.memory_space<vmem>>, vector<1x160x2xf32>
    %219 = vector.shape_cast %218 : vector<1x160x2xf32> to vector<160x2xf32>
    %cst_239 = arith.constant dense<0.000000e+00> : vector<1x2xf32>
    %220 = tpu.matmul %217, %219, %cst_239 {dimension_numbers = #tpu.dot_dimension_numbers<[1], [0], [0], [1], [0, 0, 1, 1], [], []>} : vector<1x160xf32>, vector<160x2xf32>, vector<1x2xf32> -> vector<1x2xf32>
    %221 = arith.addf %216, %220 : vector<1x2xf32>
    %c12 = arith.constant 12 : index
    %c0_240 = arith.constant 0 : index
    %222 = vector.load %arg14[%c12, %c0_240] : memref<16x160xf32, #tpu.memory_space<vmem>>, vector<1x160xf32>
    %c12_241 = arith.constant 12 : index
    %c0_242 = arith.constant 0 : index
    %c0_243 = arith.constant 0 : index
    %223 = vector.load %arg8[%c12_241, %c0_242, %c0_243] : memref<16x160x2xf32, #tpu.memory_space<vmem>>, vector<1x160x2xf32>
    %224 = vector.shape_cast %223 : vector<1x160x2xf32> to vector<160x2xf32>
    %cst_244 = arith.constant dense<0.000000e+00> : vector<1x2xf32>
    %225 = tpu.matmul %222, %224, %cst_244 {dimension_numbers = #tpu.dot_dimension_numbers<[1], [0], [0], [1], [0, 0, 1, 1], [], []>} : vector<1x160xf32>, vector<160x2xf32>, vector<1x2xf32> -> vector<1x2xf32>
    %226 = arith.addf %221, %225 : vector<1x2xf32>
    %c13 = arith.constant 13 : index
    %c0_245 = arith.constant 0 : index
    %227 = vector.load %arg14[%c13, %c0_245] : memref<16x160xf32, #tpu.memory_space<vmem>>, vector<1x160xf32>
    %c13_246 = arith.constant 13 : index
    %c0_247 = arith.constant 0 : index
    %c0_248 = arith.constant 0 : index
    %228 = vector.load %arg8[%c13_246, %c0_247, %c0_248] : memref<16x160x2xf32, #tpu.memory_space<vmem>>, vector<1x160x2xf32>
    %229 = vector.shape_cast %228 : vector<1x160x2xf32> to vector<160x2xf32>
    %cst_249 = arith.constant dense<0.000000e+00> : vector<1x2xf32>
    %230 = tpu.matmul %227, %229, %cst_249 {dimension_numbers = #tpu.dot_dimension_numbers<[1], [0], [0], [1], [0, 0, 1, 1], [], []>} : vector<1x160xf32>, vector<160x2xf32>, vector<1x2xf32> -> vector<1x2xf32>
    %231 = arith.addf %226, %230 : vector<1x2xf32>
    %c14 = arith.constant 14 : index
    %c0_250 = arith.constant 0 : index
    %232 = vector.load %arg14[%c14, %c0_250] : memref<16x160xf32, #tpu.memory_space<vmem>>, vector<1x160xf32>
    %c14_251 = arith.constant 14 : index
    %c0_252 = arith.constant 0 : index
    %c0_253 = arith.constant 0 : index
    %233 = vector.load %arg8[%c14_251, %c0_252, %c0_253] : memref<16x160x2xf32, #tpu.memory_space<vmem>>, vector<1x160x2xf32>
    %234 = vector.shape_cast %233 : vector<1x160x2xf32> to vector<160x2xf32>
    %cst_254 = arith.constant dense<0.000000e+00> : vector<1x2xf32>
    %235 = tpu.matmul %232, %234, %cst_254 {dimension_numbers = #tpu.dot_dimension_numbers<[1], [0], [0], [1], [0, 0, 1, 1], [], []>} : vector<1x160xf32>, vector<160x2xf32>, vector<1x2xf32> -> vector<1x2xf32>
    %236 = arith.addf %231, %235 : vector<1x2xf32>
    %c15 = arith.constant 15 : index
    %c0_255 = arith.constant 0 : index
    %237 = vector.load %arg14[%c15, %c0_255] : memref<16x160xf32, #tpu.memory_space<vmem>>, vector<1x160xf32>
    %c15_256 = arith.constant 15 : index
    %c0_257 = arith.constant 0 : index
    %c0_258 = arith.constant 0 : index
    %238 = vector.load %arg8[%c15_256, %c0_257, %c0_258] : memref<16x160x2xf32, #tpu.memory_space<vmem>>, vector<1x160x2xf32>
    %239 = vector.shape_cast %238 : vector<1x160x2xf32> to vector<160x2xf32>
    %cst_259 = arith.constant dense<0.000000e+00> : vector<1x2xf32>
    %240 = tpu.matmul %237, %239, %cst_259 {dimension_numbers = #tpu.dot_dimension_numbers<[1], [0], [0], [1], [0, 0, 1, 1], [], []>} : vector<1x160xf32>, vector<160x2xf32>, vector<1x2xf32> -> vector<1x2xf32>
    %241 = arith.addf %236, %240 : vector<1x2xf32>
    %cst_260 = arith.constant 0.000000e+00 : f32
    %242 = vector.broadcast %cst_260 : f32 to vector<1x2xf32>
    %243 = arith.subf %242, %241 : vector<1x2xf32>
    %244 = math.exp %243 : vector<1x2xf32>
    %cst_261 = arith.constant 1.000000e+00 : f32
    %245 = vector.broadcast %cst_261 : f32 to vector<1x2xf32>
    %246 = arith.addf %245, %244 : vector<1x2xf32>
    %cst_262 = arith.constant 1.000000e+00 : f32
    %247 = vector.broadcast %cst_262 : f32 to vector<1x2xf32>
    %248 = arith.divf %247, %246 : vector<1x2xf32>
    %c0_263 = arith.constant 0 : index
    %c0_264 = arith.constant 0 : index
    %c0_265 = arith.constant 0 : index
    %249 = vector.load %arg10[%c0_263, %c0_264, %c0_265] : memref<1x1x2xf32, #tpu.memory_space<vmem>>, vector<1x1x2xf32>
    %250 = vector.shape_cast %249 : vector<1x1x2xf32> to vector<1x2xf32>
    %251 = vector.shape_cast %248 : vector<1x2xf32> to vector<1x1x2xf32>
    tpu.vector_store %arg10[%c0_263, %c0_264, %c0_265], %251 {strides = array<i32>} : memref<1x1x2xf32, #tpu.memory_space<vmem>>, vector<1x1x2xf32>,
    return
  }
  func.func @transform_0(%arg0: i32) -> (i32, i32, i32) {
    %c0_i32 = arith.constant 0 : i32
    %c0_i32_0 = arith.constant 0 : i32
    %c0_i32_1 = arith.constant 0 : i32
    return %arg0, %c0_i32, %c0_i32_0 : i32, i32, i32
  }
  func.func @transform_1(%arg0: i32) -> (i32, i32, i32) {
    %c0_i32 = arith.constant 0 : i32
    %c0_i32_0 = arith.constant 0 : i32
    %c0_i32_1 = arith.constant 0 : i32
    %c0_i32_2 = arith.constant 0 : i32
    return %c0_i32, %c0_i32_0, %c0_i32_1 : i32, i32, i32
  }
  func.func @transform_2(%arg0: i32) -> (i32, i32) {
    %c0_i32 = arith.constant 0 : i32
    %c0_i32_0 = arith.constant 0 : i32
    %c0_i32_1 = arith.constant 0 : i32
    return %c0_i32, %c0_i32_0 : i32, i32
  }
  func.func @transform_3(%arg0: i32) -> (i32, i32, i32) {
    %c0_i32 = arith.constant 0 : i32
    %c0_i32_0 = arith.constant 0 : i32
    %c0_i32_1 = arith.constant 0 : i32
    %c0_i32_2 = arith.constant 0 : i32
    return %c0_i32, %c0_i32_0, %c0_i32_1 : i32, i32, i32
  }
  func.func @transform_4(%arg0: i32) -> (i32, i32) {
    %c0_i32 = arith.constant 0 : i32
    %c0_i32_0 = arith.constant 0 : i32
    %c0_i32_1 = arith.constant 0 : i32
    return %c0_i32, %c0_i32_0 : i32, i32
  }
  func.func @transform_5(%arg0: i32) -> (i32, i32, i32) {
    %c0_i32 = arith.constant 0 : i32
    %c0_i32_0 = arith.constant 0 : i32
    %c0_i32_1 = arith.constant 0 : i32
    %c0_i32_2 = arith.constant 0 : i32
    return %c0_i32, %c0_i32_0, %c0_i32_1 : i32, i32, i32
  }
  func.func @transform_6(%arg0: i32) -> (i32, i32) {
    %c0_i32 = arith.constant 0 : i32
    %c0_i32_0 = arith.constant 0 : i32
    %c0_i32_1 = arith.constant 0 : i32
    return %c0_i32, %c0_i32_0 : i32, i32
  }
  func.func @transform_7(%arg0: i32) -> (i32, i32, i32) {
    %c0_i32 = arith.constant 0 : i32
    %c0_i32_0 = arith.constant 0 : i32
    %c0_i32_1 = arith.constant 0 : i32
    %c0_i32_2 = arith.constant 0 : i32
    return %c0_i32, %c0_i32_0, %c0_i32_1 : i32, i32, i32
  }
  func.func @transform_8(%arg0: i32) -> (i32, i32) {
    %c0_i32 = arith.constant 0 : i32
    %c0_i32_0 = arith.constant 0 : i32
    %c0_i32_1 = arith.constant 0 : i32
    return %c0_i32, %c0_i32_0 : i32, i32
  }
  func.func @transform_9(%arg0: i32) -> (i32, i32, i32) {
    %c0_i32 = arith.constant 0 : i32
    %c0_i32_0 = arith.constant 0 : i32
    %c0_i32_1 = arith.constant 0 : i32
    return %arg0, %c0_i32, %c0_i32_0 : i32, i32, i32
  }
}

</mosaic_0001>

<llo_original>
// kernel: _lambda_.1
$region0: #{_lambda_.1}
  #allocation0 [shape = 'u32[]', space=smem, size = 0x4, offset = 0x4, fixed_abs, tag = 'smem constant byte address 0x4 - core index']
  #allocation1 [shape = 'u32[144,128]{1,0:T(1,128)}', space=vmem, size = 0x12000, scoped, tag = 'internal scratch']
  #allocation2 [shape = 'f32[3,262]{1,0:T(4,128)}', space=vmem, size = 0x1800, scoped, tag = 'scratch operand']
  #allocation3 [shape = 'f32[8,228]{1,0:T(8,128)}', space=vmem, size = 0x2000, scoped, tag = 'scratch operand']
  #allocation4 [shape = 'f32[8,194]{1,0:T(8,128)}', space=vmem, size = 0x2000, scoped, tag = 'scratch operand']
  #allocation5 [shape = 'f32[16,160]{1,0:T(8,128)}', space=vmem, size = 0x4000, scoped, tag = 'scratch operand']
  %s0 = inlined_call_operand.vmem [shape: f32[2,3,262], index: 0, kind: input, shape index: {}]
  %s1 = inlined_call_operand.vmem [shape: f32[9,8,3], index: 1, kind: input, shape index: {}]
  %s2 = inlined_call_operand.vmem [shape: f32[8,1], index: 2, kind: input, shape index: {}]
  %s3 = inlined_call_operand.vmem [shape: f32[9,8,8], index: 3, kind: input, shape index: {}]
  %s4 = inlined_call_operand.vmem [shape: f32[8,1], index: 4, kind: input, shape index: {}]
  %s5 = inlined_call_operand.vmem [shape: f32[9,16,8], index: 5, kind: input, shape index: {}]
  %s6 = inlined_call_operand.vmem [shape: f32[16,1], index: 6, kind: input, shape index: {}]
  %s7 = inlined_call_operand.vmem [shape: f32[16,160,2], index: 7, kind: input, shape index: {}]
  %s8 = inlined_call_operand.vmem [shape: f32[1,2], index: 8, kind: input, shape index: {}]
  %s9 = inlined_call_operand.hbm [shape: f32[2,1,2], index: 9, kind: output, shape index: {}]
  %s10 = sld [smem:[#allocation0]]
  $region69: #{_lambda_.1} parent=0
    _
  %s12 = ssub.s32 1, %s10
  %s13 = scalar_select 0, %s12, %s10
  $region1: #{_lambda_.1} parent=0
    #allocation6 [shape = 'u8[1024]{0}', space=vmem, size = 0x400, scoped, tag = 'output window, operand 0']
    #allocation7 [shape = 's32[2]{0}', space=sflag, size = 0x8, scoped, tag = 'scoped memory for _lambda_.1']
    %14 = vsyncpa [#allocation7], 0
    %s15 = scalar_lea.sflag [#allocation7], 1
    %16 = vsyncpa %s15, 0
    loop: start=0, step=1, limit=4
    $region2: #{_lambda_.1} parent=1 // loop_pre_header
      _
    $region3: #{_lambda_.1} parent=1 // loop_header
      %s18 = sphi 0, %s22
      %p19 = scmp.ge.s32.totalorder %s18, 4
      %s28 = sphi 0, %s30
      %s31 = sphi 0, %s28
      %s32 = sphi 0, %s31
      %s48 = sphi 0, %s32
      %s52 = sphi 0, %s52
      %s54 = sphi 0, %s52
      %s55 = sphi 0, %s54
      %s69 = sphi 0, %s55
      %s73 = sphi 0, %s73
      %s75 = sphi 0, %s73
      %s76 = sphi 0, %s75
      %s90 = sphi 0, %s76
      %s94 = sphi 0, %s94
      %s96 = sphi 0, %s94
      %s97 = sphi 0, %s96
      %s111 = sphi 0, %s97
      %s115 = sphi 0, %s115
      %s117 = sphi 0, %s115
      %s118 = sphi 0, %s117
      %s132 = sphi 0, %s118
      %s136 = sphi 0, %s136
      %s138 = sphi 0, %s136
      %s139 = sphi 0, %s138
      %s153 = sphi 0, %s139
      %s157 = sphi 0, %s157
      %s159 = sphi 0, %s157
      %s160 = sphi 0, %s159
      %s174 = sphi 0, %s160
      %s178 = sphi 0, %s178
      %s180 = sphi 0, %s178
      %s181 = sphi 0, %s180
      %s195 = sphi 0, %s181
      %s199 = sphi 0, %s199
      %s201 = sphi 0, %s199
      %s202 = sphi 0, %s201
      %s216 = sphi 0, %s202
      %s222 = sphi 0, %s224
      %s225 = sphi 0, %s222
      %s226 = sphi 0, %s225
      %s242 = sphi 0, %s226
    $region4: #{_lambda_.1} parent=1 // loop_header_branch
      %21 = sbr.rel (%p19) target = $region8
    $region5: #{_lambda_.1} parent=1 // loop_body
      %s23 = ssub.s32 %s18, 1
      %s24 = ssub.s32 %s18, 2
      %s25 = sadd.s32 %s18, 1
      %s26 = ssub.s32 %s18, %s25
      %p27 = scmp.eq.s32.totalorder %s26, 0
      %s29 = sadd.s32 %s28, 1
      %s30 = scalar_select %p27, %s28, %s29
      %p33 = pneg %p27
      %p34 = scmp.eq.s32.totalorder %s18, 1
      %p35 = por %p33, %p34
      %p36 = scmp.ne.s32.totalorder %s28, %s31
      %p37 = scmp.eq.s32.totalorder %s18, 0
      %p38 = por %p36, %p37
      %p39 = scmp.ne.s32.totalorder %s28, %s31
      %p40 = scmp.eq.s32.totalorder %s23, 1
      %p41 = por %p39, %p40
      %p42 = scmp.ne.s32.totalorder %s31, %s32
      %p43 = scmp.eq.s32.totalorder %s23, 0
      %p44 = por %p42, %p43
      %p45 = scmp.ne.s32.totalorder %s31, %s32
      %p46 = scmp.eq.s32.totalorder %s24, 1
      %p47 = por %p45, %p46
      %p49 = scmp.ne.s32.totalorder %s32, %s48
      %p50 = scmp.eq.s32.totalorder %s24, 0
      %p51 = por %p49, %p50
      %s53 = sadd.s32 %s52, 1
      %p56 = scmp.eq.s32.totalorder %s18, 1
      %p57 = scmp.ne.s32.totalorder %s52, %s54
      %p58 = scmp.eq.s32.totalorder %s18, 0
      %p59 = por %p57, %p58
      %p60 = scmp.ne.s32.totalorder %s52, %s54
      %p61 = scmp.eq.s32.totalorder %s23, 1
      %p62 = por %p60, %p61
      %p63 = scmp.ne.s32.totalorder %s54, %s55
      %p64 = scmp.eq.s32.totalorder %s23, 0
      %p65 = por %p63, %p64
      %p66 = scmp.ne.s32.totalorder %s54, %s55
      %p67 = scmp.eq.s32.totalorder %s24, 1
      %p68 = por %p66, %p67
      %p70 = scmp.ne.s32.totalorder %s55, %s69
      %p71 = scmp.eq.s32.totalorder %s24, 0
      %p72 = por %p70, %p71
      %s74 = sadd.s32 %s73, 1
      %p77 = scmp.eq.s32.totalorder %s18, 1
      %p78 = scmp.ne.s32.totalorder %s73, %s75
      %p79 = scmp.eq.s32.totalorder %s18, 0
      %p80 = por %p78, %p79
      %p81 = scmp.ne.s32.totalorder %s73, %s75
      %p82 = scmp.eq.s32.totalorder %s23, 1
      %p83 = por %p81, %p82
      %p84 = scmp.ne.s32.totalorder %s75, %s76
      %p85 = scmp.eq.s32.totalorder %s23, 0
      %p86 = por %p84, %p85
      %p87 = scmp.ne.s32.totalorder %s75, %s76
      %p88 = scmp.eq.s32.totalorder %s24, 1
      %p89 = por %p87, %p88
      %p91 = scmp.ne.s32.totalorder %s76, %s90
      %p92 = scmp.eq.s32.totalorder %s24, 0
      %p93 = por %p91, %p92
      %s95 = sadd.s32 %s94, 1
      %p98 = scmp.eq.s32.totalorder %s18, 1
      %p99 = scmp.ne.s32.totalorder %s94, %s96
      %p100 = scmp.eq.s32.totalorder %s18, 0
      %p101 = por %p99, %p100
      %p102 = scmp.ne.s32.totalorder %s94, %s96
      %p103 = scmp.eq.s32.totalorder %s23, 1
      %p104 = por %p102, %p103
      %p105 = scmp.ne.s32.totalorder %s96, %s97
      %p106 = scmp.eq.s32.totalorder %s23, 0
      %p107 = por %p105, %p106
      %p108 = scmp.ne.s32.totalorder %s96, %s97
      %p109 = scmp.eq.s32.totalorder %s24, 1
      %p110 = por %p108, %p109
      %p112 = scmp.ne.s32.totalorder %s97, %s111
      %p113 = scmp.eq.s32.totalorder %s24, 0
      %p114 = por %p112, %p113
      %s116 = sadd.s32 %s115, 1
      %p119 = scmp.eq.s32.totalorder %s18, 1
      %p120 = scmp.ne.s32.totalorder %s115, %s117
      %p121 = scmp.eq.s32.totalorder %s18, 0
      %p122 = por %p120, %p121
      %p123 = scmp.ne.s32.totalorder %s115, %s117
      %p124 = scmp.eq.s32.totalorder %s23, 1
      %p125 = por %p123, %p124
      %p126 = scmp.ne.s32.totalorder %s117, %s118
      %p127 = scmp.eq.s32.totalorder %s23, 0
      %p128 = por %p126, %p127
      %p129 = scmp.ne.s32.totalorder %s117, %s118
      %p130 = scmp.eq.s32.totalorder %s24, 1
      %p131 = por %p129, %p130
      %p133 = scmp.ne.s32.totalorder %s118, %s132
      %p134 = scmp.eq.s32.totalorder %s24, 0
      %p135 = por %p133, %p134
      %s137 = sadd.s32 %s136, 1
      %p140 = scmp.eq.s32.totalorder %s18, 1
      %p141 = scmp.ne.s32.totalorder %s136, %s138
      %p142 = scmp.eq.s32.totalorder %s18, 0
      %p143 = por %p141, %p142
      %p144 = scmp.ne.s32.totalorder %s136, %s138
      %p145 = scmp.eq.s32.totalorder %s23, 1
      %p146 = por %p144, %p145
      %p147 = scmp.ne.s32.totalorder %s138, %s139
      %p148 = scmp.eq.s32.totalorder %s23, 0
      %p149 = por %p147, %p148
      %p150 = scmp.ne.s32.totalorder %s138, %s139
      %p151 = scmp.eq.s32.totalorder %s24, 1
      %p152 = por %p150, %p151
      %p154 = scmp.ne.s32.totalorder %s139, %s153
      %p155 = scmp.eq.s32.totalorder %s24, 0
      %p156 = por %p154, %p155
      %s158 = sadd.s32 %s157, 1
      %p161 = scmp.eq.s32.totalorder %s18, 1
      %p162 = scmp.ne.s32.totalorder %s157, %s159
      %p163 = scmp.eq.s32.totalorder %s18, 0
      %p164 = por %p162, %p163
      %p165 = scmp.ne.s32.totalorder %s157, %s159
      %p166 = scmp.eq.s32.totalorder %s23, 1
      %p167 = por %p165, %p166
      %p168 = scmp.ne.s32.totalorder %s159, %s160
      %p169 = scmp.eq.s32.totalorder %s23, 0
      %p170 = por %p168, %p169
      %p171 = scmp.ne.s32.totalorder %s159, %s160
      %p172 = scmp.eq.s32.totalorder %s24, 1
      %p173 = por %p171, %p172
      %p175 = scmp.ne.s32.totalorder %s160, %s174
      %p176 = scmp.eq.s32.totalorder %s24, 0
      %p177 = por %p175, %p176
      %s179 = sadd.s32 %s178, 1
      %p182 = scmp.eq.s32.totalorder %s18, 1
      %p183 = scmp.ne.s32.totalorder %s178, %s180
      %p184 = scmp.eq.s32.totalorder %s18, 0
      %p185 = por %p183, %p184
      %p186 = scmp.ne.s32.totalorder %s178, %s180
      %p187 = scmp.eq.s32.totalorder %s23, 1
      %p188 = por %p186, %p187
      %p189 = scmp.ne.s32.totalorder %s180, %s181
      %p190 = scmp.eq.s32.totalorder %s23, 0
      %p191 = por %p189, %p190
      %p192 = scmp.ne.s32.totalorder %s180, %s181
      %p193 = scmp.eq.s32.totalorder %s24, 1
      %p194 = por %p192, %p193
      %p196 = scmp.ne.s32.totalorder %s181, %s195
      %p197 = scmp.eq.s32.totalorder %s24, 0
      %p198 = por %p196, %p197
      %s200 = sadd.s32 %s199, 1
      %p203 = scmp.eq.s32.totalorder %s18, 1
      %p204 = scmp.ne.s32.totalorder %s199, %s201
      %p205 = scmp.eq.s32.totalorder %s18, 0
      %p206 = por %p204, %p205
      %p207 = scmp.ne.s32.totalorder %s199, %s201
      %p208 = scmp.eq.s32.totalorder %s23, 1
      %p209 = por %p207, %p208
      %p210 = scmp.ne.s32.totalorder %s201, %s202
      %p211 = scmp.eq.s32.totalorder %s23, 0
      %p212 = por %p210, %p211
      %p213 = scmp.ne.s32.totalorder %s201, %s202
      %p214 = scmp.eq.s32.totalorder %s24, 1
      %p215 = por %p213, %p214
      %p217 = scmp.ne.s32.totalorder %s202, %s216
      %p218 = scmp.eq.s32.totalorder %s24, 0
      %p219 = por %p217, %p218
      %s220 = ssub.s32 %s18, %s25
      %p221 = scmp.eq.s32.totalorder %s220, 0
      %s223 = sadd.s32 %s222, 1
      %s224 = scalar_select %p221, %s222, %s223
      %p227 = pneg %p221
      %p228 = scmp.eq.s32.totalorder %s18, 1
      %p229 = por %p227, %p228
      %p230 = scmp.ne.s32.totalorder %s222, %s225
      %p231 = scmp.eq.s32.totalorder %s18, 0
      %p232 = por %p230, %p231
      %p233 = scmp.ne.s32.totalorder %s222, %s225
      %p234 = scmp.eq.s32.totalorder %s23, 1
      %p235 = por %p233, %p234
      %p236 = scmp.ne.s32.totalorder %s225, %s226
      %p237 = scmp.eq.s32.totalorder %s23, 0
      %p238 = por %p236, %p237
      %p239 = scmp.ne.s32.totalorder %s225, %s226
      %p240 = scmp.eq.s32.totalorder %s24, 1
      %p241 = por %p239, %p240
      %p243 = scmp.ne.s32.totalorder %s226, %s242
      %p244 = scmp.eq.s32.totalorder %s24, 0
      %p245 = por %p243, %p244
      %p246 = scmp.le.s32.totalorder 1, %s18
      %p247 = scmp.lt.s32.totalorder %s18, 3
      %p248 = pnand %p246, %p247
      %p249 = pneg %p248
      // Predicated region
      $region9: #{_lambda_.1} parent=5 // pred_check
        _
      $region10: #{_lambda_.1} parent=5 // pred_check_branch
        %251 = sbr.rel (%p248) target = $region12
      $region11: #{_lambda_.1} parent=5 // pred_region
        %s252 = ssub.s32 %s18, 1
        // Predicated region
        $region13: #{_lambda_.1} parent=11 // pred_check
          %p253 = pneg %p65
        $region14: #{_lambda_.1} parent=11 // pred_check_branch
          %255 = sbr.rel (%p253) target = $region16
        $region15: #{_lambda_.1} parent=11 // pred_region
          _
        $region16: #{_lambda_.1} parent=11 // pred_fallthru
          _
        // Predicated region
        $region17: #{_lambda_.1} parent=11 // pred_check
          %p256 = pneg %p86
        $region18: #{_lambda_.1} parent=11 // pred_check_branch
          %258 = sbr.rel (%p256) target = $region20
        $region19: #{_lambda_.1} parent=11 // pred_region
          _
        $region20: #{_lambda_.1} parent=11 // pred_fallthru
          _
        // Predicated region
        $region21: #{_lambda_.1} parent=11 // pred_check
          %p259 = pneg %p107
        $region22: #{_lambda_.1} parent=11 // pred_check_branch
          %261 = sbr.rel (%p259) target = $region24
        $region23: #{_lambda_.1} parent=11 // pred_region
          _
        $region24: #{_lambda_.1} parent=11 // pred_fallthru
          _
        // Predicated region
        $region25: #{_lambda_.1} parent=11 // pred_check
          %p262 = pneg %p128
        $region26: #{_lambda_.1} parent=11 // pred_check_branch
          %264 = sbr.rel (%p262) target = $region28
        $region27: #{_lambda_.1} parent=11 // pred_region
          _
        $region28: #{_lambda_.1} parent=11 // pred_fallthru
          _
        // Predicated region
        $region29: #{_lambda_.1} parent=11 // pred_check
          %p265 = pneg %p149
        $region30: #{_lambda_.1} parent=11 // pred_check_branch
          %267 = sbr.rel (%p265) target = $region32
        $region31: #{_lambda_.1} parent=11 // pred_region
          _
        $region32: #{_lambda_.1} parent=11 // pred_fallthru
          _
        // Predicated region
        $region33: #{_lambda_.1} parent=11 // pred_check
          %p268 = pneg %p170
        $region34: #{_lambda_.1} parent=11 // pred_check_branch
          %270 = sbr.rel (%p268) target = $region36
        $region35: #{_lambda_.1} parent=11 // pred_region
          _
        $region36: #{_lambda_.1} parent=11 // pred_fallthru
          _
        // Predicated region
        $region37: #{_lambda_.1} parent=11 // pred_check
          %p271 = pneg %p191
        $region38: #{_lambda_.1} parent=11 // pred_check_branch
          %273 = sbr.rel (%p271) target = $region40
        $region39: #{_lambda_.1} parent=11 // pred_region
          _
        $region40: #{_lambda_.1} parent=11 // pred_fallthru
          _
        // Predicated region
        $region41: #{_lambda_.1} parent=11 // pred_check
          %p274 = pneg %p212
        $region42: #{_lambda_.1} parent=11 // pred_check_branch
          %276 = sbr.rel (%p274) target = $region44
        $region43: #{_lambda_.1} parent=11 // pred_region
          _
        $region44: #{_lambda_.1} parent=11 // pred_fallthru
          _
      $region12: #{_lambda_.1} parent=5 // pred_fallthru
        _
      %p277 = scmp.lt.s32.totalorder %s18, 2
      // Predicated region
      $region45: #{_lambda_.1} parent=5 // pred_check
        %p278 = pneg %p277
      $region46: #{_lambda_.1} parent=5 // pred_check_branch
        %280 = sbr.rel (%p278) target = $region48
      $region47: #{_lambda_.1} parent=5 // pred_region
        // Predicated region
        $region49: #{_lambda_.1} parent=47 // pred_check
          %p281 = pneg %p38
        $region50: #{_lambda_.1} parent=47 // pred_check_branch
          %283 = sbr.rel (%p281) target = $region52
        $region51: #{_lambda_.1} parent=47 // pred_region
          %p284 = scmp.lt.s32.totalorder %s18, 1
          %s285 = scalar_select %p284, %s18, 1
          %s286 = smul.addr %s285, 3
          %s287 = smul.addr %s286, 4
          %s288 = scalar_lea.vmem %s0, %s287
        $region52: #{_lambda_.1} parent=47 // pred_fallthru
          _
      $region48: #{_lambda_.1} parent=5 // pred_fallthru
        _
      %p289 = scmp.le.s32.totalorder 1, %s18
      %p290 = scmp.lt.s32.totalorder %s18, 3
      %p291 = pnand %p289, %p290
      %p292 = pneg %p291
      // Predicated region
      $region53: #{_lambda_.1} parent=5 // pred_check
        _
      $region54: #{_lambda_.1} parent=5 // pred_check_branch
        %294 = sbr.rel (%p291) target = $region56
      $region55: #{_lambda_.1} parent=5 // pred_region
        %s295 = ssub.s32 %s18, 1
        %p296 = scmp.lt.s32.totalorder %s23, 1
        %s297 = scalar_select %p296, %s23, 1
        %s298 = smul.addr %s297, 3
        %s299 = smul.addr %s298, 4
        %s300 = scalar_lea.vmem %s0, %s299
        %p301 = pneg %p44
        %p302 = pneg %p41
        %p303 = pneg %p65
        %p304 = pneg %p62
        %p305 = pneg %p86
        %p306 = pneg %p83
        %p307 = pneg %p107
        %p308 = pneg %p104
        %p309 = pneg %p128
        %p310 = pneg %p125
        %p311 = pneg %p149
        %p312 = pneg %p146
        %p313 = pneg %p170
        %p314 = pneg %p167
        %p315 = pneg %p191
        %p316 = pneg %p188
        %p317 = pneg %p212
        %p318 = pneg %p209
        %p319 = pneg %p238
        %p320 = pneg %p235
        %s321 = sand.u32 %s225, 1
        %s322 = scalar_lea.sflag [#allocation7], %s321
        %s323 = sand.u32 %s225, 1
        %s324 = scalar_lea.vmem [#allocation6], %s323
        %p325 = scmp.lt.s32.totalorder %s23, 1
        %s326 = scalar_select %p325, %s23, 1
        %s327 = smul.addr %s326, 3
        %s328 = smul.addr %s327, 4
        %s329 = scalar_lea.vmem %s0, %s328
        %v330 = vld [vmem:[%s329] sm:$0x77]
        %v331 = vld [vmem:[%s329 + $0x8] sm:$0x7]
        %332 = vst [vmem:[#allocation2] sm:$0x77] %v330
        %vm333 = vcmask 43008
        %334 = vst.msk [vmem:[#allocation2 + $0x8] sm:$0x7] %vm333, %v331
        %v335 = vld [vmem:[#allocation2] sm:$0x77]
        %v336 = vld [vmem:[%s1] sm:$0xff]
        %s337 = scalar_lea.vmem %s1, 8
        %v338 = vld [vmem:[%s337] sm:$0xff]
        %v340 = vcombine.high %v335, %v335
        %341 = vrot.lane.b32.xlu0 %v335, 127
        %v342 = vpop.permute.xlu0 %341
        %343 = vrot.lane.b32.xlu0 %v340, 127
        %v344 = vpop.permute.xlu0 %343
        %vm345 = vcmask 1039360
        %v346 = vsel %vm345, %v342, %v344
        %vm347 = vcmask 23552
        %v349 = vsel %vm347, %v338, 0
        %vm351 = vcmask 1042432
        %v352 = vsel %vm351, %v346, 0
        %v354 = vsel %vm351, %v344, 0
        %356 = vmatprep.subr.mxu0 %v354
        %357 = vmatpush1.msra.mxu0 %v352
        %358 = vmatprep.subr.mxu0 0.0
        %359 = vmatpush1.msra.mxu0 0.0
        %360 = vmatprep.subr.mxu0 0.0
        %361 = vmatpush1.msra.mxu0 0.0
        %362 = vmatprep.subr.mxu0 0.0
        %363 = vmatpush1.msra.mxu0 0.0
        %364 = vmatprep.subr.mxu0 0.0
        %365 = vmatpush1.msra.mxu0 0.0
        %366 = vmatprep.subr.mxu0 0.0
        %367 = vmatpush1.msra.mxu0 0.0
        %368 = vmatprep.subr.mxu0 0.0
        %369 = vmatpush1.msra.mxu0 0.0
        %370 = vmatprep.subr.mxu0 0.0
        %371 = vmatpush1.msra.mxu0 0.0
        %372 = vmatprep.subr.mxu0 0.0
        %373 = vmatpush1.msra.mxu0 0.0
        %374 = vmatprep.subr.mxu0 0.0
        %375 = vmatpush1.msra.mxu0 0.0
        %376 = vmatprep.subr.mxu0 0.0
        %377 = vmatpush1.msra.mxu0 0.0
        %378 = vmatprep.subr.mxu0 0.0
        %379 = vmatpush1.msra.mxu0 0.0
        %380 = vmatprep.subr.mxu0 0.0
        %381 = vmatpush1.msra.mxu0 0.0
        %382 = vmatprep.subr.mxu0 0.0
        %383 = vmatpush1.msra.mxu0 0.0
        %384 = vmatprep.subr.mxu0 0.0
        %385 = vmatpush1.msra.mxu0 0.0
        %386 = vmatprep.subr.mxu0 0.0
        %387 = vmatpush1.msra.mxu0 0.0
        %388 = vmatprep.subr.mxu0 0.0
        %389 = vmatpush1.msra.mxu0 0.0
        %390 = vmatprep.subr.mxu0 0.0
        %391 = vmatpush1.msra.mxu0 0.0
        %392 = vmatprep.subr.mxu0 0.0
        %393 = vmatpush1.msra.mxu0 0.0
        %394 = vmatprep.subr.mxu0 0.0
        %395 = vmatpush1.msra.mxu0 0.0
        %396 = vmatprep.subr.mxu0 0.0
        %397 = vmatpush1.msra.mxu0 0.0
        %398 = vmatprep.subr.mxu0 0.0
        %399 = vmatpush1.msra.mxu0 0.0
        %400 = vmatprep.subr.mxu0 0.0
        %401 = vmatpush1.msra.mxu0 0.0
        %402 = vmatprep.subr.mxu0 0.0
        %403 = vmatpush1.msra.mxu0 0.0
        %404 = vmatprep.subr.mxu0 0.0
        %405 = vmatpush1.msra.mxu0 0.0
        %406 = vmatprep.subr.mxu0 0.0
        %407 = vmatpush1.msra.mxu0 0.0
        %408 = vmatprep.subr.mxu0 0.0
        %409 = vmatpush1.msra.mxu0 0.0
        %410 = vmatprep.subr.mxu0 0.0
        %411 = vmatpush1.msra.mxu0 0.0
        %412 = vmatprep.subr.mxu0 0.0
        %413 = vmatpush1.msra.mxu0 0.0
        %414 = vmatprep.subr.mxu0 0.0
        %415 = vmatpush1.msra.mxu0 0.0
        %416 = vmatprep.subr.mxu0 0.0
        %417 = vmatpush1.msra.mxu0 0.0
        %418 = vmatprep.subr.mxu0 0.0
        %419 = vmatpush1.msra.mxu0 0.0
        %420 = vmatprep.mubr.f32.mxu0 0.0
        %421 = vmatmul.mubr.f32.gmra.mrb[0].mxu0 %v349
        %v422 = vpop.f32.mrb[0].mxu0
        %v423 = vadd.f32 0.0, %v422
        %v424 = vpop.f32.mrb[0].mxu0
        %v425 = vadd.f32 0.0, %v424
        %426 = vdwg.mxu0
        %v428 = vsel %vm347, %v336, 0
        %v430 = vsel %vm351, %v335, 0
        %v432 = vsel %vm351, %v340, 0
        %434 = vmatprep.subr.mxu0 %v432
        %435 = vmatpush1.msra.mxu0 %v430
        %436 = vmatprep.subr.mxu0 0.0
        %437 = vmatpush1.msra.mxu0 0.0
        %438 = vmatprep.subr.mxu0 0.0
        %439 = vmatpush1.msra.mxu0 0.0
        %440 = vmatprep.subr.mxu0 0.0
        %441 = vmatpush1.msra.mxu0 0.0
        %442 = vmatprep.subr.mxu0 0.0
        %443 = vmatpush1.msra.mxu0 0.0
        %444 = vmatprep.subr.mxu0 0.0
        %445 = vmatpush1.msra.mxu0 0.0
        %446 = vmatprep.subr.mxu0 0.0
        %447 = vmatpush1.msra.mxu0 0.0
        %448 = vmatprep.subr.mxu0 0.0
        %449 = vmatpush1.msra.mxu0 0.0
        %450 = vmatprep.subr.mxu0 0.0
        %451 = vmatpush1.msra.mxu0 0.0
        %452 = vmatprep.subr.mxu0 0.0
        %453 = vmatpush1.msra.mxu0 0.0
        %454 = vmatprep.subr.mxu0 0.0
        %455 = vmatpush1.msra.mxu0 0.0
        %456 = vmatprep.subr.mxu0 0.0
        %457 = vmatpush1.msra.mxu0 0.0
        %458 = vmatprep.subr.mxu0 0.0
        %459 = vmatpush1.msra.mxu0 0.0
        %460 = vmatprep.subr.mxu0 0.0
        %461 = vmatpush1.msra.mxu0 0.0
        %462 = vmatprep.subr.mxu0 0.0
        %463 = vmatpush1.msra.mxu0 0.0
        %464 = vmatprep.subr.mxu0 0.0
        %465 = vmatpush1.msra.mxu0 0.0
        %466 = vmatprep.subr.mxu0 0.0
        %467 = vmatpush1.msra.mxu0 0.0
        %468 = vmatprep.subr.mxu0 0.0
        %469 = vmatpush1.msra.mxu0 0.0
        %470 = vmatprep.subr.mxu0 0.0
        %471 = vmatpush1.msra.mxu0 0.0
        %472 = vmatprep.subr.mxu0 0.0
        %473 = vmatpush1.msra.mxu0 0.0
        %474 = vmatprep.subr.mxu0 0.0
        %475 = vmatpush1.msra.mxu0 0.0
        %476 = vmatprep.subr.mxu0 0.0
        %477 = vmatpush1.msra.mxu0 0.0
        %478 = vmatprep.subr.mxu0 0.0
        %479 = vmatpush1.msra.mxu0 0.0
        %480 = vmatprep.subr.mxu0 0.0
        %481 = vmatpush1.msra.mxu0 0.0
        %482 = vmatprep.subr.mxu0 0.0
        %483 = vmatpush1.msra.mxu0 0.0
        %484 = vmatprep.subr.mxu0 0.0
        %485 = vmatpush1.msra.mxu0 0.0
        %486 = vmatprep.subr.mxu0 0.0
        %487 = vmatpush1.msra.mxu0 0.0
        %488 = vmatprep.subr.mxu0 0.0
        %489 = vmatpush1.msra.mxu0 0.0
        %490 = vmatprep.subr.mxu0 0.0
        %491 = vmatpush1.msra.mxu0 0.0
        %492 = vmatprep.subr.mxu0 0.0
        %493 = vmatpush1.msra.mxu0 0.0
        %494 = vmatprep.subr.mxu0 0.0
        %495 = vmatpush1.msra.mxu0 0.0
        %496 = vmatprep.subr.mxu0 0.0
        %497 = vmatpush1.msra.mxu0 0.0
        %498 = vmatprep.mubr.f32.mxu0 0.0
        %499 = vmatmul.mubr.f32.gmra.mrb[0].mxu0 %v428
        %v500 = vpop.f32.mrb[0].mxu0
        %v501 = vadd.f32 %v423, %v500
        %v502 = vpop.f32.mrb[0].mxu0
        %v503 = vadd.f32 %v425, %v502
        %504 = vdwg.mxu0
        %v505 = vld [vmem:[#allocation2] sm:$0x77]
        %s506 = scalar_lea.vmem %s1, 16
        %v507 = vld [vmem:[%s506] sm:$0xff]
        %v509 = vcombine.high %v505, %v505
        %510 = vrot.lane.b32.xlu0 %v505, 126
        %v511 = vpop.permute.xlu0 %510
        %512 = vrot.lane.b32.xlu0 %v509, 126
        %v513 = vpop.permute.xlu0 %512
        %vm514 = vcmask 1031168
        %v515 = vsel %vm514, %v511, %v513
        %v517 = vsel %vm347, %v507, 0
        %v519 = vsel %vm351, %v515, 0
        %v521 = vsel %vm351, %v513, 0
        %523 = vmatprep.subr.mxu0 %v521
        %524 = vmatpush1.msra.mxu0 %v519
        %525 = vmatprep.subr.mxu0 0.0
        %526 = vmatpush1.msra.mxu0 0.0
        %527 = vmatprep.subr.mxu0 0.0
        %528 = vmatpush1.msra.mxu0 0.0
        %529 = vmatprep.subr.mxu0 0.0
        %530 = vmatpush1.msra.mxu0 0.0
        %531 = vmatprep.subr.mxu0 0.0
        %532 = vmatpush1.msra.mxu0 0.0
        %533 = vmatprep.subr.mxu0 0.0
        %534 = vmatpush1.msra.mxu0 0.0
        %535 = vmatprep.subr.mxu0 0.0
        %536 = vmatpush1.msra.mxu0 0.0
        %537 = vmatprep.subr.mxu0 0.0
        %538 = vmatpush1.msra.mxu0 0.0
        %539 = vmatprep.subr.mxu0 0.0
        %540 = vmatpush1.msra.mxu0 0.0
        %541 = vmatprep.subr.mxu0 0.0
        %542 = vmatpush1.msra.mxu0 0.0
        %543 = vmatprep.subr.mxu0 0.0
        %544 = vmatpush1.msra.mxu0 0.0
        %545 = vmatprep.subr.mxu0 0.0
        %546 = vmatpush1.msra.mxu0 0.0
        %547 = vmatprep.subr.mxu0 0.0
        %548 = vmatpush1.msra.mxu0 0.0
        %549 = vmatprep.subr.mxu0 0.0
        %550 = vmatpush1.msra.mxu0 0.0
        %551 = vmatprep.subr.mxu0 0.0
        %552 = vmatpush1.msra.mxu0 0.0
        %553 = vmatprep.subr.mxu0 0.0
        %554 = vmatpush1.msra.mxu0 0.0
        %555 = vmatprep.subr.mxu0 0.0
        %556 = vmatpush1.msra.mxu0 0.0
        %557 = vmatprep.subr.mxu0 0.0
        %558 = vmatpush1.msra.mxu0 0.0
        %559 = vmatprep.subr.mxu0 0.0
        %560 = vmatpush1.msra.mxu0 0.0
        %561 = vmatprep.subr.mxu0 0.0
        %562 = vmatpush1.msra.mxu0 0.0
        %563 = vmatprep.subr.mxu0 0.0
        %564 = vmatpush1.msra.mxu0 0.0
        %565 = vmatprep.subr.mxu0 0.0
        %566 = vmatpush1.msra.mxu0 0.0
        %567 = vmatprep.subr.mxu0 0.0
        %568 = vmatpush1.msra.mxu0 0.0
        %569 = vmatprep.subr.mxu0 0.0
        %570 = vmatpush1.msra.mxu0 0.0
        %571 = vmatprep.subr.mxu0 0.0
        %572 = vmatpush1.msra.mxu0 0.0
        %573 = vmatprep.subr.mxu0 0.0
        %574 = vmatpush1.msra.mxu0 0.0
        %575 = vmatprep.subr.mxu0 0.0
        %576 = vmatpush1.msra.mxu0 0.0
        %577 = vmatprep.subr.mxu0 0.0
        %578 = vmatpush1.msra.mxu0 0.0
        %579 = vmatprep.subr.mxu0 0.0
        %580 = vmatpush1.msra.mxu0 0.0
        %581 = vmatprep.subr.mxu0 0.0
        %582 = vmatpush1.msra.mxu0 0.0
        %583 = vmatprep.subr.mxu0 0.0
        %584 = vmatpush1.msra.mxu0 0.0
        %585 = vmatprep.subr.mxu0 0.0
        %586 = vmatpush1.msra.mxu0 0.0
        %587 = vmatprep.mubr.f32.mxu0 0.0
        %588 = vmatmul.mubr.f32.gmra.mrb[0].mxu0 %v517
        %v589 = vpop.f32.mrb[0].mxu0
        %v590 = vadd.f32 0.0, %v589
        %v591 = vpop.f32.mrb[0].mxu0
        %v592 = vadd.f32 0.0, %v591
        %593 = vdwg.mxu0
        %v594 = vadd.f32 %v501, %v590
        %v595 = vadd.f32 %v503, %v592
        %v596 = vld [vmem:[#allocation2] sm:$0x77]
        %s597 = scalar_lea.vmem %s1, 24
        %v598 = vld [vmem:[%s597] sm:$0xff]
        %v600 = vcombine.high %v596, %v596
        %601 = vrot.lane.b32.xlu0 %v596, 112
        %v602 = vpop.permute.xlu0 %601
        %603 = vrot.lane.b32.xlu0 %v600, 112
        %v604 = vpop.permute.xlu0 %603
        %vm605 = vcmask 916480
        %v606 = vsel %vm605, %v602, %v604
        %v608 = vsel %vm347, %v598, 0
        %v610 = vsel %vm351, %v606, 0
        %v612 = vsel %vm351, %v604, 0
        %614 = vmatprep.subr.mxu0 %v612
        %615 = vmatpush1.msra.mxu0 %v610
        %616 = vmatprep.subr.mxu0 0.0
        %617 = vmatpush1.msra.mxu0 0.0
        %618 = vmatprep.subr.mxu0 0.0
        %619 = vmatpush1.msra.mxu0 0.0
        %620 = vmatprep.subr.mxu0 0.0
        %621 = vmatpush1.msra.mxu0 0.0
        %622 = vmatprep.subr.mxu0 0.0
        %623 = vmatpush1.msra.mxu0 0.0
        %624 = vmatprep.subr.mxu0 0.0
        %625 = vmatpush1.msra.mxu0 0.0
        %626 = vmatprep.subr.mxu0 0.0
        %627 = vmatpush1.msra.mxu0 0.0
        %628 = vmatprep.subr.mxu0 0.0
        %629 = vmatpush1.msra.mxu0 0.0
        %630 = vmatprep.subr.mxu0 0.0
        %631 = vmatpush1.msra.mxu0 0.0
        %632 = vmatprep.subr.mxu0 0.0
        %633 = vmatpush1.msra.mxu0 0.0
        %634 = vmatprep.subr.mxu0 0.0
        %635 = vmatpush1.msra.mxu0 0.0
        %636 = vmatprep.subr.mxu0 0.0
        %637 = vmatpush1.msra.mxu0 0.0
        %638 = vmatprep.subr.mxu0 0.0
        %639 = vmatpush1.msra.mxu0 0.0
        %640 = vmatprep.subr.mxu0 0.0
        %641 = vmatpush1.msra.mxu0 0.0
        %642 = vmatprep.subr.mxu0 0.0
        %643 = vmatpush1.msra.mxu0 0.0
        %644 = vmatprep.subr.mxu0 0.0
        %645 = vmatpush1.msra.mxu0 0.0
        %646 = vmatprep.subr.mxu0 0.0
        %647 = vmatpush1.msra.mxu0 0.0
        %648 = vmatprep.subr.mxu0 0.0
        %649 = vmatpush1.msra.mxu0 0.0
        %650 = vmatprep.subr.mxu0 0.0
        %651 = vmatpush1.msra.mxu0 0.0
        %652 = vmatprep.subr.mxu0 0.0
        %653 = vmatpush1.msra.mxu0 0.0
        %654 = vmatprep.subr.mxu0 0.0
        %655 = vmatpush1.msra.mxu0 0.0
        %656 = vmatprep.subr.mxu0 0.0
        %657 = vmatpush1.msra.mxu0 0.0
        %658 = vmatprep.subr.mxu0 0.0
        %659 = vmatpush1.msra.mxu0 0.0
        %660 = vmatprep.subr.mxu0 0.0
        %661 = vmatpush1.msra.mxu0 0.0
        %662 = vmatprep.subr.mxu0 0.0
        %663 = vmatpush1.msra.mxu0 0.0
        %664 = vmatprep.subr.mxu0 0.0
        %665 = vmatpush1.msra.mxu0 0.0
        %666 = vmatprep.subr.mxu0 0.0
        %667 = vmatpush1.msra.mxu0 0.0
        %668 = vmatprep.subr.mxu0 0.0
        %669 = vmatpush1.msra.mxu0 0.0
        %670 = vmatprep.subr.mxu0 0.0
        %671 = vmatpush1.msra.mxu0 0.0
        %672 = vmatprep.subr.mxu0 0.0
        %673 = vmatpush1.msra.mxu0 0.0
        %674 = vmatprep.subr.mxu0 0.0
        %675 = vmatpush1.msra.mxu0 0.0
        %676 = vmatprep.subr.mxu0 0.0
        %677 = vmatpush1.msra.mxu0 0.0
        %678 = vmatprep.mubr.f32.mxu0 0.0
        %679 = vmatmul.mubr.f32.gmra.mrb[0].mxu0 %v608
        %v680 = vpop.f32.mrb[0].mxu0
        %v681 = vadd.f32 0.0, %v680
        %v682 = vpop.f32.mrb[0].mxu0
        %v683 = vadd.f32 0.0, %v682
        %684 = vdwg.mxu0
        %v685 = vadd.f32 %v594, %v681
        %v686 = vadd.f32 %v595, %v683
        %v687 = vld [vmem:[#allocation2] sm:$0x77]
        %s688 = scalar_lea.vmem %s1, 32
        %v689 = vld [vmem:[%s688] sm:$0xff]
        %v691 = vcombine.high %v687, %v687
        %692 = vrot.lane.b32.xlu0 %v687, 111
        %v693 = vpop.permute.xlu0 %692
        %694 = vrot.lane.b32.xlu0 %v691, 111
        %v695 = vpop.permute.xlu0 %694
        %vm696 = vcmask 908288
        %v697 = vsel %vm696, %v693, %v695
        %v699 = vsel %vm347, %v689, 0
        %v701 = vsel %vm351, %v697, 0
        %v703 = vsel %vm351, %v695, 0
        %705 = vmatprep.subr.mxu0 %v703
        %706 = vmatpush1.msra.mxu0 %v701
        %707 = vmatprep.subr.mxu0 0.0
        %708 = vmatpush1.msra.mxu0 0.0
        %709 = vmatprep.subr.mxu0 0.0
        %710 = vmatpush1.msra.mxu0 0.0
        %711 = vmatprep.subr.mxu0 0.0
        %712 = vmatpush1.msra.mxu0 0.0
        %713 = vmatprep.subr.mxu0 0.0
        %714 = vmatpush1.msra.mxu0 0.0
        %715 = vmatprep.subr.mxu0 0.0
        %716 = vmatpush1.msra.mxu0 0.0
        %717 = vmatprep.subr.mxu0 0.0
        %718 = vmatpush1.msra.mxu0 0.0
        %719 = vmatprep.subr.mxu0 0.0
        %720 = vmatpush1.msra.mxu0 0.0
        %721 = vmatprep.subr.mxu0 0.0
        %722 = vmatpush1.msra.mxu0 0.0
        %723 = vmatprep.subr.mxu0 0.0
        %724 = vmatpush1.msra.mxu0 0.0
        %725 = vmatprep.subr.mxu0 0.0
        %726 = vmatpush1.msra.mxu0 0.0
        %727 = vmatprep.subr.mxu0 0.0
        %728 = vmatpush1.msra.mxu0 0.0
        %729 = vmatprep.subr.mxu0 0.0
        %730 = vmatpush1.msra.mxu0 0.0
        %731 = vmatprep.subr.mxu0 0.0
        %732 = vmatpush1.msra.mxu0 0.0
        %733 = vmatprep.subr.mxu0 0.0
        %734 = vmatpush1.msra.mxu0 0.0
        %735 = vmatprep.subr.mxu0 0.0
        %736 = vmatpush1.msra.mxu0 0.0
        %737 = vmatprep.subr.mxu0 0.0
        %738 = vmatpush1.msra.mxu0 0.0
        %739 = vmatprep.subr.mxu0 0.0
        %740 = vmatpush1.msra.mxu0 0.0
        %741 = vmatprep.subr.mxu0 0.0
        %742 = vmatpush1.msra.mxu0 0.0
        %743 = vmatprep.subr.mxu0 0.0
        %744 = vmatpush1.msra.mxu0 0.0
        %745 = vmatprep.subr.mxu0 0.0
        %746 = vmatpush1.msra.mxu0 0.0
        %747 = vmatprep.subr.mxu0 0.0
        %748 = vmatpush1.msra.mxu0 0.0
        %749 = vmatprep.subr.mxu0 0.0
        %750 = vmatpush1.msra.mxu0 0.0
        %751 = vmatprep.subr.mxu0 0.0
        %752 = vmatpush1.msra.mxu0 0.0
        %753 = vmatprep.subr.mxu0 0.0
        %754 = vmatpush1.msra.mxu0 0.0
        %755 = vmatprep.subr.mxu0 0.0
        %756 = vmatpush1.msra.mxu0 0.0
        %757 = vmatprep.subr.mxu0 0.0
        %758 = vmatpush1.msra.mxu0 0.0
        %759 = vmatprep.subr.mxu0 0.0
        %760 = vmatpush1.msra.mxu0 0.0
        %761 = vmatprep.subr.mxu0 0.0
        %762 = vmatpush1.msra.mxu0 0.0
        %763 = vmatprep.subr.mxu0 0.0
        %764 = vmatpush1.msra.mxu0 0.0
        %765 = vmatprep.subr.mxu0 0.0
        %766 = vmatpush1.msra.mxu0 0.0
        %767 = vmatprep.subr.mxu0 0.0
        %768 = vmatpush1.msra.mxu0 0.0
        %769 = vmatprep.mubr.f32.mxu0 0.0
        %770 = vmatmul.mubr.f32.gmra.mrb[0].mxu0 %v699
        %v771 = vpop.f32.mrb[0].mxu0
        %v772 = vadd.f32 0.0, %v771
        %v773 = vpop.f32.mrb[0].mxu0
        %v774 = vadd.f32 0.0, %v773
        %775 = vdwg.mxu0
        %v776 = vadd.f32 %v685, %v772
        %v777 = vadd.f32 %v686, %v774
        %v778 = vld [vmem:[#allocation2] sm:$0x77]
        %s779 = scalar_lea.vmem %s1, 40
        %v780 = vld [vmem:[%s779] sm:$0xff]
        %v782 = vcombine.high %v778, %v778
        %783 = vrot.lane.b32.xlu0 %v778, 110
        %v784 = vpop.permute.xlu0 %783
        %785 = vrot.lane.b32.xlu0 %v782, 110
        %v786 = vpop.permute.xlu0 %785
        %vm787 = vcmask 900096
        %v788 = vsel %vm787, %v784, %v786
        %v790 = vsel %vm347, %v780, 0
        %v792 = vsel %vm351, %v788, 0
        %v794 = vsel %vm351, %v786, 0
        %796 = vmatprep.subr.mxu0 %v794
        %797 = vmatpush1.msra.mxu0 %v792
        %798 = vmatprep.subr.mxu0 0.0
        %799 = vmatpush1.msra.mxu0 0.0
        %800 = vmatprep.subr.mxu0 0.0
        %801 = vmatpush1.msra.mxu0 0.0
        %802 = vmatprep.subr.mxu0 0.0
        %803 = vmatpush1.msra.mxu0 0.0
        %804 = vmatprep.subr.mxu0 0.0
        %805 = vmatpush1.msra.mxu0 0.0
        %806 = vmatprep.subr.mxu0 0.0
        %807 = vmatpush1.msra.mxu0 0.0
        %808 = vmatprep.subr.mxu0 0.0
        %809 = vmatpush1.msra.mxu0 0.0
        %810 = vmatprep.subr.mxu0 0.0
        %811 = vmatpush1.msra.mxu0 0.0
        %812 = vmatprep.subr.mxu0 0.0
        %813 = vmatpush1.msra.mxu0 0.0
        %814 = vmatprep.subr.mxu0 0.0
        %815 = vmatpush1.msra.mxu0 0.0
        %816 = vmatprep.subr.mxu0 0.0
        %817 = vmatpush1.msra.mxu0 0.0
        %818 = vmatprep.subr.mxu0 0.0
        %819 = vmatpush1.msra.mxu0 0.0
        %820 = vmatprep.subr.mxu0 0.0
        %821 = vmatpush1.msra.mxu0 0.0
        %822 = vmatprep.subr.mxu0 0.0
        %823 = vmatpush1.msra.mxu0 0.0
        %824 = vmatprep.subr.mxu0 0.0
        %825 = vmatpush1.msra.mxu0 0.0
        %826 = vmatprep.subr.mxu0 0.0
        %827 = vmatpush1.msra.mxu0 0.0
        %828 = vmatprep.subr.mxu0 0.0
        %829 = vmatpush1.msra.mxu0 0.0
        %830 = vmatprep.subr.mxu0 0.0
        %831 = vmatpush1.msra.mxu0 0.0
        %832 = vmatprep.subr.mxu0 0.0
        %833 = vmatpush1.msra.mxu0 0.0
        %834 = vmatprep.subr.mxu0 0.0
        %835 = vmatpush1.msra.mxu0 0.0
        %836 = vmatprep.subr.mxu0 0.0
        %837 = vmatpush1.msra.mxu0 0.0
        %838 = vmatprep.subr.mxu0 0.0
        %839 = vmatpush1.msra.mxu0 0.0
        %840 = vmatprep.subr.mxu0 0.0
        %841 = vmatpush1.msra.mxu0 0.0
        %842 = vmatprep.subr.mxu0 0.0
        %843 = vmatpush1.msra.mxu0 0.0
        %844 = vmatprep.subr.mxu0 0.0
        %845 = vmatpush1.msra.mxu0 0.0
        %846 = vmatprep.subr.mxu0 0.0
        %847 = vmatpush1.msra.mxu0 0.0
        %848 = vmatprep.subr.mxu0 0.0
        %849 = vmatpush1.msra.mxu0 0.0
        %850 = vmatprep.subr.mxu0 0.0
        %851 = vmatpush1.msra.mxu0 0.0
        %852 = vmatprep.subr.mxu0 0.0
        %853 = vmatpush1.msra.mxu0 0.0
        %854 = vmatprep.subr.mxu0 0.0
        %855 = vmatpush1.msra.mxu0 0.0
        %856 = vmatprep.subr.mxu0 0.0
        %857 = vmatpush1.msra.mxu0 0.0
        %858 = vmatprep.subr.mxu0 0.0
        %859 = vmatpush1.msra.mxu0 0.0
        %860 = vmatprep.mubr.f32.mxu0 0.0
        %861 = vmatmul.mubr.f32.gmra.mrb[0].mxu0 %v790
        %v862 = vpop.f32.mrb[0].mxu0
        %v863 = vadd.f32 0.0, %v862
        %v864 = vpop.f32.mrb[0].mxu0
        %v865 = vadd.f32 0.0, %v864
        %866 = vdwg.mxu0
        %v867 = vadd.f32 %v776, %v863
        %v868 = vadd.f32 %v777, %v865
        %v869 = vld [vmem:[#allocation2] sm:$0x77]
        %v870 = vld [vmem:[#allocation2 + $0x8] sm:$0x7]
        %s871 = scalar_lea.vmem %s1, 48
        %v872 = vld [vmem:[%s871] sm:$0xff]
        %v875 = vcombine.high %v869, %v869
        %876 = vrot.lane.b32.xlu0 %v869, 96
        %v877 = vpop.permute.xlu0 %876
        %878 = vrot.lane.b32.xlu0 %v875, 96
        %v879 = vpop.permute.xlu0 %878
        %880 = vrot.lane.b32.xlu0 %v870, 96
        %v881 = vpop.permute.xlu0 %880
        %vm882 = vcmask 785408
        %v883 = vsel %vm882, %v877, %v879
        %v884 = vsel %vm882, %v879, %v881
        %v886 = vsel %vm347, %v872, 0
        %v888 = vsel %vm351, %v883, 0
        %v890 = vsel %vm351, %v884, 0
        %892 = vmatprep.subr.mxu0 %v890
        %893 = vmatpush1.msra.mxu0 %v888
        %894 = vmatprep.subr.mxu0 0.0
        %895 = vmatpush1.msra.mxu0 0.0
        %896 = vmatprep.subr.mxu0 0.0
        %897 = vmatpush1.msra.mxu0 0.0
        %898 = vmatprep.subr.mxu0 0.0
        %899 = vmatpush1.msra.mxu0 0.0
        %900 = vmatprep.subr.mxu0 0.0
        %901 = vmatpush1.msra.mxu0 0.0
        %902 = vmatprep.subr.mxu0 0.0
        %903 = vmatpush1.msra.mxu0 0.0
        %904 = vmatprep.subr.mxu0 0.0
        %905 = vmatpush1.msra.mxu0 0.0
        %906 = vmatprep.subr.mxu0 0.0
        %907 = vmatpush1.msra.mxu0 0.0
        %908 = vmatprep.subr.mxu0 0.0
        %909 = vmatpush1.msra.mxu0 0.0
        %910 = vmatprep.subr.mxu0 0.0
        %911 = vmatpush1.msra.mxu0 0.0
        %912 = vmatprep.subr.mxu0 0.0
        %913 = vmatpush1.msra.mxu0 0.0
        %914 = vmatprep.subr.mxu0 0.0
        %915 = vmatpush1.msra.mxu0 0.0
        %916 = vmatprep.subr.mxu0 0.0
        %917 = vmatpush1.msra.mxu0 0.0
        %918 = vmatprep.subr.mxu0 0.0
        %919 = vmatpush1.msra.mxu0 0.0
        %920 = vmatprep.subr.mxu0 0.0
        %921 = vmatpush1.msra.mxu0 0.0
        %922 = vmatprep.subr.mxu0 0.0
        %923 = vmatpush1.msra.mxu0 0.0
        %924 = vmatprep.subr.mxu0 0.0
        %925 = vmatpush1.msra.mxu0 0.0
        %926 = vmatprep.subr.mxu0 0.0
        %927 = vmatpush1.msra.mxu0 0.0
        %928 = vmatprep.subr.mxu0 0.0
        %929 = vmatpush1.msra.mxu0 0.0
        %930 = vmatprep.subr.mxu0 0.0
        %931 = vmatpush1.msra.mxu0 0.0
        %932 = vmatprep.subr.mxu0 0.0
        %933 = vmatpush1.msra.mxu0 0.0
        %934 = vmatprep.subr.mxu0 0.0
        %935 = vmatpush1.msra.mxu0 0.0
        %936 = vmatprep.subr.mxu0 0.0
        %937 = vmatpush1.msra.mxu0 0.0
        %938 = vmatprep.subr.mxu0 0.0
        %939 = vmatpush1.msra.mxu0 0.0
        %940 = vmatprep.subr.mxu0 0.0
        %941 = vmatpush1.msra.mxu0 0.0
        %942 = vmatprep.subr.mxu0 0.0
        %943 = vmatpush1.msra.mxu0 0.0
        %944 = vmatprep.subr.mxu0 0.0
        %945 = vmatpush1.msra.mxu0 0.0
        %946 = vmatprep.subr.mxu0 0.0
        %947 = vmatpush1.msra.mxu0 0.0
        %948 = vmatprep.subr.mxu0 0.0
        %949 = vmatpush1.msra.mxu0 0.0
        %950 = vmatprep.subr.mxu0 0.0
        %951 = vmatpush1.msra.mxu0 0.0
        %952 = vmatprep.subr.mxu0 0.0
        %953 = vmatpush1.msra.mxu0 0.0
        %954 = vmatprep.subr.mxu0 0.0
        %955 = vmatpush1.msra.mxu0 0.0
        %956 = vmatprep.mubr.f32.mxu0 0.0
        %957 = vmatmul.mubr.f32.gmra.mrb[0].mxu0 %v886
        %v958 = vpop.f32.mrb[0].mxu0
        %v959 = vadd.f32 0.0, %v958
        %v960 = vpop.f32.mrb[0].mxu0
        %v961 = vadd.f32 0.0, %v960
        %962 = vdwg.mxu0
        %v963 = vadd.f32 %v867, %v959
        %v964 = vadd.f32 %v868, %v961
        %v965 = vld [vmem:[#allocation2] sm:$0x77]
        %v966 = vld [vmem:[#allocation2 + $0x8] sm:$0x7]
        %s967 = scalar_lea.vmem %s1, 56
        %v968 = vld [vmem:[%s967] sm:$0xff]
        %v971 = vcombine.high %v965, %v965
        %972 = vrot.lane.b32.xlu0 %v965, 95
        %v973 = vpop.permute.xlu0 %972
        %974 = vrot.lane.b32.xlu0 %v971, 95
        %v975 = vpop.permute.xlu0 %974
        %976 = vrot.lane.b32.xlu0 %v966, 95
        %v977 = vpop.permute.xlu0 %976
        %vm978 = vcmask 777216
        %v979 = vsel %vm978, %v973, %v975
        %v980 = vsel %vm978, %v975, %v977
        %v982 = vsel %vm347, %v968, 0
        %v984 = vsel %vm351, %v979, 0
        %v986 = vsel %vm351, %v980, 0
        %988 = vmatprep.subr.mxu0 %v986
        %989 = vmatpush1.msra.mxu0 %v984
        %990 = vmatprep.subr.mxu0 0.0
        %991 = vmatpush1.msra.mxu0 0.0
        %992 = vmatprep.subr.mxu0 0.0
        %993 = vmatpush1.msra.mxu0 0.0
        %994 = vmatprep.subr.mxu0 0.0
        %995 = vmatpush1.msra.mxu0 0.0
        %996 = vmatprep.subr.mxu0 0.0
        %997 = vmatpush1.msra.mxu0 0.0
        %998 = vmatprep.subr.mxu0 0.0
        %999 = vmatpush1.msra.mxu0 0.0
        %1000 = vmatprep.subr.mxu0 0.0
        %1001 = vmatpush1.msra.mxu0 0.0
        %1002 = vmatprep.subr.mxu0 0.0
        %1003 = vmatpush1.msra.mxu0 0.0
        %1004 = vmatprep.subr.mxu0 0.0
        %1005 = vmatpush1.msra.mxu0 0.0
        %1006 = vmatprep.subr.mxu0 0.0
        %1007 = vmatpush1.msra.mxu0 0.0
        %1008 = vmatprep.subr.mxu0 0.0
        %1009 = vmatpush1.msra.mxu0 0.0
        %1010 = vmatprep.subr.mxu0 0.0
        %1011 = vmatpush1.msra.mxu0 0.0
        %1012 = vmatprep.subr.mxu0 0.0
        %1013 = vmatpush1.msra.mxu0 0.0
        %1014 = vmatprep.subr.mxu0 0.0
        %1015 = vmatpush1.msra.mxu0 0.0
        %1016 = vmatprep.subr.mxu0 0.0
        %1017 = vmatpush1.msra.mxu0 0.0
        %1018 = vmatprep.subr.mxu0 0.0
        %1019 = vmatpush1.msra.mxu0 0.0
        %1020 = vmatprep.subr.mxu0 0.0
        %1021 = vmatpush1.msra.mxu0 0.0
        %1022 = vmatprep.subr.mxu0 0.0
        %1023 = vmatpush1.msra.mxu0 0.0
        %1024 = vmatprep.subr.mxu0 0.0
        %1025 = vmatpush1.msra.mxu0 0.0
        %1026 = vmatprep.subr.mxu0 0.0
        %1027 = vmatpush1.msra.mxu0 0.0
        %1028 = vmatprep.subr.mxu0 0.0
        %1029 = vmatpush1.msra.mxu0 0.0
        %1030 = vmatprep.subr.mxu0 0.0
        %1031 = vmatpush1.msra.mxu0 0.0
        %1032 = vmatprep.subr.mxu0 0.0
        %1033 = vmatpush1.msra.mxu0 0.0
        %1034 = vmatprep.subr.mxu0 0.0
        %1035 = vmatpush1.msra.mxu0 0.0
        %1036 = vmatprep.subr.mxu0 0.0
        %1037 = vmatpush1.msra.mxu0 0.0
        %1038 = vmatprep.subr.mxu0 0.0
        %1039 = vmatpush1.msra.mxu0 0.0
        %1040 = vmatprep.subr.mxu0 0.0
        %1041 = vmatpush1.msra.mxu0 0.0
        %1042 = vmatprep.subr.mxu0 0.0
        %1043 = vmatpush1.msra.mxu0 0.0
        %1044 = vmatprep.subr.mxu0 0.0
        %1045 = vmatpush1.msra.mxu0 0.0
        %1046 = vmatprep.subr.mxu0 0.0
        %1047 = vmatpush1.msra.mxu0 0.0
        %1048 = vmatprep.subr.mxu0 0.0
        %1049 = vmatpush1.msra.mxu0 0.0
        %1050 = vmatprep.subr.mxu0 0.0
        %1051 = vmatpush1.msra.mxu0 0.0
        %1052 = vmatprep.mubr.f32.mxu0 0.0
        %1053 = vmatmul.mubr.f32.gmra.mrb[0].mxu0 %v982
        %v1054 = vpop.f32.mrb[0].mxu0
        %v1055 = vadd.f32 0.0, %v1054
        %v1056 = vpop.f32.mrb[0].mxu0
        %v1057 = vadd.f32 0.0, %v1056
        %1058 = vdwg.mxu0
        %v1059 = vadd.f32 %v963, %v1055
        %v1060 = vadd.f32 %v964, %v1057
        %v1061 = vld [vmem:[#allocation2] sm:$0x77]
        %v1062 = vld [vmem:[#allocation2 + $0x8] sm:$0x7]
        %s1063 = scalar_lea.vmem %s1, 64
        %v1064 = vld [vmem:[%s1063] sm:$0xff]
        %v1067 = vcombine.high %v1061, %v1061
        %1068 = vrot.lane.b32.xlu0 %v1061, 94
        %v1069 = vpop.permute.xlu0 %1068
        %1070 = vrot.lane.b32.xlu0 %v1067, 94
        %v1071 = vpop.permute.xlu0 %1070
        %1072 = vrot.lane.b32.xlu0 %v1062, 94
        %v1073 = vpop.permute.xlu0 %1072
        %vm1074 = vcmask 769024
        %v1075 = vsel %vm1074, %v1069, %v1071
        %v1076 = vsel %vm1074, %v1071, %v1073
        %v1078 = vsel %vm347, %v1064, 0
        %v1080 = vsel %vm351, %v1075, 0
        %v1082 = vsel %vm351, %v1076, 0
        %1084 = vmatprep.subr.mxu0 %v1082
        %1085 = vmatpush1.msra.mxu0 %v1080
        %1086 = vmatprep.subr.mxu0 0.0
        %1087 = vmatpush1.msra.mxu0 0.0
        %1088 = vmatprep.subr.mxu0 0.0
        %1089 = vmatpush1.msra.mxu0 0.0
        %1090 = vmatprep.subr.mxu0 0.0
        %1091 = vmatpush1.msra.mxu0 0.0
        %1092 = vmatprep.subr.mxu0 0.0
        %1093 = vmatpush1.msra.mxu0 0.0
        %1094 = vmatprep.subr.mxu0 0.0
        %1095 = vmatpush1.msra.mxu0 0.0
        %1096 = vmatprep.subr.mxu0 0.0
        %1097 = vmatpush1.msra.mxu0 0.0
        %1098 = vmatprep.subr.mxu0 0.0
        %1099 = vmatpush1.msra.mxu0 0.0
        %1100 = vmatprep.subr.mxu0 0.0
        %1101 = vmatpush1.msra.mxu0 0.0
        %1102 = vmatprep.subr.mxu0 0.0
        %1103 = vmatpush1.msra.mxu0 0.0
        %1104 = vmatprep.subr.mxu0 0.0
        %1105 = vmatpush1.msra.mxu0 0.0
        %1106 = vmatprep.subr.mxu0 0.0
        %1107 = vmatpush1.msra.mxu0 0.0
        %1108 = vmatprep.subr.mxu0 0.0
        %1109 = vmatpush1.msra.mxu0 0.0
        %1110 = vmatprep.subr.mxu0 0.0
        %1111 = vmatpush1.msra.mxu0 0.0
        %1112 = vmatprep.subr.mxu0 0.0
        %1113 = vmatpush1.msra.mxu0 0.0
        %1114 = vmatprep.subr.mxu0 0.0
        %1115 = vmatpush1.msra.mxu0 0.0
        %1116 = vmatprep.subr.mxu0 0.0
        %1117 = vmatpush1.msra.mxu0 0.0
        %1118 = vmatprep.subr.mxu0 0.0
        %1119 = vmatpush1.msra.mxu0 0.0
        %1120 = vmatprep.subr.mxu0 0.0
        %1121 = vmatpush1.msra.mxu0 0.0
        %1122 = vmatprep.subr.mxu0 0.0
        %1123 = vmatpush1.msra.mxu0 0.0
        %1124 = vmatprep.subr.mxu0 0.0
        %1125 = vmatpush1.msra.mxu0 0.0
        %1126 = vmatprep.subr.mxu0 0.0
        %1127 = vmatpush1.msra.mxu0 0.0
        %1128 = vmatprep.subr.mxu0 0.0
        %1129 = vmatpush1.msra.mxu0 0.0
        %1130 = vmatprep.subr.mxu0 0.0
        %1131 = vmatpush1.msra.mxu0 0.0
        %1132 = vmatprep.subr.mxu0 0.0
        %1133 = vmatpush1.msra.mxu0 0.0
        %1134 = vmatprep.subr.mxu0 0.0
        %1135 = vmatpush1.msra.mxu0 0.0
        %1136 = vmatprep.subr.mxu0 0.0
        %1137 = vmatpush1.msra.mxu0 0.0
        %1138 = vmatprep.subr.mxu0 0.0
        %1139 = vmatpush1.msra.mxu0 0.0
        %1140 = vmatprep.subr.mxu0 0.0
        %1141 = vmatpush1.msra.mxu0 0.0
        %1142 = vmatprep.subr.mxu0 0.0
        %1143 = vmatpush1.msra.mxu0 0.0
        %1144 = vmatprep.subr.mxu0 0.0
        %1145 = vmatpush1.msra.mxu0 0.0
        %1146 = vmatprep.subr.mxu0 0.0
        %1147 = vmatpush1.msra.mxu0 0.0
        %1148 = vmatprep.mubr.f32.mxu0 0.0
        %1149 = vmatmul.mubr.f32.gmra.mrb[0].mxu0 %v1078
        %v1150 = vpop.f32.mrb[0].mxu0
        %v1151 = vadd.f32 0.0, %v1150
        %v1152 = vpop.f32.mrb[0].mxu0
        %v1153 = vadd.f32 0.0, %v1152
        %1154 = vdwg.mxu0
        %v1155 = vadd.f32 %v1059, %v1151
        %v1156 = vadd.f32 %v1060, %v1153
        %v1157 = vld [vmem:[%s2] sm:$0xff]
        %1159 = vset.pattern.permute.xlu0 0
        %1160 = vperm.xlu0 %1159, %v1157
        %v1161 = vpop.permute.xlu0 %1160
        %v1163 = vadd.f32 %v1155, %v1161
        %v1164 = vadd.f32 %v1156, %v1161
        %1165 = vst [vmem:[#allocation3] sm:$0xff] %v1163
        %vm1166 = vcmask 818176
        %1167 = vst.msk [vmem:[#allocation3 + $0x8] sm:$0xff] %vm1166, %v1164
        %v1168 = vld [vmem:[#allocation3] sm:$0xff]
        %v1169 = vld [vmem:[#allocation3 + $0x8] sm:$0xff]
        %v1170 = vld [vmem:[%s3] sm:$0xff]
        %s1171 = scalar_lea.vmem %s3, 8
        %v1172 = vld [vmem:[%s1171] sm:$0xff]
        %1175 = vrot.lane.b32.xlu0 %v1168, 127
        %v1176 = vpop.permute.xlu0 %1175
        %1177 = vrot.lane.b32.xlu0 %v1169, 127
        %v1178 = vpop.permute.xlu0 %1177
        %v1179 = vsel %vm345, %v1176, %v1178
        %vm1182 = vcmask 64512
        %v1184 = vsel %vm1182, %v1172, 0
        %1186 = vmatprep.subr.mxu0 %v1178
        %1187 = vmatpush1.msra.mxu0 %v1179
        %1188 = vmatprep.subr.mxu0 0.0
        %1189 = vmatpush1.msra.mxu0 0.0
        %1190 = vmatprep.subr.mxu0 0.0
        %1191 = vmatpush1.msra.mxu0 0.0
        %1192 = vmatprep.subr.mxu0 0.0
        %1193 = vmatpush1.msra.mxu0 0.0
        %1194 = vmatprep.subr.mxu0 0.0
        %1195 = vmatpush1.msra.mxu0 0.0
        %1196 = vmatprep.subr.mxu0 0.0
        %1197 = vmatpush1.msra.mxu0 0.0
        %1198 = vmatprep.subr.mxu0 0.0
        %1199 = vmatpush1.msra.mxu0 0.0
        %1200 = vmatprep.subr.mxu0 0.0
        %1201 = vmatpush1.msra.mxu0 0.0
        %1202 = vmatprep.subr.mxu0 0.0
        %1203 = vmatpush1.msra.mxu0 0.0
        %1204 = vmatprep.subr.mxu0 0.0
        %1205 = vmatpush1.msra.mxu0 0.0
        %1206 = vmatprep.subr.mxu0 0.0
        %1207 = vmatpush1.msra.mxu0 0.0
        %1208 = vmatprep.subr.mxu0 0.0
        %1209 = vmatpush1.msra.mxu0 0.0
        %1210 = vmatprep.subr.mxu0 0.0
        %1211 = vmatpush1.msra.mxu0 0.0
        %1212 = vmatprep.subr.mxu0 0.0
        %1213 = vmatpush1.msra.mxu0 0.0
        %1214 = vmatprep.subr.mxu0 0.0
        %1215 = vmatpush1.msra.mxu0 0.0
        %1216 = vmatprep.subr.mxu0 0.0
        %1217 = vmatpush1.msra.mxu0 0.0
        %1218 = vmatprep.subr.mxu0 0.0
        %1219 = vmatpush1.msra.mxu0 0.0
        %1220 = vmatprep.subr.mxu0 0.0
        %1221 = vmatpush1.msra.mxu0 0.0
        %1222 = vmatprep.subr.mxu0 0.0
        %1223 = vmatpush1.msra.mxu0 0.0
        %1224 = vmatprep.subr.mxu0 0.0
        %1225 = vmatpush1.msra.mxu0 0.0
        %1226 = vmatprep.subr.mxu0 0.0
        %1227 = vmatpush1.msra.mxu0 0.0
        %1228 = vmatprep.subr.mxu0 0.0
        %1229 = vmatpush1.msra.mxu0 0.0
        %1230 = vmatprep.subr.mxu0 0.0
        %1231 = vmatpush1.msra.mxu0 0.0
        %1232 = vmatprep.subr.mxu0 0.0
        %1233 = vmatpush1.msra.mxu0 0.0
        %1234 = vmatprep.subr.mxu0 0.0
        %1235 = vmatpush1.msra.mxu0 0.0
        %1236 = vmatprep.subr.mxu0 0.0
        %1237 = vmatpush1.msra.mxu0 0.0
        %1238 = vmatprep.subr.mxu0 0.0
        %1239 = vmatpush1.msra.mxu0 0.0
        %1240 = vmatprep.subr.mxu0 0.0
        %1241 = vmatpush1.msra.mxu0 0.0
        %1242 = vmatprep.subr.mxu0 0.0
        %1243 = vmatpush1.msra.mxu0 0.0
        %1244 = vmatprep.subr.mxu0 0.0
        %1245 = vmatpush1.msra.mxu0 0.0
        %1246 = vmatprep.subr.mxu0 0.0
        %1247 = vmatpush1.msra.mxu0 0.0
        %1248 = vmatprep.subr.mxu0 0.0
        %1249 = vmatpush1.msra.mxu0 0.0
        %1250 = vmatprep.mubr.f32.mxu0 0.0
        %1251 = vmatmul.mubr.f32.gmra.mrb[0].mxu0 %v1184
        %v1252 = vpop.f32.mrb[0].mxu0
        %v1253 = vadd.f32 0.0, %v1252
        %v1254 = vpop.f32.mrb[0].mxu0
        %v1255 = vadd.f32 0.0, %v1254
        %1256 = vdwg.mxu0
        %v1258 = vsel %vm1182, %v1170, 0
        %1260 = vmatprep.subr.mxu0 %v1169
        %1261 = vmatpush1.msra.mxu0 %v1168
        %1262 = vmatprep.subr.mxu0 0.0
        %1263 = vmatpush1.msra.mxu0 0.0
        %1264 = vmatprep.subr.mxu0 0.0
        %1265 = vmatpush1.msra.mxu0 0.0
        %1266 = vmatprep.subr.mxu0 0.0
        %1267 = vmatpush1.msra.mxu0 0.0
        %1268 = vmatprep.subr.mxu0 0.0
        %1269 = vmatpush1.msra.mxu0 0.0
        %1270 = vmatprep.subr.mxu0 0.0
        %1271 = vmatpush1.msra.mxu0 0.0
        %1272 = vmatprep.subr.mxu0 0.0
        %1273 = vmatpush1.msra.mxu0 0.0
        %1274 = vmatprep.subr.mxu0 0.0
        %1275 = vmatpush1.msra.mxu0 0.0
        %1276 = vmatprep.subr.mxu0 0.0
        %1277 = vmatpush1.msra.mxu0 0.0
        %1278 = vmatprep.subr.mxu0 0.0
        %1279 = vmatpush1.msra.mxu0 0.0
        %1280 = vmatprep.subr.mxu0 0.0
        %1281 = vmatpush1.msra.mxu0 0.0
        %1282 = vmatprep.subr.mxu0 0.0
        %1283 = vmatpush1.msra.mxu0 0.0
        %1284 = vmatprep.subr.mxu0 0.0
        %1285 = vmatpush1.msra.mxu0 0.0
        %1286 = vmatprep.subr.mxu0 0.0
        %1287 = vmatpush1.msra.mxu0 0.0
        %1288 = vmatprep.subr.mxu0 0.0
        %1289 = vmatpush1.msra.mxu0 0.0
        %1290 = vmatprep.subr.mxu0 0.0
        %1291 = vmatpush1.msra.mxu0 0.0
        %1292 = vmatprep.subr.mxu0 0.0
        %1293 = vmatpush1.msra.mxu0 0.0
        %1294 = vmatprep.subr.mxu0 0.0
        %1295 = vmatpush1.msra.mxu0 0.0
        %1296 = vmatprep.subr.mxu0 0.0
        %1297 = vmatpush1.msra.mxu0 0.0
        %1298 = vmatprep.subr.mxu0 0.0
        %1299 = vmatpush1.msra.mxu0 0.0
        %1300 = vmatprep.subr.mxu0 0.0
        %1301 = vmatpush1.msra.mxu0 0.0
        %1302 = vmatprep.subr.mxu0 0.0
        %1303 = vmatpush1.msra.mxu0 0.0
        %1304 = vmatprep.subr.mxu0 0.0
        %1305 = vmatpush1.msra.mxu0 0.0
        %1306 = vmatprep.subr.mxu0 0.0
        %1307 = vmatpush1.msra.mxu0 0.0
        %1308 = vmatprep.subr.mxu0 0.0
        %1309 = vmatpush1.msra.mxu0 0.0
        %1310 = vmatprep.subr.mxu0 0.0
        %1311 = vmatpush1.msra.mxu0 0.0
        %1312 = vmatprep.subr.mxu0 0.0
        %1313 = vmatpush1.msra.mxu0 0.0
        %1314 = vmatprep.subr.mxu0 0.0
        %1315 = vmatpush1.msra.mxu0 0.0
        %1316 = vmatprep.subr.mxu0 0.0
        %1317 = vmatpush1.msra.mxu0 0.0
        %1318 = vmatprep.subr.mxu0 0.0
        %1319 = vmatpush1.msra.mxu0 0.0
        %1320 = vmatprep.subr.mxu0 0.0
        %1321 = vmatpush1.msra.mxu0 0.0
        %1322 = vmatprep.subr.mxu0 0.0
        %1323 = vmatpush1.msra.mxu0 0.0
        %1324 = vmatprep.mubr.f32.mxu0 0.0
        %1325 = vmatmul.mubr.f32.gmra.mrb[0].mxu0 %v1258
        %v1326 = vpop.f32.mrb[0].mxu0
        %v1327 = vadd.f32 %v1253, %v1326
        %v1328 = vpop.f32.mrb[0].mxu0
        %v1329 = vadd.f32 %v1255, %v1328
        %1330 = vdwg.mxu0
        %s1331 = scalar_lea.vmem %s3, 16
        %v1332 = vld [vmem:[%s1331] sm:$0xff]
        %1333 = vrot.lane.b32.xlu0 %v1168, 126
        %v1334 = vpop.permute.xlu0 %1333
        %1335 = vrot.lane.b32.xlu0 %v1169, 126
        %v1336 = vpop.permute.xlu0 %1335
        %v1337 = vsel %vm514, %v1334, %v1336
        %v1341 = vsel %vm1182, %v1332, 0
        %1343 = vmatprep.subr.mxu0 %v1336
        %1344 = vmatpush1.msra.mxu0 %v1337
        %1345 = vmatprep.subr.mxu0 0.0
        %1346 = vmatpush1.msra.mxu0 0.0
        %1347 = vmatprep.subr.mxu0 0.0
        %1348 = vmatpush1.msra.mxu0 0.0
        %1349 = vmatprep.subr.mxu0 0.0
        %1350 = vmatpush1.msra.mxu0 0.0
        %1351 = vmatprep.subr.mxu0 0.0
        %1352 = vmatpush1.msra.mxu0 0.0
        %1353 = vmatprep.subr.mxu0 0.0
        %1354 = vmatpush1.msra.mxu0 0.0
        %1355 = vmatprep.subr.mxu0 0.0
        %1356 = vmatpush1.msra.mxu0 0.0
        %1357 = vmatprep.subr.mxu0 0.0
        %1358 = vmatpush1.msra.mxu0 0.0
        %1359 = vmatprep.subr.mxu0 0.0
        %1360 = vmatpush1.msra.mxu0 0.0
        %1361 = vmatprep.subr.mxu0 0.0
        %1362 = vmatpush1.msra.mxu0 0.0
        %1363 = vmatprep.subr.mxu0 0.0
        %1364 = vmatpush1.msra.mxu0 0.0
        %1365 = vmatprep.subr.mxu0 0.0
        %1366 = vmatpush1.msra.mxu0 0.0
        %1367 = vmatprep.subr.mxu0 0.0
        %1368 = vmatpush1.msra.mxu0 0.0
        %1369 = vmatprep.subr.mxu0 0.0
        %1370 = vmatpush1.msra.mxu0 0.0
        %1371 = vmatprep.subr.mxu0 0.0
        %1372 = vmatpush1.msra.mxu0 0.0
        %1373 = vmatprep.subr.mxu0 0.0
        %1374 = vmatpush1.msra.mxu0 0.0
        %1375 = vmatprep.subr.mxu0 0.0
        %1376 = vmatpush1.msra.mxu0 0.0
        %1377 = vmatprep.subr.mxu0 0.0
        %1378 = vmatpush1.msra.mxu0 0.0
        %1379 = vmatprep.subr.mxu0 0.0
        %1380 = vmatpush1.msra.mxu0 0.0
        %1381 = vmatprep.subr.mxu0 0.0
        %1382 = vmatpush1.msra.mxu0 0.0
        %1383 = vmatprep.subr.mxu0 0.0
        %1384 = vmatpush1.msra.mxu0 0.0
        %1385 = vmatprep.subr.mxu0 0.0
        %1386 = vmatpush1.msra.mxu0 0.0
        %1387 = vmatprep.subr.mxu0 0.0
        %1388 = vmatpush1.msra.mxu0 0.0
        %1389 = vmatprep.subr.mxu0 0.0
        %1390 = vmatpush1.msra.mxu0 0.0
        %1391 = vmatprep.subr.mxu0 0.0
        %1392 = vmatpush1.msra.mxu0 0.0
        %1393 = vmatprep.subr.mxu0 0.0
        %1394 = vmatpush1.msra.mxu0 0.0
        %1395 = vmatprep.subr.mxu0 0.0
        %1396 = vmatpush1.msra.mxu0 0.0
        %1397 = vmatprep.subr.mxu0 0.0
        %1398 = vmatpush1.msra.mxu0 0.0
        %1399 = vmatprep.subr.mxu0 0.0
        %1400 = vmatpush1.msra.mxu0 0.0
        %1401 = vmatprep.subr.mxu0 0.0
        %1402 = vmatpush1.msra.mxu0 0.0
        %1403 = vmatprep.subr.mxu0 0.0
        %1404 = vmatpush1.msra.mxu0 0.0
        %1405 = vmatprep.subr.mxu0 0.0
        %1406 = vmatpush1.msra.mxu0 0.0
        %1407 = vmatprep.mubr.f32.mxu0 0.0
        %1408 = vmatmul.mubr.f32.gmra.mrb[0].mxu0 %v1341
        %v1409 = vpop.f32.mrb[0].mxu0
        %v1410 = vadd.f32 0.0, %v1409
        %v1411 = vpop.f32.mrb[0].mxu0
        %v1412 = vadd.f32 0.0, %v1411
        %1413 = vdwg.mxu0
        %v1414 = vadd.f32 %v1327, %v1410
        %v1415 = vadd.f32 %v1329, %v1412
        %s1416 = scalar_lea.vmem %s3, 24
        %v1417 = vld [vmem:[%s1416] sm:$0xff]
        %1418 = vrot.lane.b32.xlu0 %v1168, 112
        %v1419 = vpop.permute.xlu0 %1418
        %1420 = vrot.lane.b32.xlu0 %v1169, 112
        %v1421 = vpop.permute.xlu0 %1420
        %v1422 = vsel %vm605, %v1419, %v1421
        %v1426 = vsel %vm1182, %v1417, 0
        %1428 = vmatprep.subr.mxu0 %v1421
        %1429 = vmatpush1.msra.mxu0 %v1422
        %1430 = vmatprep.subr.mxu0 0.0
        %1431 = vmatpush1.msra.mxu0 0.0
        %1432 = vmatprep.subr.mxu0 0.0
        %1433 = vmatpush1.msra.mxu0 0.0
        %1434 = vmatprep.subr.mxu0 0.0
        %1435 = vmatpush1.msra.mxu0 0.0
        %1436 = vmatprep.subr.mxu0 0.0
        %1437 = vmatpush1.msra.mxu0 0.0
        %1438 = vmatprep.subr.mxu0 0.0
        %1439 = vmatpush1.msra.mxu0 0.0
        %1440 = vmatprep.subr.mxu0 0.0
        %1441 = vmatpush1.msra.mxu0 0.0
        %1442 = vmatprep.subr.mxu0 0.0
        %1443 = vmatpush1.msra.mxu0 0.0
        %1444 = vmatprep.subr.mxu0 0.0
        %1445 = vmatpush1.msra.mxu0 0.0
        %1446 = vmatprep.subr.mxu0 0.0
        %1447 = vmatpush1.msra.mxu0 0.0
        %1448 = vmatprep.subr.mxu0 0.0
        %1449 = vmatpush1.msra.mxu0 0.0
        %1450 = vmatprep.subr.mxu0 0.0
        %1451 = vmatpush1.msra.mxu0 0.0
        %1452 = vmatprep.subr.mxu0 0.0
        %1453 = vmatpush1.msra.mxu0 0.0
        %1454 = vmatprep.subr.mxu0 0.0
        %1455 = vmatpush1.msra.mxu0 0.0
        %1456 = vmatprep.subr.mxu0 0.0
        %1457 = vmatpush1.msra.mxu0 0.0
        %1458 = vmatprep.subr.mxu0 0.0
        %1459 = vmatpush1.msra.mxu0 0.0
        %1460 = vmatprep.subr.mxu0 0.0
        %1461 = vmatpush1.msra.mxu0 0.0
        %1462 = vmatprep.subr.mxu0 0.0
        %1463 = vmatpush1.msra.mxu0 0.0
        %1464 = vmatprep.subr.mxu0 0.0
        %1465 = vmatpush1.msra.mxu0 0.0
        %1466 = vmatprep.subr.mxu0 0.0
        %1467 = vmatpush1.msra.mxu0 0.0
        %1468 = vmatprep.subr.mxu0 0.0
        %1469 = vmatpush1.msra.mxu0 0.0
        %1470 = vmatprep.subr.mxu0 0.0
        %1471 = vmatpush1.msra.mxu0 0.0
        %1472 = vmatprep.subr.mxu0 0.0
        %1473 = vmatpush1.msra.mxu0 0.0
        %1474 = vmatprep.subr.mxu0 0.0
        %1475 = vmatpush1.msra.mxu0 0.0
        %1476 = vmatprep.subr.mxu0 0.0
        %1477 = vmatpush1.msra.mxu0 0.0
        %1478 = vmatprep.subr.mxu0 0.0
        %1479 = vmatpush1.msra.mxu0 0.0
        %1480 = vmatprep.subr.mxu0 0.0
        %1481 = vmatpush1.msra.mxu0 0.0
        %1482 = vmatprep.subr.mxu0 0.0
        %1483 = vmatpush1.msra.mxu0 0.0
        %1484 = vmatprep.subr.mxu0 0.0
        %1485 = vmatpush1.msra.mxu0 0.0
        %1486 = vmatprep.subr.mxu0 0.0
        %1487 = vmatpush1.msra.mxu0 0.0
        %1488 = vmatprep.subr.mxu0 0.0
        %1489 = vmatpush1.msra.mxu0 0.0
        %1490 = vmatprep.subr.mxu0 0.0
        %1491 = vmatpush1.msra.mxu0 0.0
        %1492 = vmatprep.mubr.f32.mxu0 0.0
        %1493 = vmatmul.mubr.f32.gmra.mrb[0].mxu0 %v1426
        %v1494 = vpop.f32.mrb[0].mxu0
        %v1495 = vadd.f32 0.0, %v1494
        %v1496 = vpop.f32.mrb[0].mxu0
        %v1497 = vadd.f32 0.0, %v1496
        %1498 = vdwg.mxu0
        %v1499 = vadd.f32 %v1414, %v1495
        %v1500 = vadd.f32 %v1415, %v1497
        %s1501 = scalar_lea.vmem %s3, 32
        %v1502 = vld [vmem:[%s1501] sm:$0xff]
        %1503 = vrot.lane.b32.xlu0 %v1168, 111
        %v1504 = vpop.permute.xlu0 %1503
        %1505 = vrot.lane.b32.xlu0 %v1169, 111
        %v1506 = vpop.permute.xlu0 %1505
        %v1507 = vsel %vm696, %v1504, %v1506
        %v1511 = vsel %vm1182, %v1502, 0
        %1513 = vmatprep.subr.mxu0 %v1506
        %1514 = vmatpush1.msra.mxu0 %v1507
        %1515 = vmatprep.subr.mxu0 0.0
        %1516 = vmatpush1.msra.mxu0 0.0
        %1517 = vmatprep.subr.mxu0 0.0
        %1518 = vmatpush1.msra.mxu0 0.0
        %1519 = vmatprep.subr.mxu0 0.0
        %1520 = vmatpush1.msra.mxu0 0.0
        %1521 = vmatprep.subr.mxu0 0.0
        %1522 = vmatpush1.msra.mxu0 0.0
        %1523 = vmatprep.subr.mxu0 0.0
        %1524 = vmatpush1.msra.mxu0 0.0
        %1525 = vmatprep.subr.mxu0 0.0
        %1526 = vmatpush1.msra.mxu0 0.0
        %1527 = vmatprep.subr.mxu0 0.0
        %1528 = vmatpush1.msra.mxu0 0.0
        %1529 = vmatprep.subr.mxu0 0.0
        %1530 = vmatpush1.msra.mxu0 0.0
        %1531 = vmatprep.subr.mxu0 0.0
        %1532 = vmatpush1.msra.mxu0 0.0
        %1533 = vmatprep.subr.mxu0 0.0
        %1534 = vmatpush1.msra.mxu0 0.0
        %1535 = vmatprep.subr.mxu0 0.0
        %1536 = vmatpush1.msra.mxu0 0.0
        %1537 = vmatprep.subr.mxu0 0.0
        %1538 = vmatpush1.msra.mxu0 0.0
        %1539 = vmatprep.subr.mxu0 0.0
        %1540 = vmatpush1.msra.mxu0 0.0
        %1541 = vmatprep.subr.mxu0 0.0
        %1542 = vmatpush1.msra.mxu0 0.0
        %1543 = vmatprep.subr.mxu0 0.0
        %1544 = vmatpush1.msra.mxu0 0.0
        %1545 = vmatprep.subr.mxu0 0.0
        %1546 = vmatpush1.msra.mxu0 0.0
        %1547 = vmatprep.subr.mxu0 0.0
        %1548 = vmatpush1.msra.mxu0 0.0
        %1549 = vmatprep.subr.mxu0 0.0
        %1550 = vmatpush1.msra.mxu0 0.0
        %1551 = vmatprep.subr.mxu0 0.0
        %1552 = vmatpush1.msra.mxu0 0.0
        %1553 = vmatprep.subr.mxu0 0.0
        %1554 = vmatpush1.msra.mxu0 0.0
        %1555 = vmatprep.subr.mxu0 0.0
        %1556 = vmatpush1.msra.mxu0 0.0
        %1557 = vmatprep.subr.mxu0 0.0
        %1558 = vmatpush1.msra.mxu0 0.0
        %1559 = vmatprep.subr.mxu0 0.0
        %1560 = vmatpush1.msra.mxu0 0.0
        %1561 = vmatprep.subr.mxu0 0.0
        %1562 = vmatpush1.msra.mxu0 0.0
        %1563 = vmatprep.subr.mxu0 0.0
        %1564 = vmatpush1.msra.mxu0 0.0
        %1565 = vmatprep.subr.mxu0 0.0
        %1566 = vmatpush1.msra.mxu0 0.0
        %1567 = vmatprep.subr.mxu0 0.0
        %1568 = vmatpush1.msra.mxu0 0.0
        %1569 = vmatprep.subr.mxu0 0.0
        %1570 = vmatpush1.msra.mxu0 0.0
        %1571 = vmatprep.subr.mxu0 0.0
        %1572 = vmatpush1.msra.mxu0 0.0
        %1573 = vmatprep.subr.mxu0 0.0
        %1574 = vmatpush1.msra.mxu0 0.0
        %1575 = vmatprep.subr.mxu0 0.0
        %1576 = vmatpush1.msra.mxu0 0.0
        %1577 = vmatprep.mubr.f32.mxu0 0.0
        %1578 = vmatmul.mubr.f32.gmra.mrb[0].mxu0 %v1511
        %v1579 = vpop.f32.mrb[0].mxu0
        %v1580 = vadd.f32 0.0, %v1579
        %v1581 = vpop.f32.mrb[0].mxu0
        %v1582 = vadd.f32 0.0, %v1581
        %1583 = vdwg.mxu0
        %v1584 = vadd.f32 %v1499, %v1580
        %v1585 = vadd.f32 %v1500, %v1582
        %s1586 = scalar_lea.vmem %s3, 40
        %v1587 = vld [vmem:[%s1586] sm:$0xff]
        %1588 = vrot.lane.b32.xlu0 %v1168, 110
        %v1589 = vpop.permute.xlu0 %1588
        %1590 = vrot.lane.b32.xlu0 %v1169, 110
        %v1591 = vpop.permute.xlu0 %1590
        %v1592 = vsel %vm787, %v1589, %v1591
        %v1596 = vsel %vm1182, %v1587, 0
        %1598 = vmatprep.subr.mxu0 %v1591
        %1599 = vmatpush1.msra.mxu0 %v1592
        %1600 = vmatprep.subr.mxu0 0.0
        %1601 = vmatpush1.msra.mxu0 0.0
        %1602 = vmatprep.subr.mxu0 0.0
        %1603 = vmatpush1.msra.mxu0 0.0
        %1604 = vmatprep.subr.mxu0 0.0
        %1605 = vmatpush1.msra.mxu0 0.0
        %1606 = vmatprep.subr.mxu0 0.0
        %1607 = vmatpush1.msra.mxu0 0.0
        %1608 = vmatprep.subr.mxu0 0.0
        %1609 = vmatpush1.msra.mxu0 0.0
        %1610 = vmatprep.subr.mxu0 0.0
        %1611 = vmatpush1.msra.mxu0 0.0
        %1612 = vmatprep.subr.mxu0 0.0
        %1613 = vmatpush1.msra.mxu0 0.0
        %1614 = vmatprep.subr.mxu0 0.0
        %1615 = vmatpush1.msra.mxu0 0.0
        %1616 = vmatprep.subr.mxu0 0.0
        %1617 = vmatpush1.msra.mxu0 0.0
        %1618 = vmatprep.subr.mxu0 0.0
        %1619 = vmatpush1.msra.mxu0 0.0
        %1620 = vmatprep.subr.mxu0 0.0
        %1621 = vmatpush1.msra.mxu0 0.0
        %1622 = vmatprep.subr.mxu0 0.0
        %1623 = vmatpush1.msra.mxu0 0.0
        %1624 = vmatprep.subr.mxu0 0.0
        %1625 = vmatpush1.msra.mxu0 0.0
        %1626 = vmatprep.subr.mxu0 0.0
        %1627 = vmatpush1.msra.mxu0 0.0
        %1628 = vmatprep.subr.mxu0 0.0
        %1629 = vmatpush1.msra.mxu0 0.0
        %1630 = vmatprep.subr.mxu0 0.0
        %1631 = vmatpush1.msra.mxu0 0.0
        %1632 = vmatprep.subr.mxu0 0.0
        %1633 = vmatpush1.msra.mxu0 0.0
        %1634 = vmatprep.subr.mxu0 0.0
        %1635 = vmatpush1.msra.mxu0 0.0
        %1636 = vmatprep.subr.mxu0 0.0
        %1637 = vmatpush1.msra.mxu0 0.0
        %1638 = vmatprep.subr.mxu0 0.0
        %1639 = vmatpush1.msra.mxu0 0.0
        %1640 = vmatprep.subr.mxu0 0.0
        %1641 = vmatpush1.msra.mxu0 0.0
        %1642 = vmatprep.subr.mxu0 0.0
        %1643 = vmatpush1.msra.mxu0 0.0
        %1644 = vmatprep.subr.mxu0 0.0
        %1645 = vmatpush1.msra.mxu0 0.0
        %1646 = vmatprep.subr.mxu0 0.0
        %1647 = vmatpush1.msra.mxu0 0.0
        %1648 = vmatprep.subr.mxu0 0.0
        %1649 = vmatpush1.msra.mxu0 0.0
        %1650 = vmatprep.subr.mxu0 0.0
        %1651 = vmatpush1.msra.mxu0 0.0
        %1652 = vmatprep.subr.mxu0 0.0
        %1653 = vmatpush1.msra.mxu0 0.0
        %1654 = vmatprep.subr.mxu0 0.0
        %1655 = vmatpush1.msra.mxu0 0.0
        %1656 = vmatprep.subr.mxu0 0.0
        %1657 = vmatpush1.msra.mxu0 0.0
        %1658 = vmatprep.subr.mxu0 0.0
        %1659 = vmatpush1.msra.mxu0 0.0
        %1660 = vmatprep.subr.mxu0 0.0
        %1661 = vmatpush1.msra.mxu0 0.0
        %1662 = vmatprep.mubr.f32.mxu0 0.0
        %1663 = vmatmul.mubr.f32.gmra.mrb[0].mxu0 %v1596
        %v1664 = vpop.f32.mrb[0].mxu0
        %v1665 = vadd.f32 0.0, %v1664
        %v1666 = vpop.f32.mrb[0].mxu0
        %v1667 = vadd.f32 0.0, %v1666
        %1668 = vdwg.mxu0
        %v1669 = vadd.f32 %v1584, %v1665
        %v1670 = vadd.f32 %v1585, %v1667
        %s1671 = scalar_lea.vmem %s3, 48
        %v1672 = vld [vmem:[%s1671] sm:$0xff]
        %1673 = vrot.lane.b32.xlu0 %v1168, 96
        %v1674 = vpop.permute.xlu0 %1673
        %1675 = vrot.lane.b32.xlu0 %v1169, 96
        %v1676 = vpop.permute.xlu0 %1675
        %v1677 = vsel %vm882, %v1674, %v1676
        %v1681 = vsel %vm1182, %v1672, 0
        %1683 = vmatprep.subr.mxu0 %v1676
        %1684 = vmatpush1.msra.mxu0 %v1677
        %1685 = vmatprep.subr.mxu0 0.0
        %1686 = vmatpush1.msra.mxu0 0.0
        %1687 = vmatprep.subr.mxu0 0.0
        %1688 = vmatpush1.msra.mxu0 0.0
        %1689 = vmatprep.subr.mxu0 0.0
        %1690 = vmatpush1.msra.mxu0 0.0
        %1691 = vmatprep.subr.mxu0 0.0
        %1692 = vmatpush1.msra.mxu0 0.0
        %1693 = vmatprep.subr.mxu0 0.0
        %1694 = vmatpush1.msra.mxu0 0.0
        %1695 = vmatprep.subr.mxu0 0.0
        %1696 = vmatpush1.msra.mxu0 0.0
        %1697 = vmatprep.subr.mxu0 0.0
        %1698 = vmatpush1.msra.mxu0 0.0
        %1699 = vmatprep.subr.mxu0 0.0
        %1700 = vmatpush1.msra.mxu0 0.0
        %1701 = vmatprep.subr.mxu0 0.0
        %1702 = vmatpush1.msra.mxu0 0.0
        %1703 = vmatprep.subr.mxu0 0.0
        %1704 = vmatpush1.msra.mxu0 0.0
        %1705 = vmatprep.subr.mxu0 0.0
        %1706 = vmatpush1.msra.mxu0 0.0
        %1707 = vmatprep.subr.mxu0 0.0
        %1708 = vmatpush1.msra.mxu0 0.0
        %1709 = vmatprep.subr.mxu0 0.0
        %1710 = vmatpush1.msra.mxu0 0.0
        %1711 = vmatprep.subr.mxu0 0.0
        %1712 = vmatpush1.msra.mxu0 0.0
        %1713 = vmatprep.subr.mxu0 0.0
        %1714 = vmatpush1.msra.mxu0 0.0
        %1715 = vmatprep.subr.mxu0 0.0
        %1716 = vmatpush1.msra.mxu0 0.0
        %1717 = vmatprep.subr.mxu0 0.0
        %1718 = vmatpush1.msra.mxu0 0.0
        %1719 = vmatprep.subr.mxu0 0.0
        %1720 = vmatpush1.msra.mxu0 0.0
        %1721 = vmatprep.subr.mxu0 0.0
        %1722 = vmatpush1.msra.mxu0 0.0
        %1723 = vmatprep.subr.mxu0 0.0
        %1724 = vmatpush1.msra.mxu0 0.0
        %1725 = vmatprep.subr.mxu0 0.0
        %1726 = vmatpush1.msra.mxu0 0.0
        %1727 = vmatprep.subr.mxu0 0.0
        %1728 = vmatpush1.msra.mxu0 0.0
        %1729 = vmatprep.subr.mxu0 0.0
        %1730 = vmatpush1.msra.mxu0 0.0
        %1731 = vmatprep.subr.mxu0 0.0
        %1732 = vmatpush1.msra.mxu0 0.0
        %1733 = vmatprep.subr.mxu0 0.0
        %1734 = vmatpush1.msra.mxu0 0.0
        %1735 = vmatprep.subr.mxu0 0.0
        %1736 = vmatpush1.msra.mxu0 0.0
        %1737 = vmatprep.subr.mxu0 0.0
        %1738 = vmatpush1.msra.mxu0 0.0
        %1739 = vmatprep.subr.mxu0 0.0
        %1740 = vmatpush1.msra.mxu0 0.0
        %1741 = vmatprep.subr.mxu0 0.0
        %1742 = vmatpush1.msra.mxu0 0.0
        %1743 = vmatprep.subr.mxu0 0.0
        %1744 = vmatpush1.msra.mxu0 0.0
        %1745 = vmatprep.subr.mxu0 0.0
        %1746 = vmatpush1.msra.mxu0 0.0
        %1747 = vmatprep.mubr.f32.mxu0 0.0
        %1748 = vmatmul.mubr.f32.gmra.mrb[0].mxu0 %v1681
        %v1749 = vpop.f32.mrb[0].mxu0
        %v1750 = vadd.f32 0.0, %v1749
        %v1751 = vpop.f32.mrb[0].mxu0
        %v1752 = vadd.f32 0.0, %v1751
        %1753 = vdwg.mxu0
        %v1754 = vadd.f32 %v1669, %v1750
        %v1755 = vadd.f32 %v1670, %v1752
        %s1756 = scalar_lea.vmem %s3, 56
        %v1757 = vld [vmem:[%s1756] sm:$0xff]
        %1758 = vrot.lane.b32.xlu0 %v1168, 95
        %v1759 = vpop.permute.xlu0 %1758
        %1760 = vrot.lane.b32.xlu0 %v1169, 95
        %v1761 = vpop.permute.xlu0 %1760
        %v1762 = vsel %vm978, %v1759, %v1761
        %v1766 = vsel %vm1182, %v1757, 0
        %1768 = vmatprep.subr.mxu0 %v1761
        %1769 = vmatpush1.msra.mxu0 %v1762
        %1770 = vmatprep.subr.mxu0 0.0
        %1771 = vmatpush1.msra.mxu0 0.0
        %1772 = vmatprep.subr.mxu0 0.0
        %1773 = vmatpush1.msra.mxu0 0.0
        %1774 = vmatprep.subr.mxu0 0.0
        %1775 = vmatpush1.msra.mxu0 0.0
        %1776 = vmatprep.subr.mxu0 0.0
        %1777 = vmatpush1.msra.mxu0 0.0
        %1778 = vmatprep.subr.mxu0 0.0
        %1779 = vmatpush1.msra.mxu0 0.0
        %1780 = vmatprep.subr.mxu0 0.0
        %1781 = vmatpush1.msra.mxu0 0.0
        %1782 = vmatprep.subr.mxu0 0.0
        %1783 = vmatpush1.msra.mxu0 0.0
        %1784 = vmatprep.subr.mxu0 0.0
        %1785 = vmatpush1.msra.mxu0 0.0
        %1786 = vmatprep.subr.mxu0 0.0
        %1787 = vmatpush1.msra.mxu0 0.0
        %1788 = vmatprep.subr.mxu0 0.0
        %1789 = vmatpush1.msra.mxu0 0.0
        %1790 = vmatprep.subr.mxu0 0.0
        %1791 = vmatpush1.msra.mxu0 0.0
        %1792 = vmatprep.subr.mxu0 0.0
        %1793 = vmatpush1.msra.mxu0 0.0
        %1794 = vmatprep.subr.mxu0 0.0
        %1795 = vmatpush1.msra.mxu0 0.0
        %1796 = vmatprep.subr.mxu0 0.0
        %1797 = vmatpush1.msra.mxu0 0.0
        %1798 = vmatprep.subr.mxu0 0.0
        %1799 = vmatpush1.msra.mxu0 0.0
        %1800 = vmatprep.subr.mxu0 0.0
        %1801 = vmatpush1.msra.mxu0 0.0
        %1802 = vmatprep.subr.mxu0 0.0
        %1803 = vmatpush1.msra.mxu0 0.0
        %1804 = vmatprep.subr.mxu0 0.0
        %1805 = vmatpush1.msra.mxu0 0.0
        %1806 = vmatprep.subr.mxu0 0.0
        %1807 = vmatpush1.msra.mxu0 0.0
        %1808 = vmatprep.subr.mxu0 0.0
        %1809 = vmatpush1.msra.mxu0 0.0
        %1810 = vmatprep.subr.mxu0 0.0
        %1811 = vmatpush1.msra.mxu0 0.0
        %1812 = vmatprep.subr.mxu0 0.0
        %1813 = vmatpush1.msra.mxu0 0.0
        %1814 = vmatprep.subr.mxu0 0.0
        %1815 = vmatpush1.msra.mxu0 0.0
        %1816 = vmatprep.subr.mxu0 0.0
        %1817 = vmatpush1.msra.mxu0 0.0
        %1818 = vmatprep.subr.mxu0 0.0
        %1819 = vmatpush1.msra.mxu0 0.0
        %1820 = vmatprep.subr.mxu0 0.0
        %1821 = vmatpush1.msra.mxu0 0.0
        %1822 = vmatprep.subr.mxu0 0.0
        %1823 = vmatpush1.msra.mxu0 0.0
        %1824 = vmatprep.subr.mxu0 0.0
        %1825 = vmatpush1.msra.mxu0 0.0
        %1826 = vmatprep.subr.mxu0 0.0
        %1827 = vmatpush1.msra.mxu0 0.0
        %1828 = vmatprep.subr.mxu0 0.0
        %1829 = vmatpush1.msra.mxu0 0.0
        %1830 = vmatprep.subr.mxu0 0.0
        %1831 = vmatpush1.msra.mxu0 0.0
        %1832 = vmatprep.mubr.f32.mxu0 0.0
        %1833 = vmatmul.mubr.f32.gmra.mrb[0].mxu0 %v1766
        %v1834 = vpop.f32.mrb[0].mxu0
        %v1835 = vadd.f32 0.0, %v1834
        %v1836 = vpop.f32.mrb[0].mxu0
        %v1837 = vadd.f32 0.0, %v1836
        %1838 = vdwg.mxu0
        %v1839 = vadd.f32 %v1754, %v1835
        %v1840 = vadd.f32 %v1755, %v1837
        %s1841 = scalar_lea.vmem %s3, 64
        %v1842 = vld [vmem:[%s1841] sm:$0xff]
        %1843 = vrot.lane.b32.xlu0 %v1168, 94
        %v1844 = vpop.permute.xlu0 %1843
        %1845 = vrot.lane.b32.xlu0 %v1169, 94
        %v1846 = vpop.permute.xlu0 %1845
        %v1847 = vsel %vm1074, %v1844, %v1846
        %v1851 = vsel %vm1182, %v1842, 0
        %1853 = vmatprep.subr.mxu0 %v1846
        %1854 = vmatpush1.msra.mxu0 %v1847
        %1855 = vmatprep.subr.mxu0 0.0
        %1856 = vmatpush1.msra.mxu0 0.0
        %1857 = vmatprep.subr.mxu0 0.0
        %1858 = vmatpush1.msra.mxu0 0.0
        %1859 = vmatprep.subr.mxu0 0.0
        %1860 = vmatpush1.msra.mxu0 0.0
        %1861 = vmatprep.subr.mxu0 0.0
        %1862 = vmatpush1.msra.mxu0 0.0
        %1863 = vmatprep.subr.mxu0 0.0
        %1864 = vmatpush1.msra.mxu0 0.0
        %1865 = vmatprep.subr.mxu0 0.0
        %1866 = vmatpush1.msra.mxu0 0.0
        %1867 = vmatprep.subr.mxu0 0.0
        %1868 = vmatpush1.msra.mxu0 0.0
        %1869 = vmatprep.subr.mxu0 0.0
        %1870 = vmatpush1.msra.mxu0 0.0
        %1871 = vmatprep.subr.mxu0 0.0
        %1872 = vmatpush1.msra.mxu0 0.0
        %1873 = vmatprep.subr.mxu0 0.0
        %1874 = vmatpush1.msra.mxu0 0.0
        %1875 = vmatprep.subr.mxu0 0.0
        %1876 = vmatpush1.msra.mxu0 0.0
        %1877 = vmatprep.subr.mxu0 0.0
        %1878 = vmatpush1.msra.mxu0 0.0
        %1879 = vmatprep.subr.mxu0 0.0
        %1880 = vmatpush1.msra.mxu0 0.0
        %1881 = vmatprep.subr.mxu0 0.0
        %1882 = vmatpush1.msra.mxu0 0.0
        %1883 = vmatprep.subr.mxu0 0.0
        %1884 = vmatpush1.msra.mxu0 0.0
        %1885 = vmatprep.subr.mxu0 0.0
        %1886 = vmatpush1.msra.mxu0 0.0
        %1887 = vmatprep.subr.mxu0 0.0
        %1888 = vmatpush1.msra.mxu0 0.0
        %1889 = vmatprep.subr.mxu0 0.0
        %1890 = vmatpush1.msra.mxu0 0.0
        %1891 = vmatprep.subr.mxu0 0.0
        %1892 = vmatpush1.msra.mxu0 0.0
        %1893 = vmatprep.subr.mxu0 0.0
        %1894 = vmatpush1.msra.mxu0 0.0
        %1895 = vmatprep.subr.mxu0 0.0
        %1896 = vmatpush1.msra.mxu0 0.0
        %1897 = vmatprep.subr.mxu0 0.0
        %1898 = vmatpush1.msra.mxu0 0.0
        %1899 = vmatprep.subr.mxu0 0.0
        %1900 = vmatpush1.msra.mxu0 0.0
        %1901 = vmatprep.subr.mxu0 0.0
        %1902 = vmatpush1.msra.mxu0 0.0
        %1903 = vmatprep.subr.mxu0 0.0
        %1904 = vmatpush1.msra.mxu0 0.0
        %1905 = vmatprep.subr.mxu0 0.0
        %1906 = vmatpush1.msra.mxu0 0.0
        %1907 = vmatprep.subr.mxu0 0.0
        %1908 = vmatpush1.msra.mxu0 0.0
        %1909 = vmatprep.subr.mxu0 0.0
        %1910 = vmatpush1.msra.mxu0 0.0
        %1911 = vmatprep.subr.mxu0 0.0
        %1912 = vmatpush1.msra.mxu0 0.0
        %1913 = vmatprep.subr.mxu0 0.0
        %1914 = vmatpush1.msra.mxu0 0.0
        %1915 = vmatprep.subr.mxu0 0.0
        %1916 = vmatpush1.msra.mxu0 0.0
        %1917 = vmatprep.mubr.f32.mxu0 0.0
        %1918 = vmatmul.mubr.f32.gmra.mrb[0].mxu0 %v1851
        %v1919 = vpop.f32.mrb[0].mxu0
        %v1920 = vadd.f32 0.0, %v1919
        %v1921 = vpop.f32.mrb[0].mxu0
        %v1922 = vadd.f32 0.0, %v1921
        %1923 = vdwg.mxu0
        %v1924 = vadd.f32 %v1839, %v1920
        %v1925 = vadd.f32 %v1840, %v1922
        %v1926 = vld [vmem:[%s4] sm:$0xff]
        %1928 = vset.pattern.permute.xlu0 0
        %1929 = vperm.xlu0 %1928, %v1926
        %v1930 = vpop.permute.xlu0 %1929
        %v1932 = vadd.f32 %v1924, %v1930
        %v1933 = vadd.f32 %v1925, %v1930
        %v1934 = vmax.f32 %v1932, 0.0
        %v1935 = vmax.f32 %v1933, 0.0
        %1936 = vst [vmem:[#allocation4] sm:$0xff] %v1934
        %vm1937 = vcmask 539648
        %1938 = vst.msk [vmem:[#allocation4 + $0x8] sm:$0xff] %vm1937, %v1935
        %v1939 = vld [vmem:[#allocation4] sm:$0xff]
        %v1940 = vld [vmem:[#allocation4 + $0x8] sm:$0xff]
        %v1941 = vld [vmem:[%s5] sm:$0xff]
        %v1942 = vld [vmem:[%s5 + $0x8] sm:$0xff]
        %s1943 = scalar_lea.vmem %s5, 16
        %v1944 = vld [vmem:[%s1943] sm:$0xff]
        %v1945 = vld [vmem:[%s1943 + $0x8] sm:$0xff]
        %1948 = vrot.lane.b32.xlu0 %v1939, 127
        %v1949 = vpop.permute.xlu0 %1948
        %1950 = vrot.lane.b32.xlu0 %v1940, 127
        %v1951 = vpop.permute.xlu0 %1950
        %v1952 = vsel %vm345, %v1949, %v1951
        %v1956 = vsel %vm1182, %v1944, 0
        %v1959 = vsel %vm1182, %v1945, 0
        %1961 = vmatprep.subr.mxu0 %v1951
        %1962 = vmatpush1.msra.mxu0 %v1952
        %1963 = vmatprep.subr.mxu0 0.0
        %1964 = vmatpush1.msra.mxu0 0.0
        %1965 = vmatprep.subr.mxu0 0.0
        %1966 = vmatpush1.msra.mxu0 0.0
        %1967 = vmatprep.subr.mxu0 0.0
        %1968 = vmatpush1.msra.mxu0 0.0
        %1969 = vmatprep.subr.mxu0 0.0
        %1970 = vmatpush1.msra.mxu0 0.0
        %1971 = vmatprep.subr.mxu0 0.0
        %1972 = vmatpush1.msra.mxu0 0.0
        %1973 = vmatprep.subr.mxu0 0.0
        %1974 = vmatpush1.msra.mxu0 0.0
        %1975 = vmatprep.subr.mxu0 0.0
        %1976 = vmatpush1.msra.mxu0 0.0
        %1977 = vmatprep.subr.mxu0 0.0
        %1978 = vmatpush1.msra.mxu0 0.0
        %1979 = vmatprep.subr.mxu0 0.0
        %1980 = vmatpush1.msra.mxu0 0.0
        %1981 = vmatprep.subr.mxu0 0.0
        %1982 = vmatpush1.msra.mxu0 0.0
        %1983 = vmatprep.subr.mxu0 0.0
        %1984 = vmatpush1.msra.mxu0 0.0
        %1985 = vmatprep.subr.mxu0 0.0
        %1986 = vmatpush1.msra.mxu0 0.0
        %1987 = vmatprep.subr.mxu0 0.0
        %1988 = vmatpush1.msra.mxu0 0.0
        %1989 = vmatprep.subr.mxu0 0.0
        %1990 = vmatpush1.msra.mxu0 0.0
        %1991 = vmatprep.subr.mxu0 0.0
        %1992 = vmatpush1.msra.mxu0 0.0
        %1993 = vmatprep.subr.mxu0 0.0
        %1994 = vmatpush1.msra.mxu0 0.0
        %1995 = vmatprep.subr.mxu0 0.0
        %1996 = vmatpush1.msra.mxu0 0.0
        %1997 = vmatprep.subr.mxu0 0.0
        %1998 = vmatpush1.msra.mxu0 0.0
        %1999 = vmatprep.subr.mxu0 0.0
        %2000 = vmatpush1.msra.mxu0 0.0
        %2001 = vmatprep.subr.mxu0 0.0
        %2002 = vmatpush1.msra.mxu0 0.0
        %2003 = vmatprep.subr.mxu0 0.0
        %2004 = vmatpush1.msra.mxu0 0.0
        %2005 = vmatprep.subr.mxu0 0.0
        %2006 = vmatpush1.msra.mxu0 0.0
        %2007 = vmatprep.subr.mxu0 0.0
        %2008 = vmatpush1.msra.mxu0 0.0
        %2009 = vmatprep.subr.mxu0 0.0
        %2010 = vmatpush1.msra.mxu0 0.0
        %2011 = vmatprep.subr.mxu0 0.0
        %2012 = vmatpush1.msra.mxu0 0.0
        %2013 = vmatprep.subr.mxu0 0.0
        %2014 = vmatpush1.msra.mxu0 0.0
        %2015 = vmatprep.subr.mxu0 0.0
        %2016 = vmatpush1.msra.mxu0 0.0
        %2017 = vmatprep.subr.mxu0 0.0
        %2018 = vmatpush1.msra.mxu0 0.0
        %2019 = vmatprep.subr.mxu0 0.0
        %2020 = vmatpush1.msra.mxu0 0.0
        %2021 = vmatprep.subr.mxu0 0.0
        %2022 = vmatpush1.msra.mxu0 0.0
        %2023 = vmatprep.subr.mxu0 0.0
        %2024 = vmatpush1.msra.mxu0 0.0
        %2025 = vmatprep.mubr.f32.mxu0 0.0
        %2026 = vmatmul.mubr.f32.gmra.mrb[0].mxu0 %v1956
        %v2027 = vpop.f32.mrb[0].mxu0
        %v2028 = vadd.f32 0.0, %v2027
        %v2029 = vpop.f32.mrb[0].mxu0
        %v2030 = vadd.f32 0.0, %v2029
        %2031 = vmatprep.mubr.f32.mxu0 0.0
        %2032 = vmatmul.mubr.f32.gmra.mrb[0].mxu0 %v1959
        %v2033 = vpop.f32.mrb[0].mxu0
        %v2034 = vadd.f32 0.0, %v2033
        %v2035 = vpop.f32.mrb[0].mxu0
        %v2036 = vadd.f32 0.0, %v2035
        %2037 = vdwg.mxu0
        %v2039 = vsel %vm1182, %v1941, 0
        %v2042 = vsel %vm1182, %v1942, 0
        %2044 = vmatprep.subr.mxu0 %v1940
        %2045 = vmatpush1.msra.mxu0 %v1939
        %2046 = vmatprep.subr.mxu0 0.0
        %2047 = vmatpush1.msra.mxu0 0.0
        %2048 = vmatprep.subr.mxu0 0.0
        %2049 = vmatpush1.msra.mxu0 0.0
        %2050 = vmatprep.subr.mxu0 0.0
        %2051 = vmatpush1.msra.mxu0 0.0
        %2052 = vmatprep.subr.mxu0 0.0
        %2053 = vmatpush1.msra.mxu0 0.0
        %2054 = vmatprep.subr.mxu0 0.0
        %2055 = vmatpush1.msra.mxu0 0.0
        %2056 = vmatprep.subr.mxu0 0.0
        %2057 = vmatpush1.msra.mxu0 0.0
        %2058 = vmatprep.subr.mxu0 0.0
        %2059 = vmatpush1.msra.mxu0 0.0
        %2060 = vmatprep.subr.mxu0 0.0
        %2061 = vmatpush1.msra.mxu0 0.0
        %2062 = vmatprep.subr.mxu0 0.0
        %2063 = vmatpush1.msra.mxu0 0.0
        %2064 = vmatprep.subr.mxu0 0.0
        %2065 = vmatpush1.msra.mxu0 0.0
        %2066 = vmatprep.subr.mxu0 0.0
        %2067 = vmatpush1.msra.mxu0 0.0
        %2068 = vmatprep.subr.mxu0 0.0
        %2069 = vmatpush1.msra.mxu0 0.0
        %2070 = vmatprep.subr.mxu0 0.0
        %2071 = vmatpush1.msra.mxu0 0.0
        %2072 = vmatprep.subr.mxu0 0.0
        %2073 = vmatpush1.msra.mxu0 0.0
        %2074 = vmatprep.subr.mxu0 0.0
        %2075 = vmatpush1.msra.mxu0 0.0
        %2076 = vmatprep.subr.mxu0 0.0
        %2077 = vmatpush1.msra.mxu0 0.0
        %2078 = vmatprep.subr.mxu0 0.0
        %2079 = vmatpush1.msra.mxu0 0.0
        %2080 = vmatprep.subr.mxu0 0.0
        %2081 = vmatpush1.msra.mxu0 0.0
        %2082 = vmatprep.subr.mxu0 0.0
        %2083 = vmatpush1.msra.mxu0 0.0
        %2084 = vmatprep.subr.mxu0 0.0
        %2085 = vmatpush1.msra.mxu0 0.0
        %2086 = vmatprep.subr.mxu0 0.0
        %2087 = vmatpush1.msra.mxu0 0.0
        %2088 = vmatprep.subr.mxu0 0.0
        %2089 = vmatpush1.msra.mxu0 0.0
        %2090 = vmatprep.subr.mxu0 0.0
        %2091 = vmatpush1.msra.mxu0 0.0
        %2092 = vmatprep.subr.mxu0 0.0
        %2093 = vmatpush1.msra.mxu0 0.0
        %2094 = vmatprep.subr.mxu0 0.0
        %2095 = vmatpush1.msra.mxu0 0.0
        %2096 = vmatprep.subr.mxu0 0.0
        %2097 = vmatpush1.msra.mxu0 0.0
        %2098 = vmatprep.subr.mxu0 0.0
        %2099 = vmatpush1.msra.mxu0 0.0
        %2100 = vmatprep.subr.mxu0 0.0
        %2101 = vmatpush1.msra.mxu0 0.0
        %2102 = vmatprep.subr.mxu0 0.0
        %2103 = vmatpush1.msra.mxu0 0.0
        %2104 = vmatprep.subr.mxu0 0.0
        %2105 = vmatpush1.msra.mxu0 0.0
        %2106 = vmatprep.subr.mxu0 0.0
        %2107 = vmatpush1.msra.mxu0 0.0
        %2108 = vmatprep.mubr.f32.mxu0 0.0
        %2109 = vmatmul.mubr.f32.gmra.mrb[0].mxu0 %v2039
        %v2110 = vpop.f32.mrb[0].mxu0
        %v2111 = vadd.f32 %v2028, %v2110
        %v2112 = vpop.f32.mrb[0].mxu0
        %v2113 = vadd.f32 %v2030, %v2112
        %2114 = vmatprep.mubr.f32.mxu0 0.0
        %2115 = vmatmul.mubr.f32.gmra.mrb[0].mxu0 %v2042
        %v2116 = vpop.f32.mrb[0].mxu0
        %v2117 = vadd.f32 %v2034, %v2116
        %v2118 = vpop.f32.mrb[0].mxu0
        %v2119 = vadd.f32 %v2036, %v2118
        %2120 = vdwg.mxu0
        %s2121 = scalar_lea.vmem %s5, 32
        %v2122 = vld [vmem:[%s2121] sm:$0xff]
        %v2123 = vld [vmem:[%s2121 + $0x8] sm:$0xff]
        %2124 = vrot.lane.b32.xlu0 %v1939, 126
        %v2125 = vpop.permute.xlu0 %2124
        %2126 = vrot.lane.b32.xlu0 %v1940, 126
        %v2127 = vpop.permute.xlu0 %2126
        %v2128 = vsel %vm514, %v2125, %v2127
        %v2132 = vsel %vm1182, %v2122, 0
        %v2135 = vsel %vm1182, %v2123, 0
        %2137 = vmatprep.subr.mxu0 %v2127
        %2138 = vmatpush1.msra.mxu0 %v2128
        %2139 = vmatprep.subr.mxu0 0.0
        %2140 = vmatpush1.msra.mxu0 0.0
        %2141 = vmatprep.subr.mxu0 0.0
        %2142 = vmatpush1.msra.mxu0 0.0
        %2143 = vmatprep.subr.mxu0 0.0
        %2144 = vmatpush1.msra.mxu0 0.0
        %2145 = vmatprep.subr.mxu0 0.0
        %2146 = vmatpush1.msra.mxu0 0.0
        %2147 = vmatprep.subr.mxu0 0.0
        %2148 = vmatpush1.msra.mxu0 0.0
        %2149 = vmatprep.subr.mxu0 0.0
        %2150 = vmatpush1.msra.mxu0 0.0
        %2151 = vmatprep.subr.mxu0 0.0
        %2152 = vmatpush1.msra.mxu0 0.0
        %2153 = vmatprep.subr.mxu0 0.0
        %2154 = vmatpush1.msra.mxu0 0.0
        %2155 = vmatprep.subr.mxu0 0.0
        %2156 = vmatpush1.msra.mxu0 0.0
        %2157 = vmatprep.subr.mxu0 0.0
        %2158 = vmatpush1.msra.mxu0 0.0
        %2159 = vmatprep.subr.mxu0 0.0
        %2160 = vmatpush1.msra.mxu0 0.0
        %2161 = vmatprep.subr.mxu0 0.0
        %2162 = vmatpush1.msra.mxu0 0.0
        %2163 = vmatprep.subr.mxu0 0.0
        %2164 = vmatpush1.msra.mxu0 0.0
        %2165 = vmatprep.subr.mxu0 0.0
        %2166 = vmatpush1.msra.mxu0 0.0
        %2167 = vmatprep.subr.mxu0 0.0
        %2168 = vmatpush1.msra.mxu0 0.0
        %2169 = vmatprep.subr.mxu0 0.0
        %2170 = vmatpush1.msra.mxu0 0.0
        %2171 = vmatprep.subr.mxu0 0.0
        %2172 = vmatpush1.msra.mxu0 0.0
        %2173 = vmatprep.subr.mxu0 0.0
        %2174 = vmatpush1.msra.mxu0 0.0
        %2175 = vmatprep.subr.mxu0 0.0
        %2176 = vmatpush1.msra.mxu0 0.0
        %2177 = vmatprep.subr.mxu0 0.0
        %2178 = vmatpush1.msra.mxu0 0.0
        %2179 = vmatprep.subr.mxu0 0.0
        %2180 = vmatpush1.msra.mxu0 0.0
        %2181 = vmatprep.subr.mxu0 0.0
        %2182 = vmatpush1.msra.mxu0 0.0
        %2183 = vmatprep.subr.mxu0 0.0
        %2184 = vmatpush1.msra.mxu0 0.0
        %2185 = vmatprep.subr.mxu0 0.0
        %2186 = vmatpush1.msra.mxu0 0.0
        %2187 = vmatprep.subr.mxu0 0.0
        %2188 = vmatpush1.msra.mxu0 0.0
        %2189 = vmatprep.subr.mxu0 0.0
        %2190 = vmatpush1.msra.mxu0 0.0
        %2191 = vmatprep.subr.mxu0 0.0
        %2192 = vmatpush1.msra.mxu0 0.0
        %2193 = vmatprep.subr.mxu0 0.0
        %2194 = vmatpush1.msra.mxu0 0.0
        %2195 = vmatprep.subr.mxu0 0.0
        %2196 = vmatpush1.msra.mxu0 0.0
        %2197 = vmatprep.subr.mxu0 0.0
        %2198 = vmatpush1.msra.mxu0 0.0
        %2199 = vmatprep.subr.mxu0 0.0
        %2200 = vmatpush1.msra.mxu0 0.0
        %2201 = vmatprep.mubr.f32.mxu0 0.0
        %2202 = vmatmul.mubr.f32.gmra.mrb[0].mxu0 %v2132
        %v2203 = vpop.f32.mrb[0].mxu0
        %v2204 = vadd.f32 0.0, %v2203
        %v2205 = vpop.f32.mrb[0].mxu0
        %v2206 = vadd.f32 0.0, %v2205
        %2207 = vmatprep.mubr.f32.mxu0 0.0
        %2208 = vmatmul.mubr.f32.gmra.mrb[0].mxu0 %v2135
        %v2209 = vpop.f32.mrb[0].mxu0
        %v2210 = vadd.f32 0.0, %v2209
        %v2211 = vpop.f32.mrb[0].mxu0
        %v2212 = vadd.f32 0.0, %v2211
        %2213 = vdwg.mxu0
        %v2214 = vadd.f32 %v2111, %v2204
        %v2215 = vadd.f32 %v2113, %v2206
        %v2216 = vadd.f32 %v2117, %v2210
        %v2217 = vadd.f32 %v2119, %v2212
        %s2218 = scalar_lea.vmem %s5, 48
        %v2219 = vld [vmem:[%s2218] sm:$0xff]
        %v2220 = vld [vmem:[%s2218 + $0x8] sm:$0xff]
        %2221 = vrot.lane.b32.xlu0 %v1939, 112
        %v2222 = vpop.permute.xlu0 %2221
        %2223 = vrot.lane.b32.xlu0 %v1940, 112
        %v2224 = vpop.permute.xlu0 %2223
        %v2225 = vsel %vm605, %v2222, %v2224
        %v2229 = vsel %vm1182, %v2219, 0
        %v2232 = vsel %vm1182, %v2220, 0
        %2234 = vmatprep.subr.mxu0 %v2224
        %2235 = vmatpush1.msra.mxu0 %v2225
        %2236 = vmatprep.subr.mxu0 0.0
        %2237 = vmatpush1.msra.mxu0 0.0
        %2238 = vmatprep.subr.mxu0 0.0
        %2239 = vmatpush1.msra.mxu0 0.0
        %2240 = vmatprep.subr.mxu0 0.0
        %2241 = vmatpush1.msra.mxu0 0.0
        %2242 = vmatprep.subr.mxu0 0.0
        %2243 = vmatpush1.msra.mxu0 0.0
        %2244 = vmatprep.subr.mxu0 0.0
        %2245 = vmatpush1.msra.mxu0 0.0
        %2246 = vmatprep.subr.mxu0 0.0
        %2247 = vmatpush1.msra.mxu0 0.0
        %2248 = vmatprep.subr.mxu0 0.0
        %2249 = vmatpush1.msra.mxu0 0.0
        %2250 = vmatprep.subr.mxu0 0.0
        %2251 = vmatpush1.msra.mxu0 0.0
        %2252 = vmatprep.subr.mxu0 0.0
        %2253 = vmatpush1.msra.mxu0 0.0
        %2254 = vmatprep.subr.mxu0 0.0
        %2255 = vmatpush1.msra.mxu0 0.0
        %2256 = vmatprep.subr.mxu0 0.0
        %2257 = vmatpush1.msra.mxu0 0.0
        %2258 = vmatprep.subr.mxu0 0.0
        %2259 = vmatpush1.msra.mxu0 0.0
        %2260 = vmatprep.subr.mxu0 0.0
        %2261 = vmatpush1.msra.mxu0 0.0
        %2262 = vmatprep.subr.mxu0 0.0
        %2263 = vmatpush1.msra.mxu0 0.0
        %2264 = vmatprep.subr.mxu0 0.0
        %2265 = vmatpush1.msra.mxu0 0.0
        %2266 = vmatprep.subr.mxu0 0.0
        %2267 = vmatpush1.msra.mxu0 0.0
        %2268 = vmatprep.subr.mxu0 0.0
        %2269 = vmatpush1.msra.mxu0 0.0
        %2270 = vmatprep.subr.mxu0 0.0
        %2271 = vmatpush1.msra.mxu0 0.0
        %2272 = vmatprep.subr.mxu0 0.0
        %2273 = vmatpush1.msra.mxu0 0.0
        %2274 = vmatprep.subr.mxu0 0.0
        %2275 = vmatpush1.msra.mxu0 0.0
        %2276 = vmatprep.subr.mxu0 0.0
        %2277 = vmatpush1.msra.mxu0 0.0
        %2278 = vmatprep.subr.mxu0 0.0
        %2279 = vmatpush1.msra.mxu0 0.0
        %2280 = vmatprep.subr.mxu0 0.0
        %2281 = vmatpush1.msra.mxu0 0.0
        %2282 = vmatprep.subr.mxu0 0.0
        %2283 = vmatpush1.msra.mxu0 0.0
        %2284 = vmatprep.subr.mxu0 0.0
        %2285 = vmatpush1.msra.mxu0 0.0
        %2286 = vmatprep.subr.mxu0 0.0
        %2287 = vmatpush1.msra.mxu0 0.0
        %2288 = vmatprep.subr.mxu0 0.0
        %2289 = vmatpush1.msra.mxu0 0.0
        %2290 = vmatprep.subr.mxu0 0.0
        %2291 = vmatpush1.msra.mxu0 0.0
        %2292 = vmatprep.subr.mxu0 0.0
        %2293 = vmatpush1.msra.mxu0 0.0
        %2294 = vmatprep.subr.mxu0 0.0
        %2295 = vmatpush1.msra.mxu0 0.0
        %2296 = vmatprep.subr.mxu0 0.0
        %2297 = vmatpush1.msra.mxu0 0.0
        %2298 = vmatprep.mubr.f32.mxu0 0.0
        %2299 = vmatmul.mubr.f32.gmra.mrb[0].mxu0 %v2229
        %v2300 = vpop.f32.mrb[0].mxu0
        %v2301 = vadd.f32 0.0, %v2300
        %v2302 = vpop.f32.mrb[0].mxu0
        %v2303 = vadd.f32 0.0, %v2302
        %2304 = vmatprep.mubr.f32.mxu0 0.0
        %2305 = vmatmul.mubr.f32.gmra.mrb[0].mxu0 %v2232
        %v2306 = vpop.f32.mrb[0].mxu0
        %v2307 = vadd.f32 0.0, %v2306
        %v2308 = vpop.f32.mrb[0].mxu0
        %v2309 = vadd.f32 0.0, %v2308
        %2310 = vdwg.mxu0
        %v2311 = vadd.f32 %v2214, %v2301
        %v2312 = vadd.f32 %v2215, %v2303
        %v2313 = vadd.f32 %v2216, %v2307
        %v2314 = vadd.f32 %v2217, %v2309
        %s2315 = scalar_lea.vmem %s5, 64
        %v2316 = vld [vmem:[%s2315] sm:$0xff]
        %v2317 = vld [vmem:[%s2315 + $0x8] sm:$0xff]
        %2318 = vrot.lane.b32.xlu0 %v1939, 111
        %v2319 = vpop.permute.xlu0 %2318
        %2320 = vrot.lane.b32.xlu0 %v1940, 111
        %v2321 = vpop.permute.xlu0 %2320
        %v2322 = vsel %vm696, %v2319, %v2321
        %v2326 = vsel %vm1182, %v2316, 0
        %v2329 = vsel %vm1182, %v2317, 0
        %2331 = vmatprep.subr.mxu0 %v2321
        %2332 = vmatpush1.msra.mxu0 %v2322
        %2333 = vmatprep.subr.mxu0 0.0
        %2334 = vmatpush1.msra.mxu0 0.0
        %2335 = vmatprep.subr.mxu0 0.0
        %2336 = vmatpush1.msra.mxu0 0.0
        %2337 = vmatprep.subr.mxu0 0.0
        %2338 = vmatpush1.msra.mxu0 0.0
        %2339 = vmatprep.subr.mxu0 0.0
        %2340 = vmatpush1.msra.mxu0 0.0
        %2341 = vmatprep.subr.mxu0 0.0
        %2342 = vmatpush1.msra.mxu0 0.0
        %2343 = vmatprep.subr.mxu0 0.0
        %2344 = vmatpush1.msra.mxu0 0.0
        %2345 = vmatprep.subr.mxu0 0.0
        %2346 = vmatpush1.msra.mxu0 0.0
        %2347 = vmatprep.subr.mxu0 0.0
        %2348 = vmatpush1.msra.mxu0 0.0
        %2349 = vmatprep.subr.mxu0 0.0
        %2350 = vmatpush1.msra.mxu0 0.0
        %2351 = vmatprep.subr.mxu0 0.0
        %2352 = vmatpush1.msra.mxu0 0.0
        %2353 = vmatprep.subr.mxu0 0.0
        %2354 = vmatpush1.msra.mxu0 0.0
        %2355 = vmatprep.subr.mxu0 0.0
        %2356 = vmatpush1.msra.mxu0 0.0
        %2357 = vmatprep.subr.mxu0 0.0
        %2358 = vmatpush1.msra.mxu0 0.0
        %2359 = vmatprep.subr.mxu0 0.0
        %2360 = vmatpush1.msra.mxu0 0.0
        %2361 = vmatprep.subr.mxu0 0.0
        %2362 = vmatpush1.msra.mxu0 0.0
        %2363 = vmatprep.subr.mxu0 0.0
        %2364 = vmatpush1.msra.mxu0 0.0
        %2365 = vmatprep.subr.mxu0 0.0
        %2366 = vmatpush1.msra.mxu0 0.0
        %2367 = vmatprep.subr.mxu0 0.0
        %2368 = vmatpush1.msra.mxu0 0.0
        %2369 = vmatprep.subr.mxu0 0.0
        %2370 = vmatpush1.msra.mxu0 0.0
        %2371 = vmatprep.subr.mxu0 0.0
        %2372 = vmatpush1.msra.mxu0 0.0
        %2373 = vmatprep.subr.mxu0 0.0
        %2374 = vmatpush1.msra.mxu0 0.0
        %2375 = vmatprep.subr.mxu0 0.0
        %2376 = vmatpush1.msra.mxu0 0.0
        %2377 = vmatprep.subr.mxu0 0.0
        %2378 = vmatpush1.msra.mxu0 0.0
        %2379 = vmatprep.subr.mxu0 0.0
        %2380 = vmatpush1.msra.mxu0 0.0
        %2381 = vmatprep.subr.mxu0 0.0
        %2382 = vmatpush1.msra.mxu0 0.0
        %2383 = vmatprep.subr.mxu0 0.0
        %2384 = vmatpush1.msra.mxu0 0.0
        %2385 = vmatprep.subr.mxu0 0.0
        %2386 = vmatpush1.msra.mxu0 0.0
        %2387 = vmatprep.subr.mxu0 0.0
        %2388 = vmatpush1.msra.mxu0 0.0
        %2389 = vmatprep.subr.mxu0 0.0
        %2390 = vmatpush1.msra.mxu0 0.0
        %2391 = vmatprep.subr.mxu0 0.0
        %2392 = vmatpush1.msra.mxu0 0.0
        %2393 = vmatprep.subr.mxu0 0.0
        %2394 = vmatpush1.msra.mxu0 0.0
        %2395 = vmatprep.mubr.f32.mxu0 0.0
        %2396 = vmatmul.mubr.f32.gmra.mrb[0].mxu0 %v2326
        %v2397 = vpop.f32.mrb[0].mxu0
        %v2398 = vadd.f32 0.0, %v2397
        %v2399 = vpop.f32.mrb[0].mxu0
        %v2400 = vadd.f32 0.0, %v2399
        %2401 = vmatprep.mubr.f32.mxu0 0.0
        %2402 = vmatmul.mubr.f32.gmra.mrb[0].mxu0 %v2329
        %v2403 = vpop.f32.mrb[0].mxu0
        %v2404 = vadd.f32 0.0, %v2403
        %v2405 = vpop.f32.mrb[0].mxu0
        %v2406 = vadd.f32 0.0, %v2405
        %2407 = vdwg.mxu0
        %v2408 = vadd.f32 %v2311, %v2398
        %v2409 = vadd.f32 %v2312, %v2400
        %v2410 = vadd.f32 %v2313, %v2404
        %v2411 = vadd.f32 %v2314, %v2406
        %s2412 = scalar_lea.vmem %s5, 80
        %v2413 = vld [vmem:[%s2412] sm:$0xff]
        %v2414 = vld [vmem:[%s2412 + $0x8] sm:$0xff]
        %2415 = vrot.lane.b32.xlu0 %v1939, 110
        %v2416 = vpop.permute.xlu0 %2415
        %2417 = vrot.lane.b32.xlu0 %v1940, 110
        %v2418 = vpop.permute.xlu0 %2417
        %v2419 = vsel %vm787, %v2416, %v2418
        %v2423 = vsel %vm1182, %v2413, 0
        %v2426 = vsel %vm1182, %v2414, 0
        %2428 = vmatprep.subr.mxu0 %v2418
        %2429 = vmatpush1.msra.mxu0 %v2419
        %2430 = vmatprep.subr.mxu0 0.0
        %2431 = vmatpush1.msra.mxu0 0.0
        %2432 = vmatprep.subr.mxu0 0.0
        %2433 = vmatpush1.msra.mxu0 0.0
        %2434 = vmatprep.subr.mxu0 0.0
        %2435 = vmatpush1.msra.mxu0 0.0
        %2436 = vmatprep.subr.mxu0 0.0
        %2437 = vmatpush1.msra.mxu0 0.0
        %2438 = vmatprep.subr.mxu0 0.0
        %2439 = vmatpush1.msra.mxu0 0.0
        %2440 = vmatprep.subr.mxu0 0.0
        %2441 = vmatpush1.msra.mxu0 0.0
        %2442 = vmatprep.subr.mxu0 0.0
        %2443 = vmatpush1.msra.mxu0 0.0
        %2444 = vmatprep.subr.mxu0 0.0
        %2445 = vmatpush1.msra.mxu0 0.0
        %2446 = vmatprep.subr.mxu0 0.0
        %2447 = vmatpush1.msra.mxu0 0.0
        %2448 = vmatprep.subr.mxu0 0.0
        %2449 = vmatpush1.msra.mxu0 0.0
        %2450 = vmatprep.subr.mxu0 0.0
        %2451 = vmatpush1.msra.mxu0 0.0
        %2452 = vmatprep.subr.mxu0 0.0
        %2453 = vmatpush1.msra.mxu0 0.0
        %2454 = vmatprep.subr.mxu0 0.0
        %2455 = vmatpush1.msra.mxu0 0.0
        %2456 = vmatprep.subr.mxu0 0.0
        %2457 = vmatpush1.msra.mxu0 0.0
        %2458 = vmatprep.subr.mxu0 0.0
        %2459 = vmatpush1.msra.mxu0 0.0
        %2460 = vmatprep.subr.mxu0 0.0
        %2461 = vmatpush1.msra.mxu0 0.0
        %2462 = vmatprep.subr.mxu0 0.0
        %2463 = vmatpush1.msra.mxu0 0.0
        %2464 = vmatprep.subr.mxu0 0.0
        %2465 = vmatpush1.msra.mxu0 0.0
        %2466 = vmatprep.subr.mxu0 0.0
        %2467 = vmatpush1.msra.mxu0 0.0
        %2468 = vmatprep.subr.mxu0 0.0
        %2469 = vmatpush1.msra.mxu0 0.0
        %2470 = vmatprep.subr.mxu0 0.0
        %2471 = vmatpush1.msra.mxu0 0.0
        %2472 = vmatprep.subr.mxu0 0.0
        %2473 = vmatpush1.msra.mxu0 0.0
        %2474 = vmatprep.subr.mxu0 0.0
        %2475 = vmatpush1.msra.mxu0 0.0
        %2476 = vmatprep.subr.mxu0 0.0
        %2477 = vmatpush1.msra.mxu0 0.0
        %2478 = vmatprep.subr.mxu0 0.0
        %2479 = vmatpush1.msra.mxu0 0.0
        %2480 = vmatprep.subr.mxu0 0.0
        %2481 = vmatpush1.msra.mxu0 0.0
        %2482 = vmatprep.subr.mxu0 0.0
        %2483 = vmatpush1.msra.mxu0 0.0
        %2484 = vmatprep.subr.mxu0 0.0
        %2485 = vmatpush1.msra.mxu0 0.0
        %2486 = vmatprep.subr.mxu0 0.0
        %2487 = vmatpush1.msra.mxu0 0.0
        %2488 = vmatprep.subr.mxu0 0.0
        %2489 = vmatpush1.msra.mxu0 0.0
        %2490 = vmatprep.subr.mxu0 0.0
        %2491 = vmatpush1.msra.mxu0 0.0
        %2492 = vmatprep.mubr.f32.mxu0 0.0
        %2493 = vmatmul.mubr.f32.gmra.mrb[0].mxu0 %v2423
        %v2494 = vpop.f32.mrb[0].mxu0
        %v2495 = vadd.f32 0.0, %v2494
        %v2496 = vpop.f32.mrb[0].mxu0
        %v2497 = vadd.f32 0.0, %v2496
        %2498 = vmatprep.mubr.f32.mxu0 0.0
        %2499 = vmatmul.mubr.f32.gmra.mrb[0].mxu0 %v2426
        %v2500 = vpop.f32.mrb[0].mxu0
        %v2501 = vadd.f32 0.0, %v2500
        %v2502 = vpop.f32.mrb[0].mxu0
        %v2503 = vadd.f32 0.0, %v2502
        %2504 = vdwg.mxu0
        %v2505 = vadd.f32 %v2408, %v2495
        %v2506 = vadd.f32 %v2409, %v2497
        %v2507 = vadd.f32 %v2410, %v2501
        %v2508 = vadd.f32 %v2411, %v2503
        %s2509 = scalar_lea.vmem %s5, 96
        %v2510 = vld [vmem:[%s2509] sm:$0xff]
        %v2511 = vld [vmem:[%s2509 + $0x8] sm:$0xff]
        %2512 = vrot.lane.b32.xlu0 %v1939, 96
        %v2513 = vpop.permute.xlu0 %2512
        %2514 = vrot.lane.b32.xlu0 %v1940, 96
        %v2515 = vpop.permute.xlu0 %2514
        %v2516 = vsel %vm882, %v2513, %v2515
        %v2520 = vsel %vm1182, %v2510, 0
        %v2523 = vsel %vm1182, %v2511, 0
        %2525 = vmatprep.subr.mxu0 %v2515
        %2526 = vmatpush1.msra.mxu0 %v2516
        %2527 = vmatprep.subr.mxu0 0.0
        %2528 = vmatpush1.msra.mxu0 0.0
        %2529 = vmatprep.subr.mxu0 0.0
        %2530 = vmatpush1.msra.mxu0 0.0
        %2531 = vmatprep.subr.mxu0 0.0
        %2532 = vmatpush1.msra.mxu0 0.0
        %2533 = vmatprep.subr.mxu0 0.0
        %2534 = vmatpush1.msra.mxu0 0.0
        %2535 = vmatprep.subr.mxu0 0.0
        %2536 = vmatpush1.msra.mxu0 0.0
        %2537 = vmatprep.subr.mxu0 0.0
        %2538 = vmatpush1.msra.mxu0 0.0
        %2539 = vmatprep.subr.mxu0 0.0
        %2540 = vmatpush1.msra.mxu0 0.0
        %2541 = vmatprep.subr.mxu0 0.0
        %2542 = vmatpush1.msra.mxu0 0.0
        %2543 = vmatprep.subr.mxu0 0.0
        %2544 = vmatpush1.msra.mxu0 0.0
        %2545 = vmatprep.subr.mxu0 0.0
        %2546 = vmatpush1.msra.mxu0 0.0
        %2547 = vmatprep.subr.mxu0 0.0
        %2548 = vmatpush1.msra.mxu0 0.0
        %2549 = vmatprep.subr.mxu0 0.0
        %2550 = vmatpush1.msra.mxu0 0.0
        %2551 = vmatprep.subr.mxu0 0.0
        %2552 = vmatpush1.msra.mxu0 0.0
        %2553 = vmatprep.subr.mxu0 0.0
        %2554 = vmatpush1.msra.mxu0 0.0
        %2555 = vmatprep.subr.mxu0 0.0
        %2556 = vmatpush1.msra.mxu0 0.0
        %2557 = vmatprep.subr.mxu0 0.0
        %2558 = vmatpush1.msra.mxu0 0.0
        %2559 = vmatprep.subr.mxu0 0.0
        %2560 = vmatpush1.msra.mxu0 0.0
        %2561 = vmatprep.subr.mxu0 0.0
        %2562 = vmatpush1.msra.mxu0 0.0
        %2563 = vmatprep.subr.mxu0 0.0
        %2564 = vmatpush1.msra.mxu0 0.0
        %2565 = vmatprep.subr.mxu0 0.0
        %2566 = vmatpush1.msra.mxu0 0.0
        %2567 = vmatprep.subr.mxu0 0.0
        %2568 = vmatpush1.msra.mxu0 0.0
        %2569 = vmatprep.subr.mxu0 0.0
        %2570 = vmatpush1.msra.mxu0 0.0
        %2571 = vmatprep.subr.mxu0 0.0
        %2572 = vmatpush1.msra.mxu0 0.0
        %2573 = vmatprep.subr.mxu0 0.0
        %2574 = vmatpush1.msra.mxu0 0.0
        %2575 = vmatprep.subr.mxu0 0.0
        %2576 = vmatpush1.msra.mxu0 0.0
        %2577 = vmatprep.subr.mxu0 0.0
        %2578 = vmatpush1.msra.mxu0 0.0
        %2579 = vmatprep.subr.mxu0 0.0
        %2580 = vmatpush1.msra.mxu0 0.0
        %2581 = vmatprep.subr.mxu0 0.0
        %2582 = vmatpush1.msra.mxu0 0.0
        %2583 = vmatprep.subr.mxu0 0.0
        %2584 = vmatpush1.msra.mxu0 0.0
        %2585 = vmatprep.subr.mxu0 0.0
        %2586 = vmatpush1.msra.mxu0 0.0
        %2587 = vmatprep.subr.mxu0 0.0
        %2588 = vmatpush1.msra.mxu0 0.0
        %2589 = vmatprep.mubr.f32.mxu0 0.0
        %2590 = vmatmul.mubr.f32.gmra.mrb[0].mxu0 %v2520
        %v2591 = vpop.f32.mrb[0].mxu0
        %v2592 = vadd.f32 0.0, %v2591
        %v2593 = vpop.f32.mrb[0].mxu0
        %v2594 = vadd.f32 0.0, %v2593
        %2595 = vmatprep.mubr.f32.mxu0 0.0
        %2596 = vmatmul.mubr.f32.gmra.mrb[0].mxu0 %v2523
        %v2597 = vpop.f32.mrb[0].mxu0
        %v2598 = vadd.f32 0.0, %v2597
        %v2599 = vpop.f32.mrb[0].mxu0
        %v2600 = vadd.f32 0.0, %v2599
        %2601 = vdwg.mxu0
        %v2602 = vadd.f32 %v2505, %v2592
        %v2603 = vadd.f32 %v2506, %v2594
        %v2604 = vadd.f32 %v2507, %v2598
        %v2605 = vadd.f32 %v2508, %v2600
        %s2606 = scalar_lea.vmem %s5, 112
        %v2607 = vld [vmem:[%s2606] sm:$0xff]
        %v2608 = vld [vmem:[%s2606 + $0x8] sm:$0xff]
        %2609 = vrot.lane.b32.xlu0 %v1939, 95
        %v2610 = vpop.permute.xlu0 %2609
        %2611 = vrot.lane.b32.xlu0 %v1940, 95
        %v2612 = vpop.permute.xlu0 %2611
        %v2613 = vsel %vm978, %v2610, %v2612
        %v2617 = vsel %vm1182, %v2607, 0
        %v2620 = vsel %vm1182, %v2608, 0
        %2622 = vmatprep.subr.mxu0 %v2612
        %2623 = vmatpush1.msra.mxu0 %v2613
        %2624 = vmatprep.subr.mxu0 0.0
        %2625 = vmatpush1.msra.mxu0 0.0
        %2626 = vmatprep.subr.mxu0 0.0
        %2627 = vmatpush1.msra.mxu0 0.0
        %2628 = vmatprep.subr.mxu0 0.0
        %2629 = vmatpush1.msra.mxu0 0.0
        %2630 = vmatprep.subr.mxu0 0.0
        %2631 = vmatpush1.msra.mxu0 0.0
        %2632 = vmatprep.subr.mxu0 0.0
        %2633 = vmatpush1.msra.mxu0 0.0
        %2634 = vmatprep.subr.mxu0 0.0
        %2635 = vmatpush1.msra.mxu0 0.0
        %2636 = vmatprep.subr.mxu0 0.0
        %2637 = vmatpush1.msra.mxu0 0.0
        %2638 = vmatprep.subr.mxu0 0.0
        %2639 = vmatpush1.msra.mxu0 0.0
        %2640 = vmatprep.subr.mxu0 0.0
        %2641 = vmatpush1.msra.mxu0 0.0
        %2642 = vmatprep.subr.mxu0 0.0
        %2643 = vmatpush1.msra.mxu0 0.0
        %2644 = vmatprep.subr.mxu0 0.0
        %2645 = vmatpush1.msra.mxu0 0.0
        %2646 = vmatprep.subr.mxu0 0.0
        %2647 = vmatpush1.msra.mxu0 0.0
        %2648 = vmatprep.subr.mxu0 0.0
        %2649 = vmatpush1.msra.mxu0 0.0
        %2650 = vmatprep.subr.mxu0 0.0
        %2651 = vmatpush1.msra.mxu0 0.0
        %2652 = vmatprep.subr.mxu0 0.0
        %2653 = vmatpush1.msra.mxu0 0.0
        %2654 = vmatprep.subr.mxu0 0.0
        %2655 = vmatpush1.msra.mxu0 0.0
        %2656 = vmatprep.subr.mxu0 0.0
        %2657 = vmatpush1.msra.mxu0 0.0
        %2658 = vmatprep.subr.mxu0 0.0
        %2659 = vmatpush1.msra.mxu0 0.0
        %2660 = vmatprep.subr.mxu0 0.0
        %2661 = vmatpush1.msra.mxu0 0.0
        %2662 = vmatprep.subr.mxu0 0.0
        %2663 = vmatpush1.msra.mxu0 0.0
        %2664 = vmatprep.subr.mxu0 0.0
        %2665 = vmatpush1.msra.mxu0 0.0
        %2666 = vmatprep.subr.mxu0 0.0
        %2667 = vmatpush1.msra.mxu0 0.0
        %2668 = vmatprep.subr.mxu0 0.0
        %2669 = vmatpush1.msra.mxu0 0.0
        %2670 = vmatprep.subr.mxu0 0.0
        %2671 = vmatpush1.msra.mxu0 0.0
        %2672 = vmatprep.subr.mxu0 0.0
        %2673 = vmatpush1.msra.mxu0 0.0
        %2674 = vmatprep.subr.mxu0 0.0
        %2675 = vmatpush1.msra.mxu0 0.0
        %2676 = vmatprep.subr.mxu0 0.0
        %2677 = vmatpush1.msra.mxu0 0.0
        %2678 = vmatprep.subr.mxu0 0.0
        %2679 = vmatpush1.msra.mxu0 0.0
        %2680 = vmatprep.subr.mxu0 0.0
        %2681 = vmatpush1.msra.mxu0 0.0
        %2682 = vmatprep.subr.mxu0 0.0
        %2683 = vmatpush1.msra.mxu0 0.0
        %2684 = vmatprep.subr.mxu0 0.0
        %2685 = vmatpush1.msra.mxu0 0.0
        %2686 = vmatprep.mubr.f32.mxu0 0.0
        %2687 = vmatmul.mubr.f32.gmra.mrb[0].mxu0 %v2617
        %v2688 = vpop.f32.mrb[0].mxu0
        %v2689 = vadd.f32 0.0, %v2688
        %v2690 = vpop.f32.mrb[0].mxu0
        %v2691 = vadd.f32 0.0, %v2690
        %2692 = vmatprep.mubr.f32.mxu0 0.0
        %2693 = vmatmul.mubr.f32.gmra.mrb[0].mxu0 %v2620
        %v2694 = vpop.f32.mrb[0].mxu0
        %v2695 = vadd.f32 0.0, %v2694
        %v2696 = vpop.f32.mrb[0].mxu0
        %v2697 = vadd.f32 0.0, %v2696
        %2698 = vdwg.mxu0
        %v2699 = vadd.f32 %v2602, %v2689
        %v2700 = vadd.f32 %v2603, %v2691
        %v2701 = vadd.f32 %v2604, %v2695
        %v2702 = vadd.f32 %v2605, %v2697
        %s2703 = scalar_lea.vmem %s5, 128
        %v2704 = vld [vmem:[%s2703] sm:$0xff]
        %v2705 = vld [vmem:[%s2703 + $0x8] sm:$0xff]
        %2706 = vrot.lane.b32.xlu0 %v1939, 94
        %v2707 = vpop.permute.xlu0 %2706
        %2708 = vrot.lane.b32.xlu0 %v1940, 94
        %v2709 = vpop.permute.xlu0 %2708
        %v2710 = vsel %vm1074, %v2707, %v2709
        %v2714 = vsel %vm1182, %v2704, 0
        %v2717 = vsel %vm1182, %v2705, 0
        %2719 = vmatprep.subr.mxu0 %v2709
        %2720 = vmatpush1.msra.mxu0 %v2710
        %2721 = vmatprep.subr.mxu0 0.0
        %2722 = vmatpush1.msra.mxu0 0.0
        %2723 = vmatprep.subr.mxu0 0.0
        %2724 = vmatpush1.msra.mxu0 0.0
        %2725 = vmatprep.subr.mxu0 0.0
        %2726 = vmatpush1.msra.mxu0 0.0
        %2727 = vmatprep.subr.mxu0 0.0
        %2728 = vmatpush1.msra.mxu0 0.0
        %2729 = vmatprep.subr.mxu0 0.0
        %2730 = vmatpush1.msra.mxu0 0.0
        %2731 = vmatprep.subr.mxu0 0.0
        %2732 = vmatpush1.msra.mxu0 0.0
        %2733 = vmatprep.subr.mxu0 0.0
        %2734 = vmatpush1.msra.mxu0 0.0
        %2735 = vmatprep.subr.mxu0 0.0
        %2736 = vmatpush1.msra.mxu0 0.0
        %2737 = vmatprep.subr.mxu0 0.0
        %2738 = vmatpush1.msra.mxu0 0.0
        %2739 = vmatprep.subr.mxu0 0.0
        %2740 = vmatpush1.msra.mxu0 0.0
        %2741 = vmatprep.subr.mxu0 0.0
        %2742 = vmatpush1.msra.mxu0 0.0
        %2743 = vmatprep.subr.mxu0 0.0
        %2744 = vmatpush1.msra.mxu0 0.0
        %2745 = vmatprep.subr.mxu0 0.0
        %2746 = vmatpush1.msra.mxu0 0.0
        %2747 = vmatprep.subr.mxu0 0.0
        %2748 = vmatpush1.msra.mxu0 0.0
        %2749 = vmatprep.subr.mxu0 0.0
        %2750 = vmatpush1.msra.mxu0 0.0
        %2751 = vmatprep.subr.mxu0 0.0
        %2752 = vmatpush1.msra.mxu0 0.0
        %2753 = vmatprep.subr.mxu0 0.0
        %2754 = vmatpush1.msra.mxu0 0.0
        %2755 = vmatprep.subr.mxu0 0.0
        %2756 = vmatpush1.msra.mxu0 0.0
        %2757 = vmatprep.subr.mxu0 0.0
        %2758 = vmatpush1.msra.mxu0 0.0
        %2759 = vmatprep.subr.mxu0 0.0
        %2760 = vmatpush1.msra.mxu0 0.0
        %2761 = vmatprep.subr.mxu0 0.0
        %2762 = vmatpush1.msra.mxu0 0.0
        %2763 = vmatprep.subr.mxu0 0.0
        %2764 = vmatpush1.msra.mxu0 0.0
        %2765 = vmatprep.subr.mxu0 0.0
        %2766 = vmatpush1.msra.mxu0 0.0
        %2767 = vmatprep.subr.mxu0 0.0
        %2768 = vmatpush1.msra.mxu0 0.0
        %2769 = vmatprep.subr.mxu0 0.0
        %2770 = vmatpush1.msra.mxu0 0.0
        %2771 = vmatprep.subr.mxu0 0.0
        %2772 = vmatpush1.msra.mxu0 0.0
        %2773 = vmatprep.subr.mxu0 0.0
        %2774 = vmatpush1.msra.mxu0 0.0
        %2775 = vmatprep.subr.mxu0 0.0
        %2776 = vmatpush1.msra.mxu0 0.0
        %2777 = vmatprep.subr.mxu0 0.0
        %2778 = vmatpush1.msra.mxu0 0.0
        %2779 = vmatprep.subr.mxu0 0.0
        %2780 = vmatpush1.msra.mxu0 0.0
        %2781 = vmatprep.subr.mxu0 0.0
        %2782 = vmatpush1.msra.mxu0 0.0
        %2783 = vmatprep.mubr.f32.mxu0 0.0
        %2784 = vmatmul.mubr.f32.gmra.mrb[0].mxu0 %v2714
        %v2785 = vpop.f32.mrb[0].mxu0
        %v2786 = vadd.f32 0.0, %v2785
        %v2787 = vpop.f32.mrb[0].mxu0
        %v2788 = vadd.f32 0.0, %v2787
        %2789 = vmatprep.mubr.f32.mxu0 0.0
        %2790 = vmatmul.mubr.f32.gmra.mrb[0].mxu0 %v2717
        %v2791 = vpop.f32.mrb[0].mxu0
        %v2792 = vadd.f32 0.0, %v2791
        %v2793 = vpop.f32.mrb[0].mxu0
        %v2794 = vadd.f32 0.0, %v2793
        %2795 = vdwg.mxu0
        %v2796 = vadd.f32 %v2699, %v2786
        %v2797 = vadd.f32 %v2700, %v2788
        %v2798 = vadd.f32 %v2701, %v2792
        %v2799 = vadd.f32 %v2702, %v2794
        %v2800 = vld [vmem:[%s6] sm:$0xff]
        %v2801 = vld [vmem:[%s6 + $0x8] sm:$0xff]
        %2803 = vset.pattern.permute.xlu0 0
        %2804 = vperm.xlu0 %2803, %v2800
        %v2805 = vpop.permute.xlu0 %2804
        %2808 = vset.pattern.permute.xlu0 0
        %2809 = vperm.xlu0 %2808, %v2801
        %v2810 = vpop.permute.xlu0 %2809
        %v2812 = vadd.f32 %v2796, %v2805
        %v2813 = vadd.f32 %v2797, %v2805
        %v2814 = vadd.f32 %v2798, %v2810
        %v2815 = vadd.f32 %v2799, %v2810
        %v2816 = vmin.f32 %v2812, 0.0
        %v2817 = vmin.f32 %v2813, 0.0
        %v2818 = vmin.f32 %v2814, 0.0
        %v2819 = vmin.f32 %v2815, 0.0
        %v2820 = vmul.f32 %v2816, 1.442695
        %v2821 = vpow.pop %v2820
        %v2822 = vmul.f32 %v2817, 1.442695
        %v2823 = vpow.pop %v2822
        %v2824 = vmul.f32 %v2818, 1.442695
        %v2825 = vpow.pop %v2824
        %v2826 = vmul.f32 %v2819, 1.442695
        %v2827 = vpow.pop %v2826
        %v2828 = vsub.f32 %v2821, 1.0
        %v2829 = vsub.f32 %v2823, 1.0
        %v2830 = vsub.f32 %v2825, 1.0
        %v2831 = vsub.f32 %v2827, 1.0
        %v2832 = vmul.f32 %v2828, 1.6732632
        %v2833 = vmul.f32 %v2829, 1.6732632
        %v2834 = vmul.f32 %v2830, 1.6732632
        %v2835 = vmul.f32 %v2831, 1.6732632
        %vm2836 = vcmp.gt.f32.partialorder %v2812, 0.0
        %vm2837 = vcmp.gt.f32.partialorder %v2813, 0.0
        %vm2838 = vcmp.gt.f32.partialorder %v2814, 0.0
        %vm2839 = vcmp.gt.f32.partialorder %v2815, 0.0
        %v2840 = vsel %vm2836, %v2812, %v2832
        %v2841 = vsel %vm2837, %v2813, %v2833
        %v2842 = vsel %vm2838, %v2814, %v2834
        %v2843 = vsel %vm2839, %v2815, %v2835
        %v2844 = vmul.f32 %v2840, 1.050701
        %v2845 = vmul.f32 %v2841, 1.050701
        %v2846 = vmul.f32 %v2842, 1.050701
        %v2847 = vmul.f32 %v2843, 1.050701
        %2848 = vst [vmem:[#allocation5] sm:$0xff] %v2844
        %vm2849 = vcmask 261120
        %2850 = vst.msk [vmem:[#allocation5 + $0x8] sm:$0xff] %vm2849, %v2845
        %2851 = vst [vmem:[#allocation5 + $0x10] sm:$0xff] %v2846
        %2852 = vst.msk [vmem:[#allocation5 + $0x18] sm:$0xff] %vm2849, %v2847
        %v2853 = vld [vmem:[%s8] sm:$0x1]
        %v2854 = vld [vmem:[#allocation5] ss:$8 sm:$0x3]
        %v2855 = vld [vmem:[%s7] sm:$0xff]
        %v2856 = vld [vmem:[%s7 + $0x8] sm:$0xff]
        %v2857 = vld [vmem:[%s7 + $0x10] sm:$0xff]
        %v2858 = vld [vmem:[%s7 + $0x18] sm:$0xff]
        %v2859 = vld [vmem:[%s7 + $0x20] sm:$0xff]
        %v2860 = vld [vmem:[%s7 + $0x28] sm:$0xff]
        %v2861 = vld [vmem:[%s7 + $0x30] sm:$0xff]
        %v2862 = vld [vmem:[%s7 + $0x38] sm:$0xff]
        %v2863 = vld [vmem:[%s7 + $0x40] sm:$0xff]
        %v2864 = vld [vmem:[%s7 + $0x48] sm:$0xff]
        %v2865 = vld [vmem:[%s7 + $0x50] sm:$0xff]
        %v2866 = vld [vmem:[%s7 + $0x58] sm:$0xff]
        %v2867 = vld [vmem:[%s7 + $0x60] sm:$0xff]
        %v2868 = vld [vmem:[%s7 + $0x68] sm:$0xff]
        %v2869 = vld [vmem:[%s7 + $0x70] sm:$0xff]
        %v2870 = vld [vmem:[%s7 + $0x78] sm:$0xff]
        %v2871 = vld [vmem:[%s7 + $0x80] sm:$0xff]
        %v2872 = vld [vmem:[%s7 + $0x88] sm:$0xff]
        %v2873 = vld [vmem:[%s7 + $0x90] sm:$0xff]
        %v2874 = vld [vmem:[%s7 + $0x98] sm:$0xff]
        %v2876 = vlaneseq
        %v2877 = vshrl.u32 %v2876, 7
        %v2878 = vsub.s32 0, %v2877
        %v2879 = vrot.slane %v2854, %v2878
        %v2880 = vlaneseq
        %v2881 = vshrl.u32 %v2880, 7
        %v2882 = vsub.s32 1, %v2881
        %v2883 = vrot.slane %v2854, %v2882
        %v2885 = vsel %vm2849, %v2883, 0
        %2887 = vmatprep.subr.mxu0 0.0
        %2888 = vmatpush1.msra.mxu0 %v2855
        %2889 = vmatprep.subr.mxu0 0.0
        %2890 = vmatpush1.msra.mxu0 %v2856
        %2891 = vmatprep.subr.mxu0 0.0
        %2892 = vmatpush1.msra.mxu0 %v2857
        %2893 = vmatprep.subr.mxu0 0.0
        %2894 = vmatpush1.msra.mxu0 %v2858
        %2895 = vmatprep.subr.mxu0 0.0
        %2896 = vmatpush1.msra.mxu0 %v2859
        %2897 = vmatprep.subr.mxu0 0.0
        %2898 = vmatpush1.msra.mxu0 %v2860
        %2899 = vmatprep.subr.mxu0 0.0
        %2900 = vmatpush1.msra.mxu0 %v2861
        %2901 = vmatprep.subr.mxu0 0.0
        %2902 = vmatpush1.msra.mxu0 %v2862
        %2903 = vmatprep.subr.mxu0 0.0
        %2904 = vmatpush1.msra.mxu0 %v2863
        %2905 = vmatprep.subr.mxu0 0.0
        %2906 = vmatpush1.msra.mxu0 %v2864
        %2907 = vmatprep.subr.mxu0 0.0
        %2908 = vmatpush1.msra.mxu0 %v2865
        %2909 = vmatprep.subr.mxu0 0.0
        %2910 = vmatpush1.msra.mxu0 %v2866
        %2911 = vmatprep.subr.mxu0 0.0
        %2912 = vmatpush1.msra.mxu0 %v2867
        %2913 = vmatprep.subr.mxu0 0.0
        %2914 = vmatpush1.msra.mxu0 %v2868
        %2915 = vmatprep.subr.mxu0 0.0
        %2916 = vmatpush1.msra.mxu0 %v2869
        %2917 = vmatprep.subr.mxu0 0.0
        %2918 = vmatpush1.msra.mxu0 %v2870
        %2919 = vmatprep.subr.mxu0 0.0
        %2920 = vmatpush1.msra.mxu0 %v2871
        %2921 = vmatprep.subr.mxu0 0.0
        %2922 = vmatpush1.msra.mxu0 %v2872
        %2923 = vmatprep.subr.mxu0 0.0
        %2924 = vmatpush1.msra.mxu0 %v2873
        %2925 = vmatprep.subr.mxu0 0.0
        %2926 = vmatpush1.msra.mxu0 %v2874
        %2927 = vmatprep.subr.mxu0 0.0
        %2928 = vmatpush1.msra.mxu0 0.0
        %2929 = vmatprep.subr.mxu0 0.0
        %2930 = vmatpush1.msra.mxu0 0.0
        %2931 = vmatprep.subr.mxu0 0.0
        %2932 = vmatpush1.msra.mxu0 0.0
        %2933 = vmatprep.subr.mxu0 0.0
        %2934 = vmatpush1.msra.mxu0 0.0
        %2935 = vmatprep.subr.mxu0 0.0
        %2936 = vmatpush1.msra.mxu0 0.0
        %2937 = vmatprep.subr.mxu0 0.0
        %2938 = vmatpush1.msra.mxu0 0.0
        %2939 = vmatprep.subr.mxu0 0.0
        %2940 = vmatpush1.msra.mxu0 0.0
        %2941 = vmatprep.subr.mxu0 0.0
        %2942 = vmatpush1.msra.mxu0 0.0
        %2943 = vmatprep.subr.mxu0 0.0
        %2944 = vmatpush1.msra.mxu0 0.0
        %2945 = vmatprep.subr.mxu0 0.0
        %2946 = vmatpush1.msra.mxu0 0.0
        %2947 = vmatprep.subr.mxu0 0.0
        %2948 = vmatpush1.msra.mxu0 0.0
        %2949 = vmatprep.subr.mxu0 0.0
        %2950 = vmatpush1.msra.mxu0 0.0
        %2951 = vmatprep.mubr.f32.mxu0 %v2885
        %2952 = vmatmul.mubr.f32.gmra.mrb[0].mxu0 %v2879
        %v2953 = vpop.f32.mrb[0].mxu0
        %v2954 = vadd.f32 0.0, %v2953
        %v2955 = vpop.f32.mrb[0].mxu0
        %2956 = vdwg.mxu0
        %v2957 = vadd.f32 %v2853, %v2954
        %s2958 = scalar_lea.vmem [#allocation5], 1
        %v2959 = vld [vmem:[%s2958] ss:$8 sm:$0x3]
        %s2960 = scalar_lea.vmem %s7, 160
        %v2961 = vld [vmem:[%s2960] sm:$0xff]
        %v2962 = vld [vmem:[%s2960 + $0x8] sm:$0xff]
        %v2963 = vld [vmem:[%s2960 + $0x10] sm:$0xff]
        %v2964 = vld [vmem:[%s2960 + $0x18] sm:$0xff]
        %v2965 = vld [vmem:[%s2960 + $0x20] sm:$0xff]
        %v2966 = vld [vmem:[%s2960 + $0x28] sm:$0xff]
        %v2967 = vld [vmem:[%s2960 + $0x30] sm:$0xff]
        %v2968 = vld [vmem:[%s2960 + $0x38] sm:$0xff]
        %v2969 = vld [vmem:[%s2960 + $0x40] sm:$0xff]
        %v2970 = vld [vmem:[%s2960 + $0x48] sm:$0xff]
        %v2971 = vld [vmem:[%s2960 + $0x50] sm:$0xff]
        %v2972 = vld [vmem:[%s2960 + $0x58] sm:$0xff]
        %v2973 = vld [vmem:[%s2960 + $0x60] sm:$0xff]
        %v2974 = vld [vmem:[%s2960 + $0x68] sm:$0xff]
        %v2975 = vld [vmem:[%s2960 + $0x70] sm:$0xff]
        %v2976 = vld [vmem:[%s2960 + $0x78] sm:$0xff]
        %v2977 = vld [vmem:[%s2960 + $0x80] sm:$0xff]
        %v2978 = vld [vmem:[%s2960 + $0x88] sm:$0xff]
        %v2979 = vld [vmem:[%s2960 + $0x90] sm:$0xff]
        %v2980 = vld [vmem:[%s2960 + $0x98] sm:$0xff]
        %v2982 = vlaneseq
        %v2983 = vshrl.u32 %v2982, 7
        %v2984 = vsub.s32 0, %v2983
        %v2985 = vrot.slane %v2959, %v2984
        %v2986 = vlaneseq
        %v2987 = vshrl.u32 %v2986, 7
        %v2988 = vsub.s32 1, %v2987
        %v2989 = vrot.slane %v2959, %v2988
        %v2991 = vsel %vm2849, %v2989, 0
        %2993 = vmatprep.subr.mxu0 0.0
        %2994 = vmatpush1.msra.mxu0 %v2961
        %2995 = vmatprep.subr.mxu0 0.0
        %2996 = vmatpush1.msra.mxu0 %v2962
        %2997 = vmatprep.subr.mxu0 0.0
        %2998 = vmatpush1.msra.mxu0 %v2963
        %2999 = vmatprep.subr.mxu0 0.0
        %3000 = vmatpush1.msra.mxu0 %v2964
        %3001 = vmatprep.subr.mxu0 0.0
        %3002 = vmatpush1.msra.mxu0 %v2965
        %3003 = vmatprep.subr.mxu0 0.0
        %3004 = vmatpush1.msra.mxu0 %v2966
        %3005 = vmatprep.subr.mxu0 0.0
        %3006 = vmatpush1.msra.mxu0 %v2967
        %3007 = vmatprep.subr.mxu0 0.0
        %3008 = vmatpush1.msra.mxu0 %v2968
        %3009 = vmatprep.subr.mxu0 0.0
        %3010 = vmatpush1.msra.mxu0 %v2969
        %3011 = vmatprep.subr.mxu0 0.0
        %3012 = vmatpush1.msra.mxu0 %v2970
        %3013 = vmatprep.subr.mxu0 0.0
        %3014 = vmatpush1.msra.mxu0 %v2971
        %3015 = vmatprep.subr.mxu0 0.0
        %3016 = vmatpush1.msra.mxu0 %v2972
        %3017 = vmatprep.subr.mxu0 0.0
        %3018 = vmatpush1.msra.mxu0 %v2973
        %3019 = vmatprep.subr.mxu0 0.0
        %3020 = vmatpush1.msra.mxu0 %v2974
        %3021 = vmatprep.subr.mxu0 0.0
        %3022 = vmatpush1.msra.mxu0 %v2975
        %3023 = vmatprep.subr.mxu0 0.0
        %3024 = vmatpush1.msra.mxu0 %v2976
        %3025 = vmatprep.subr.mxu0 0.0
        %3026 = vmatpush1.msra.mxu0 %v2977
        %3027 = vmatprep.subr.mxu0 0.0
        %3028 = vmatpush1.msra.mxu0 %v2978
        %3029 = vmatprep.subr.mxu0 0.0
        %3030 = vmatpush1.msra.mxu0 %v2979
        %3031 = vmatprep.subr.mxu0 0.0
        %3032 = vmatpush1.msra.mxu0 %v2980
        %3033 = vmatprep.subr.mxu0 0.0
        %3034 = vmatpush1.msra.mxu0 0.0
        %3035 = vmatprep.subr.mxu0 0.0
        %3036 = vmatpush1.msra.mxu0 0.0
        %3037 = vmatprep.subr.mxu0 0.0
        %3038 = vmatpush1.msra.mxu0 0.0
        %3039 = vmatprep.subr.mxu0 0.0
        %3040 = vmatpush1.msra.mxu0 0.0
        %3041 = vmatprep.subr.mxu0 0.0
        %3042 = vmatpush1.msra.mxu0 0.0
        %3043 = vmatprep.subr.mxu0 0.0
        %3044 = vmatpush1.msra.mxu0 0.0
        %3045 = vmatprep.subr.mxu0 0.0
        %3046 = vmatpush1.msra.mxu0 0.0
        %3047 = vmatprep.subr.mxu0 0.0
        %3048 = vmatpush1.msra.mxu0 0.0
        %3049 = vmatprep.subr.mxu0 0.0
        %3050 = vmatpush1.msra.mxu0 0.0
        %3051 = vmatprep.subr.mxu0 0.0
        %3052 = vmatpush1.msra.mxu0 0.0
        %3053 = vmatprep.subr.mxu0 0.0
        %3054 = vmatpush1.msra.mxu0 0.0
        %3055 = vmatprep.subr.mxu0 0.0
        %3056 = vmatpush1.msra.mxu0 0.0
        %3057 = vmatprep.mubr.f32.mxu0 %v2991
        %3058 = vmatmul.mubr.f32.gmra.mrb[0].mxu0 %v2985
        %v3059 = vpop.f32.mrb[0].mxu0
        %v3060 = vadd.f32 0.0, %v3059
        %v3061 = vpop.f32.mrb[0].mxu0
        %3062 = vdwg.mxu0
        %v3063 = vadd.f32 %v2957, %v3060
        %s3064 = scalar_lea.vmem [#allocation5], 2
        %v3065 = vld [vmem:[%s3064] ss:$8 sm:$0x3]
        %s3066 = scalar_lea.vmem %s7, 320
        %v3067 = vld [vmem:[%s3066] sm:$0xff]
        %v3068 = vld [vmem:[%s3066 + $0x8] sm:$0xff]
        %v3069 = vld [vmem:[%s3066 + $0x10] sm:$0xff]
        %v3070 = vld [vmem:[%s3066 + $0x18] sm:$0xff]
        %v3071 = vld [vmem:[%s3066 + $0x20] sm:$0xff]
        %v3072 = vld [vmem:[%s3066 + $0x28] sm:$0xff]
        %v3073 = vld [vmem:[%s3066 + $0x30] sm:$0xff]
        %v3074 = vld [vmem:[%s3066 + $0x38] sm:$0xff]
        %v3075 = vld [vmem:[%s3066 + $0x40] sm:$0xff]
        %v3076 = vld [vmem:[%s3066 + $0x48] sm:$0xff]
        %v3077 = vld [vmem:[%s3066 + $0x50] sm:$0xff]
        %v3078 = vld [vmem:[%s3066 + $0x58] sm:$0xff]
        %v3079 = vld [vmem:[%s3066 + $0x60] sm:$0xff]
        %v3080 = vld [vmem:[%s3066 + $0x68] sm:$0xff]
        %v3081 = vld [vmem:[%s3066 + $0x70] sm:$0xff]
        %v3082 = vld [vmem:[%s3066 + $0x78] sm:$0xff]
        %v3083 = vld [vmem:[%s3066 + $0x80] sm:$0xff]
        %v3084 = vld [vmem:[%s3066 + $0x88] sm:$0xff]
        %v3085 = vld [vmem:[%s3066 + $0x90] sm:$0xff]
        %v3086 = vld [vmem:[%s3066 + $0x98] sm:$0xff]
        %v3088 = vlaneseq
        %v3089 = vshrl.u32 %v3088, 7
        %v3090 = vsub.s32 0, %v3089
        %v3091 = vrot.slane %v3065, %v3090
        %v3092 = vlaneseq
        %v3093 = vshrl.u32 %v3092, 7
        %v3094 = vsub.s32 1, %v3093
        %v3095 = vrot.slane %v3065, %v3094
        %v3097 = vsel %vm2849, %v3095, 0
        %3099 = vmatprep.subr.mxu0 0.0
        %3100 = vmatpush1.msra.mxu0 %v3067
        %3101 = vmatprep.subr.mxu0 0.0
        %3102 = vmatpush1.msra.mxu0 %v3068
        %3103 = vmatprep.subr.mxu0 0.0
        %3104 = vmatpush1.msra.mxu0 %v3069
        %3105 = vmatprep.subr.mxu0 0.0
        %3106 = vmatpush1.msra.mxu0 %v3070
        %3107 = vmatprep.subr.mxu0 0.0
        %3108 = vmatpush1.msra.mxu0 %v3071
        %3109 = vmatprep.subr.mxu0 0.0
        %3110 = vmatpush1.msra.mxu0 %v3072
        %3111 = vmatprep.subr.mxu0 0.0
        %3112 = vmatpush1.msra.mxu0 %v3073
        %3113 = vmatprep.subr.mxu0 0.0
        %3114 = vmatpush1.msra.mxu0 %v3074
        %3115 = vmatprep.subr.mxu0 0.0
        %3116 = vmatpush1.msra.mxu0 %v3075
        %3117 = vmatprep.subr.mxu0 0.0
        %3118 = vmatpush1.msra.mxu0 %v3076
        %3119 = vmatprep.subr.mxu0 0.0
        %3120 = vmatpush1.msra.mxu0 %v3077
        %3121 = vmatprep.subr.mxu0 0.0
        %3122 = vmatpush1.msra.mxu0 %v3078
        %3123 = vmatprep.subr.mxu0 0.0
        %3124 = vmatpush1.msra.mxu0 %v3079
        %3125 = vmatprep.subr.mxu0 0.0
        %3126 = vmatpush1.msra.mxu0 %v3080
        %3127 = vmatprep.subr.mxu0 0.0
        %3128 = vmatpush1.msra.mxu0 %v3081
        %3129 = vmatprep.subr.mxu0 0.0
        %3130 = vmatpush1.msra.mxu0 %v3082
        %3131 = vmatprep.subr.mxu0 0.0
        %3132 = vmatpush1.msra.mxu0 %v3083
        %3133 = vmatprep.subr.mxu0 0.0
        %3134 = vmatpush1.msra.mxu0 %v3084
        %3135 = vmatprep.subr.mxu0 0.0
        %3136 = vmatpush1.msra.mxu0 %v3085
        %3137 = vmatprep.subr.mxu0 0.0
        %3138 = vmatpush1.msra.mxu0 %v3086
        %3139 = vmatprep.subr.mxu0 0.0
        %3140 = vmatpush1.msra.mxu0 0.0
        %3141 = vmatprep.subr.mxu0 0.0
        %3142 = vmatpush1.msra.mxu0 0.0
        %3143 = vmatprep.subr.mxu0 0.0
        %3144 = vmatpush1.msra.mxu0 0.0
        %3145 = vmatprep.subr.mxu0 0.0
        %3146 = vmatpush1.msra.mxu0 0.0
        %3147 = vmatprep.subr.mxu0 0.0
        %3148 = vmatpush1.msra.mxu0 0.0
        %3149 = vmatprep.subr.mxu0 0.0
        %3150 = vmatpush1.msra.mxu0 0.0
        %3151 = vmatprep.subr.mxu0 0.0
        %3152 = vmatpush1.msra.mxu0 0.0
        %3153 = vmatprep.subr.mxu0 0.0
        %3154 = vmatpush1.msra.mxu0 0.0
        %3155 = vmatprep.subr.mxu0 0.0
        %3156 = vmatpush1.msra.mxu0 0.0
        %3157 = vmatprep.subr.mxu0 0.0
        %3158 = vmatpush1.msra.mxu0 0.0
        %3159 = vmatprep.subr.mxu0 0.0
        %3160 = vmatpush1.msra.mxu0 0.0
        %3161 = vmatprep.subr.mxu0 0.0
        %3162 = vmatpush1.msra.mxu0 0.0
        %3163 = vmatprep.mubr.f32.mxu0 %v3097
        %3164 = vmatmul.mubr.f32.gmra.mrb[0].mxu0 %v3091
        %v3165 = vpop.f32.mrb[0].mxu0
        %v3166 = vadd.f32 0.0, %v3165
        %v3167 = vpop.f32.mrb[0].mxu0
        %3168 = vdwg.mxu0
        %v3169 = vadd.f32 %v3063, %v3166
        %s3170 = scalar_lea.vmem [#allocation5], 3
        %v3171 = vld [vmem:[%s3170] ss:$8 sm:$0x3]
        %s3172 = scalar_lea.vmem %s7, 480
        %v3173 = vld [vmem:[%s3172] sm:$0xff]
        %v3174 = vld [vmem:[%s3172 + $0x8] sm:$0xff]
        %v3175 = vld [vmem:[%s3172 + $0x10] sm:$0xff]
        %v3176 = vld [vmem:[%s3172 + $0x18] sm:$0xff]
        %v3177 = vld [vmem:[%s3172 + $0x20] sm:$0xff]
        %v3178 = vld [vmem:[%s3172 + $0x28] sm:$0xff]
        %v3179 = vld [vmem:[%s3172 + $0x30] sm:$0xff]
        %v3180 = vld [vmem:[%s3172 + $0x38] sm:$0xff]
        %v3181 = vld [vmem:[%s3172 + $0x40] sm:$0xff]
        %v3182 = vld [vmem:[%s3172 + $0x48] sm:$0xff]
        %v3183 = vld [vmem:[%s3172 + $0x50] sm:$0xff]
        %v3184 = vld [vmem:[%s3172 + $0x58] sm:$0xff]
        %v3185 = vld [vmem:[%s3172 + $0x60] sm:$0xff]
        %v3186 = vld [vmem:[%s3172 + $0x68] sm:$0xff]
        %v3187 = vld [vmem:[%s3172 + $0x70] sm:$0xff]
        %v3188 = vld [vmem:[%s3172 + $0x78] sm:$0xff]
        %v3189 = vld [vmem:[%s3172 + $0x80] sm:$0xff]
        %v3190 = vld [vmem:[%s3172 + $0x88] sm:$0xff]
        %v3191 = vld [vmem:[%s3172 + $0x90] sm:$0xff]
        %v3192 = vld [vmem:[%s3172 + $0x98] sm:$0xff]
        %v3194 = vlaneseq
        %v3195 = vshrl.u32 %v3194, 7
        %v3196 = vsub.s32 0, %v3195
        %v3197 = vrot.slane %v3171, %v3196
        %v3198 = vlaneseq
        %v3199 = vshrl.u32 %v3198, 7
        %v3200 = vsub.s32 1, %v3199
        %v3201 = vrot.slane %v3171, %v3200
        %v3203 = vsel %vm2849, %v3201, 0
        %3205 = vmatprep.subr.mxu0 0.0
        %3206 = vmatpush1.msra.mxu0 %v3173
        %3207 = vmatprep.subr.mxu0 0.0
        %3208 = vmatpush1.msra.mxu0 %v3174
        %3209 = vmatprep.subr.mxu0 0.0
        %3210 = vmatpush1.msra.mxu0 %v3175
        %3211 = vmatprep.subr.mxu0 0.0
        %3212 = vmatpush1.msra.mxu0 %v3176
        %3213 = vmatprep.subr.mxu0 0.0
        %3214 = vmatpush1.msra.mxu0 %v3177
        %3215 = vmatprep.subr.mxu0 0.0
        %3216 = vmatpush1.msra.mxu0 %v3178
        %3217 = vmatprep.subr.mxu0 0.0
        %3218 = vmatpush1.msra.mxu0 %v3179
        %3219 = vmatprep.subr.mxu0 0.0
        %3220 = vmatpush1.msra.mxu0 %v3180
        %3221 = vmatprep.subr.mxu0 0.0
        %3222 = vmatpush1.msra.mxu0 %v3181
        %3223 = vmatprep.subr.mxu0 0.0
        %3224 = vmatpush1.msra.mxu0 %v3182
        %3225 = vmatprep.subr.mxu0 0.0
        %3226 = vmatpush1.msra.mxu0 %v3183
        %3227 = vmatprep.subr.mxu0 0.0
        %3228 = vmatpush1.msra.mxu0 %v3184
        %3229 = vmatprep.subr.mxu0 0.0
        %3230 = vmatpush1.msra.mxu0 %v3185
        %3231 = vmatprep.subr.mxu0 0.0
        %3232 = vmatpush1.msra.mxu0 %v3186
        %3233 = vmatprep.subr.mxu0 0.0
        %3234 = vmatpush1.msra.mxu0 %v3187
        %3235 = vmatprep.subr.mxu0 0.0
        %3236 = vmatpush1.msra.mxu0 %v3188
        %3237 = vmatprep.subr.mxu0 0.0
        %3238 = vmatpush1.msra.mxu0 %v3189
        %3239 = vmatprep.subr.mxu0 0.0
        %3240 = vmatpush1.msra.mxu0 %v3190
        %3241 = vmatprep.subr.mxu0 0.0
        %3242 = vmatpush1.msra.mxu0 %v3191
        %3243 = vmatprep.subr.mxu0 0.0
        %3244 = vmatpush1.msra.mxu0 %v3192
        %3245 = vmatprep.subr.mxu0 0.0
        %3246 = vmatpush1.msra.mxu0 0.0
        %3247 = vmatprep.subr.mxu0 0.0
        %3248 = vmatpush1.msra.mxu0 0.0
        %3249 = vmatprep.subr.mxu0 0.0
        %3250 = vmatpush1.msra.mxu0 0.0
        %3251 = vmatprep.subr.mxu0 0.0
        %3252 = vmatpush1.msra.mxu0 0.0
        %3253 = vmatprep.subr.mxu0 0.0
        %3254 = vmatpush1.msra.mxu0 0.0
        %3255 = vmatprep.subr.mxu0 0.0
        %3256 = vmatpush1.msra.mxu0 0.0
        %3257 = vmatprep.subr.mxu0 0.0
        %3258 = vmatpush1.msra.mxu0 0.0
        %3259 = vmatprep.subr.mxu0 0.0
        %3260 = vmatpush1.msra.mxu0 0.0
        %3261 = vmatprep.subr.mxu0 0.0
        %3262 = vmatpush1.msra.mxu0 0.0
        %3263 = vmatprep.subr.mxu0 0.0
        %3264 = vmatpush1.msra.mxu0 0.0
        %3265 = vmatprep.subr.mxu0 0.0
        %3266 = vmatpush1.msra.mxu0 0.0
        %3267 = vmatprep.subr.mxu0 0.0
        %3268 = vmatpush1.msra.mxu0 0.0
        %3269 = vmatprep.mubr.f32.mxu0 %v3203
        %3270 = vmatmul.mubr.f32.gmra.mrb[0].mxu0 %v3197
        %v3271 = vpop.f32.mrb[0].mxu0
        %v3272 = vadd.f32 0.0, %v3271
        %v3273 = vpop.f32.mrb[0].mxu0
        %3274 = vdwg.mxu0
        %v3275 = vadd.f32 %v3169, %v3272
        %s3276 = scalar_lea.vmem [#allocation5], 4
        %v3277 = vld [vmem:[%s3276] ss:$8 sm:$0x3]
        %s3278 = scalar_lea.vmem %s7, 640
        %v3279 = vld [vmem:[%s3278] sm:$0xff]
        %v3280 = vld [vmem:[%s3278 + $0x8] sm:$0xff]
        %v3281 = vld [vmem:[%s3278 + $0x10] sm:$0xff]
        %v3282 = vld [vmem:[%s3278 + $0x18] sm:$0xff]
        %v3283 = vld [vmem:[%s3278 + $0x20] sm:$0xff]
        %v3284 = vld [vmem:[%s3278 + $0x28] sm:$0xff]
        %v3285 = vld [vmem:[%s3278 + $0x30] sm:$0xff]
        %v3286 = vld [vmem:[%s3278 + $0x38] sm:$0xff]
        %v3287 = vld [vmem:[%s3278 + $0x40] sm:$0xff]
        %v3288 = vld [vmem:[%s3278 + $0x48] sm:$0xff]
        %v3289 = vld [vmem:[%s3278 + $0x50] sm:$0xff]
        %v3290 = vld [vmem:[%s3278 + $0x58] sm:$0xff]
        %v3291 = vld [vmem:[%s3278 + $0x60] sm:$0xff]
        %v3292 = vld [vmem:[%s3278 + $0x68] sm:$0xff]
        %v3293 = vld [vmem:[%s3278 + $0x70] sm:$0xff]
        %v3294 = vld [vmem:[%s3278 + $0x78] sm:$0xff]
        %v3295 = vld [vmem:[%s3278 + $0x80] sm:$0xff]
        %v3296 = vld [vmem:[%s3278 + $0x88] sm:$0xff]
        %v3297 = vld [vmem:[%s3278 + $0x90] sm:$0xff]
        %v3298 = vld [vmem:[%s3278 + $0x98] sm:$0xff]
        %v3300 = vlaneseq
        %v3301 = vshrl.u32 %v3300, 7
        %v3302 = vsub.s32 0, %v3301
        %v3303 = vrot.slane %v3277, %v3302
        %v3304 = vlaneseq
        %v3305 = vshrl.u32 %v3304, 7
        %v3306 = vsub.s32 1, %v3305
        %v3307 = vrot.slane %v3277, %v3306
        %v3309 = vsel %vm2849, %v3307, 0
        %3311 = vmatprep.subr.mxu0 0.0
        %3312 = vmatpush1.msra.mxu0 %v3279
        %3313 = vmatprep.subr.mxu0 0.0
        %3314 = vmatpush1.msra.mxu0 %v3280
        %3315 = vmatprep.subr.mxu0 0.0
        %3316 = vmatpush1.msra.mxu0 %v3281
        %3317 = vmatprep.subr.mxu0 0.0
        %3318 = vmatpush1.msra.mxu0 %v3282
        %3319 = vmatprep.subr.mxu0 0.0
        %3320 = vmatpush1.msra.mxu0 %v3283
        %3321 = vmatprep.subr.mxu0 0.0
        %3322 = vmatpush1.msra.mxu0 %v3284
        %3323 = vmatprep.subr.mxu0 0.0
        %3324 = vmatpush1.msra.mxu0 %v3285
        %3325 = vmatprep.subr.mxu0 0.0
        %3326 = vmatpush1.msra.mxu0 %v3286
        %3327 = vmatprep.subr.mxu0 0.0
        %3328 = vmatpush1.msra.mxu0 %v3287
        %3329 = vmatprep.subr.mxu0 0.0
        %3330 = vmatpush1.msra.mxu0 %v3288
        %3331 = vmatprep.subr.mxu0 0.0
        %3332 = vmatpush1.msra.mxu0 %v3289
        %3333 = vmatprep.subr.mxu0 0.0
        %3334 = vmatpush1.msra.mxu0 %v3290
        %3335 = vmatprep.subr.mxu0 0.0
        %3336 = vmatpush1.msra.mxu0 %v3291
        %3337 = vmatprep.subr.mxu0 0.0
        %3338 = vmatpush1.msra.mxu0 %v3292
        %3339 = vmatprep.subr.mxu0 0.0
        %3340 = vmatpush1.msra.mxu0 %v3293
        %3341 = vmatprep.subr.mxu0 0.0
        %3342 = vmatpush1.msra.mxu0 %v3294
        %3343 = vmatprep.subr.mxu0 0.0
        %3344 = vmatpush1.msra.mxu0 %v3295
        %3345 = vmatprep.subr.mxu0 0.0
        %3346 = vmatpush1.msra.mxu0 %v3296
        %3347 = vmatprep.subr.mxu0 0.0
        %3348 = vmatpush1.msra.mxu0 %v3297
        %3349 = vmatprep.subr.mxu0 0.0
        %3350 = vmatpush1.msra.mxu0 %v3298
        %3351 = vmatprep.subr.mxu0 0.0
        %3352 = vmatpush1.msra.mxu0 0.0
        %3353 = vmatprep.subr.mxu0 0.0
        %3354 = vmatpush1.msra.mxu0 0.0
        %3355 = vmatprep.subr.mxu0 0.0
        %3356 = vmatpush1.msra.mxu0 0.0
        %3357 = vmatprep.subr.mxu0 0.0
        %3358 = vmatpush1.msra.mxu0 0.0
        %3359 = vmatprep.subr.mxu0 0.0
        %3360 = vmatpush1.msra.mxu0 0.0
        %3361 = vmatprep.subr.mxu0 0.0
        %3362 = vmatpush1.msra.mxu0 0.0
        %3363 = vmatprep.subr.mxu0 0.0
        %3364 = vmatpush1.msra.mxu0 0.0
        %3365 = vmatprep.subr.mxu0 0.0
        %3366 = vmatpush1.msra.mxu0 0.0
        %3367 = vmatprep.subr.mxu0 0.0
        %3368 = vmatpush1.msra.mxu0 0.0
        %3369 = vmatprep.subr.mxu0 0.0
        %3370 = vmatpush1.msra.mxu0 0.0
        %3371 = vmatprep.subr.mxu0 0.0
        %3372 = vmatpush1.msra.mxu0 0.0
        %3373 = vmatprep.subr.mxu0 0.0
        %3374 = vmatpush1.msra.mxu0 0.0
        %3375 = vmatprep.mubr.f32.mxu0 %v3309
        %3376 = vmatmul.mubr.f32.gmra.mrb[0].mxu0 %v3303
        %v3377 = vpop.f32.mrb[0].mxu0
        %v3378 = vadd.f32 0.0, %v3377
        %v3379 = vpop.f32.mrb[0].mxu0
        %3380 = vdwg.mxu0
        %v3381 = vadd.f32 %v3275, %v3378
        %s3382 = scalar_lea.vmem [#allocation5], 5
        %v3383 = vld [vmem:[%s3382] ss:$8 sm:$0x3]
        %s3384 = scalar_lea.vmem %s7, 800
        %v3385 = vld [vmem:[%s3384] sm:$0xff]
        %v3386 = vld [vmem:[%s3384 + $0x8] sm:$0xff]
        %v3387 = vld [vmem:[%s3384 + $0x10] sm:$0xff]
        %v3388 = vld [vmem:[%s3384 + $0x18] sm:$0xff]
        %v3389 = vld [vmem:[%s3384 + $0x20] sm:$0xff]
        %v3390 = vld [vmem:[%s3384 + $0x28] sm:$0xff]
        %v3391 = vld [vmem:[%s3384 + $0x30] sm:$0xff]
        %v3392 = vld [vmem:[%s3384 + $0x38] sm:$0xff]
        %v3393 = vld [vmem:[%s3384 + $0x40] sm:$0xff]
        %v3394 = vld [vmem:[%s3384 + $0x48] sm:$0xff]
        %v3395 = vld [vmem:[%s3384 + $0x50] sm:$0xff]
        %v3396 = vld [vmem:[%s3384 + $0x58] sm:$0xff]
        %v3397 = vld [vmem:[%s3384 + $0x60] sm:$0xff]
        %v3398 = vld [vmem:[%s3384 + $0x68] sm:$0xff]
        %v3399 = vld [vmem:[%s3384 + $0x70] sm:$0xff]
        %v3400 = vld [vmem:[%s3384 + $0x78] sm:$0xff]
        %v3401 = vld [vmem:[%s3384 + $0x80] sm:$0xff]
        %v3402 = vld [vmem:[%s3384 + $0x88] sm:$0xff]
        %v3403 = vld [vmem:[%s3384 + $0x90] sm:$0xff]
        %v3404 = vld [vmem:[%s3384 + $0x98] sm:$0xff]
        %v3406 = vlaneseq
        %v3407 = vshrl.u32 %v3406, 7
        %v3408 = vsub.s32 0, %v3407
        %v3409 = vrot.slane %v3383, %v3408
        %v3410 = vlaneseq
        %v3411 = vshrl.u32 %v3410, 7
        %v3412 = vsub.s32 1, %v3411
        %v3413 = vrot.slane %v3383, %v3412
        %v3415 = vsel %vm2849, %v3413, 0
        %3417 = vmatprep.subr.mxu0 0.0
        %3418 = vmatpush1.msra.mxu0 %v3385
        %3419 = vmatprep.subr.mxu0 0.0
        %3420 = vmatpush1.msra.mxu0 %v3386
        %3421 = vmatprep.subr.mxu0 0.0
        %3422 = vmatpush1.msra.mxu0 %v3387
        %3423 = vmatprep.subr.mxu0 0.0
        %3424 = vmatpush1.msra.mxu0 %v3388
        %3425 = vmatprep.subr.mxu0 0.0
        %3426 = vmatpush1.msra.mxu0 %v3389
        %3427 = vmatprep.subr.mxu0 0.0
        %3428 = vmatpush1.msra.mxu0 %v3390
        %3429 = vmatprep.subr.mxu0 0.0
        %3430 = vmatpush1.msra.mxu0 %v3391
        %3431 = vmatprep.subr.mxu0 0.0
        %3432 = vmatpush1.msra.mxu0 %v3392
        %3433 = vmatprep.subr.mxu0 0.0
        %3434 = vmatpush1.msra.mxu0 %v3393
        %3435 = vmatprep.subr.mxu0 0.0
        %3436 = vmatpush1.msra.mxu0 %v3394
        %3437 = vmatprep.subr.mxu0 0.0
        %3438 = vmatpush1.msra.mxu0 %v3395
        %3439 = vmatprep.subr.mxu0 0.0
        %3440 = vmatpush1.msra.mxu0 %v3396
        %3441 = vmatprep.subr.mxu0 0.0
        %3442 = vmatpush1.msra.mxu0 %v3397
        %3443 = vmatprep.subr.mxu0 0.0
        %3444 = vmatpush1.msra.mxu0 %v3398
        %3445 = vmatprep.subr.mxu0 0.0
        %3446 = vmatpush1.msra.mxu0 %v3399
        %3447 = vmatprep.subr.mxu0 0.0
        %3448 = vmatpush1.msra.mxu0 %v3400
        %3449 = vmatprep.subr.mxu0 0.0
        %3450 = vmatpush1.msra.mxu0 %v3401
        %3451 = vmatprep.subr.mxu0 0.0
        %3452 = vmatpush1.msra.mxu0 %v3402
        %3453 = vmatprep.subr.mxu0 0.0
        %3454 = vmatpush1.msra.mxu0 %v3403
        %3455 = vmatprep.subr.mxu0 0.0
        %3456 = vmatpush1.msra.mxu0 %v3404
        %3457 = vmatprep.subr.mxu0 0.0
        %3458 = vmatpush1.msra.mxu0 0.0
        %3459 = vmatprep.subr.mxu0 0.0
        %3460 = vmatpush1.msra.mxu0 0.0
        %3461 = vmatprep.subr.mxu0 0.0
        %3462 = vmatpush1.msra.mxu0 0.0
        %3463 = vmatprep.subr.mxu0 0.0
        %3464 = vmatpush1.msra.mxu0 0.0
        %3465 = vmatprep.subr.mxu0 0.0
        %3466 = vmatpush1.msra.mxu0 0.0
        %3467 = vmatprep.subr.mxu0 0.0
        %3468 = vmatpush1.msra.mxu0 0.0
        %3469 = vmatprep.subr.mxu0 0.0
        %3470 = vmatpush1.msra.mxu0 0.0
        %3471 = vmatprep.subr.mxu0 0.0
        %3472 = vmatpush1.msra.mxu0 0.0
        %3473 = vmatprep.subr.mxu0 0.0
        %3474 = vmatpush1.msra.mxu0 0.0
        %3475 = vmatprep.subr.mxu0 0.0
        %3476 = vmatpush1.msra.mxu0 0.0
        %3477 = vmatprep.subr.mxu0 0.0
        %3478 = vmatpush1.msra.mxu0 0.0
        %3479 = vmatprep.subr.mxu0 0.0
        %3480 = vmatpush1.msra.mxu0 0.0
        %3481 = vmatprep.mubr.f32.mxu0 %v3415
        %3482 = vmatmul.mubr.f32.gmra.mrb[0].mxu0 %v3409
        %v3483 = vpop.f32.mrb[0].mxu0
        %v3484 = vadd.f32 0.0, %v3483
        %v3485 = vpop.f32.mrb[0].mxu0
        %3486 = vdwg.mxu0
        %v3487 = vadd.f32 %v3381, %v3484
        %s3488 = scalar_lea.vmem [#allocation5], 6
        %v3489 = vld [vmem:[%s3488] ss:$8 sm:$0x3]
        %s3490 = scalar_lea.vmem %s7, 960
        %v3491 = vld [vmem:[%s3490] sm:$0xff]
        %v3492 = vld [vmem:[%s3490 + $0x8] sm:$0xff]
        %v3493 = vld [vmem:[%s3490 + $0x10] sm:$0xff]
        %v3494 = vld [vmem:[%s3490 + $0x18] sm:$0xff]
        %v3495 = vld [vmem:[%s3490 + $0x20] sm:$0xff]
        %v3496 = vld [vmem:[%s3490 + $0x28] sm:$0xff]
        %v3497 = vld [vmem:[%s3490 + $0x30] sm:$0xff]
        %v3498 = vld [vmem:[%s3490 + $0x38] sm:$0xff]
        %v3499 = vld [vmem:[%s3490 + $0x40] sm:$0xff]
        %v3500 = vld [vmem:[%s3490 + $0x48] sm:$0xff]
        %v3501 = vld [vmem:[%s3490 + $0x50] sm:$0xff]
        %v3502 = vld [vmem:[%s3490 + $0x58] sm:$0xff]
        %v3503 = vld [vmem:[%s3490 + $0x60] sm:$0xff]
        %v3504 = vld [vmem:[%s3490 + $0x68] sm:$0xff]
        %v3505 = vld [vmem:[%s3490 + $0x70] sm:$0xff]
        %v3506 = vld [vmem:[%s3490 + $0x78] sm:$0xff]
        %v3507 = vld [vmem:[%s3490 + $0x80] sm:$0xff]
        %v3508 = vld [vmem:[%s3490 + $0x88] sm:$0xff]
        %v3509 = vld [vmem:[%s3490 + $0x90] sm:$0xff]
        %v3510 = vld [vmem:[%s3490 + $0x98] sm:$0xff]
        %v3512 = vlaneseq
        %v3513 = vshrl.u32 %v3512, 7
        %v3514 = vsub.s32 0, %v3513
        %v3515 = vrot.slane %v3489, %v3514
        %v3516 = vlaneseq
        %v3517 = vshrl.u32 %v3516, 7
        %v3518 = vsub.s32 1, %v3517
        %v3519 = vrot.slane %v3489, %v3518
        %v3521 = vsel %vm2849, %v3519, 0
        %3523 = vmatprep.subr.mxu0 0.0
        %3524 = vmatpush1.msra.mxu0 %v3491
        %3525 = vmatprep.subr.mxu0 0.0
        %3526 = vmatpush1.msra.mxu0 %v3492
        %3527 = vmatprep.subr.mxu0 0.0
        %3528 = vmatpush1.msra.mxu0 %v3493
        %3529 = vmatprep.subr.mxu0 0.0
        %3530 = vmatpush1.msra.mxu0 %v3494
        %3531 = vmatprep.subr.mxu0 0.0
        %3532 = vmatpush1.msra.mxu0 %v3495
        %3533 = vmatprep.subr.mxu0 0.0
        %3534 = vmatpush1.msra.mxu0 %v3496
        %3535 = vmatprep.subr.mxu0 0.0
        %3536 = vmatpush1.msra.mxu0 %v3497
        %3537 = vmatprep.subr.mxu0 0.0
        %3538 = vmatpush1.msra.mxu0 %v3498
        %3539 = vmatprep.subr.mxu0 0.0
        %3540 = vmatpush1.msra.mxu0 %v3499
        %3541 = vmatprep.subr.mxu0 0.0
        %3542 = vmatpush1.msra.mxu0 %v3500
        %3543 = vmatprep.subr.mxu0 0.0
        %3544 = vmatpush1.msra.mxu0 %v3501
        %3545 = vmatprep.subr.mxu0 0.0
        %3546 = vmatpush1.msra.mxu0 %v3502
        %3547 = vmatprep.subr.mxu0 0.0
        %3548 = vmatpush1.msra.mxu0 %v3503
        %3549 = vmatprep.subr.mxu0 0.0
        %3550 = vmatpush1.msra.mxu0 %v3504
        %3551 = vmatprep.subr.mxu0 0.0
        %3552 = vmatpush1.msra.mxu0 %v3505
        %3553 = vmatprep.subr.mxu0 0.0
        %3554 = vmatpush1.msra.mxu0 %v3506
        %3555 = vmatprep.subr.mxu0 0.0
        %3556 = vmatpush1.msra.mxu0 %v3507
        %3557 = vmatprep.subr.mxu0 0.0
        %3558 = vmatpush1.msra.mxu0 %v3508
        %3559 = vmatprep.subr.mxu0 0.0
        %3560 = vmatpush1.msra.mxu0 %v3509
        %3561 = vmatprep.subr.mxu0 0.0
        %3562 = vmatpush1.msra.mxu0 %v3510
        %3563 = vmatprep.subr.mxu0 0.0
        %3564 = vmatpush1.msra.mxu0 0.0
        %3565 = vmatprep.subr.mxu0 0.0
        %3566 = vmatpush1.msra.mxu0 0.0
        %3567 = vmatprep.subr.mxu0 0.0
        %3568 = vmatpush1.msra.mxu0 0.0
        %3569 = vmatprep.subr.mxu0 0.0
        %3570 = vmatpush1.msra.mxu0 0.0
        %3571 = vmatprep.subr.mxu0 0.0
        %3572 = vmatpush1.msra.mxu0 0.0
        %3573 = vmatprep.subr.mxu0 0.0
        %3574 = vmatpush1.msra.mxu0 0.0
        %3575 = vmatprep.subr.mxu0 0.0
        %3576 = vmatpush1.msra.mxu0 0.0
        %3577 = vmatprep.subr.mxu0 0.0
        %3578 = vmatpush1.msra.mxu0 0.0
        %3579 = vmatprep.subr.mxu0 0.0
        %3580 = vmatpush1.msra.mxu0 0.0
        %3581 = vmatprep.subr.mxu0 0.0
        %3582 = vmatpush1.msra.mxu0 0.0
        %3583 = vmatprep.subr.mxu0 0.0
        %3584 = vmatpush1.msra.mxu0 0.0
        %3585 = vmatprep.subr.mxu0 0.0
        %3586 = vmatpush1.msra.mxu0 0.0
        %3587 = vmatprep.mubr.f32.mxu0 %v3521
        %3588 = vmatmul.mubr.f32.gmra.mrb[0].mxu0 %v3515
        %v3589 = vpop.f32.mrb[0].mxu0
        %v3590 = vadd.f32 0.0, %v3589
        %v3591 = vpop.f32.mrb[0].mxu0
        %3592 = vdwg.mxu0
        %v3593 = vadd.f32 %v3487, %v3590
        %s3594 = scalar_lea.vmem [#allocation5], 7
        %v3595 = vld [vmem:[%s3594] ss:$8 sm:$0x3]
        %s3596 = scalar_lea.vmem %s7, 1120
        %v3597 = vld [vmem:[%s3596] sm:$0xff]
        %v3598 = vld [vmem:[%s3596 + $0x8] sm:$0xff]
        %v3599 = vld [vmem:[%s3596 + $0x10] sm:$0xff]
        %v3600 = vld [vmem:[%s3596 + $0x18] sm:$0xff]
        %v3601 = vld [vmem:[%s3596 + $0x20] sm:$0xff]
        %v3602 = vld [vmem:[%s3596 + $0x28] sm:$0xff]
        %v3603 = vld [vmem:[%s3596 + $0x30] sm:$0xff]
        %v3604 = vld [vmem:[%s3596 + $0x38] sm:$0xff]
        %v3605 = vld [vmem:[%s3596 + $0x40] sm:$0xff]
        %v3606 = vld [vmem:[%s3596 + $0x48] sm:$0xff]
        %v3607 = vld [vmem:[%s3596 + $0x50] sm:$0xff]
        %v3608 = vld [vmem:[%s3596 + $0x58] sm:$0xff]
        %v3609 = vld [vmem:[%s3596 + $0x60] sm:$0xff]
        %v3610 = vld [vmem:[%s3596 + $0x68] sm:$0xff]
        %v3611 = vld [vmem:[%s3596 + $0x70] sm:$0xff]
        %v3612 = vld [vmem:[%s3596 + $0x78] sm:$0xff]
        %v3613 = vld [vmem:[%s3596 + $0x80] sm:$0xff]
        %v3614 = vld [vmem:[%s3596 + $0x88] sm:$0xff]
        %v3615 = vld [vmem:[%s3596 + $0x90] sm:$0xff]
        %v3616 = vld [vmem:[%s3596 + $0x98] sm:$0xff]
        %v3618 = vlaneseq
        %v3619 = vshrl.u32 %v3618, 7
        %v3620 = vsub.s32 0, %v3619
        %v3621 = vrot.slane %v3595, %v3620
        %v3622 = vlaneseq
        %v3623 = vshrl.u32 %v3622, 7
        %v3624 = vsub.s32 1, %v3623
        %v3625 = vrot.slane %v3595, %v3624
        %v3627 = vsel %vm2849, %v3625, 0
        %3629 = vmatprep.subr.mxu0 0.0
        %3630 = vmatpush1.msra.mxu0 %v3597
        %3631 = vmatprep.subr.mxu0 0.0
        %3632 = vmatpush1.msra.mxu0 %v3598
        %3633 = vmatprep.subr.mxu0 0.0
        %3634 = vmatpush1.msra.mxu0 %v3599
        %3635 = vmatprep.subr.mxu0 0.0
        %3636 = vmatpush1.msra.mxu0 %v3600
        %3637 = vmatprep.subr.mxu0 0.0
        %3638 = vmatpush1.msra.mxu0 %v3601
        %3639 = vmatprep.subr.mxu0 0.0
        %3640 = vmatpush1.msra.mxu0 %v3602
        %3641 = vmatprep.subr.mxu0 0.0
        %3642 = vmatpush1.msra.mxu0 %v3603
        %3643 = vmatprep.subr.mxu0 0.0
        %3644 = vmatpush1.msra.mxu0 %v3604
        %3645 = vmatprep.subr.mxu0 0.0
        %3646 = vmatpush1.msra.mxu0 %v3605
        %3647 = vmatprep.subr.mxu0 0.0
        %3648 = vmatpush1.msra.mxu0 %v3606
        %3649 = vmatprep.subr.mxu0 0.0
        %3650 = vmatpush1.msra.mxu0 %v3607
        %3651 = vmatprep.subr.mxu0 0.0
        %3652 = vmatpush1.msra.mxu0 %v3608
        %3653 = vmatprep.subr.mxu0 0.0
        %3654 = vmatpush1.msra.mxu0 %v3609
        %3655 = vmatprep.subr.mxu0 0.0
        %3656 = vmatpush1.msra.mxu0 %v3610
        %3657 = vmatprep.subr.mxu0 0.0
        %3658 = vmatpush1.msra.mxu0 %v3611
        %3659 = vmatprep.subr.mxu0 0.0
        %3660 = vmatpush1.msra.mxu0 %v3612
        %3661 = vmatprep.subr.mxu0 0.0
        %3662 = vmatpush1.msra.mxu0 %v3613
        %3663 = vmatprep.subr.mxu0 0.0
        %3664 = vmatpush1.msra.mxu0 %v3614
        %3665 = vmatprep.subr.mxu0 0.0
        %3666 = vmatpush1.msra.mxu0 %v3615
        %3667 = vmatprep.subr.mxu0 0.0
        %3668 = vmatpush1.msra.mxu0 %v3616
        %3669 = vmatprep.subr.mxu0 0.0
        %3670 = vmatpush1.msra.mxu0 0.0
        %3671 = vmatprep.subr.mxu0 0.0
        %3672 = vmatpush1.msra.mxu0 0.0
        %3673 = vmatprep.subr.mxu0 0.0
        %3674 = vmatpush1.msra.mxu0 0.0
        %3675 = vmatprep.subr.mxu0 0.0
        %3676 = vmatpush1.msra.mxu0 0.0
        %3677 = vmatprep.subr.mxu0 0.0
        %3678 = vmatpush1.msra.mxu0 0.0
        %3679 = vmatprep.subr.mxu0 0.0
        %3680 = vmatpush1.msra.mxu0 0.0
        %3681 = vmatprep.subr.mxu0 0.0
        %3682 = vmatpush1.msra.mxu0 0.0
        %3683 = vmatprep.subr.mxu0 0.0
        %3684 = vmatpush1.msra.mxu0 0.0
        %3685 = vmatprep.subr.mxu0 0.0
        %3686 = vmatpush1.msra.mxu0 0.0
        %3687 = vmatprep.subr.mxu0 0.0
        %3688 = vmatpush1.msra.mxu0 0.0
        %3689 = vmatprep.subr.mxu0 0.0
        %3690 = vmatpush1.msra.mxu0 0.0
        %3691 = vmatprep.subr.mxu0 0.0
        %3692 = vmatpush1.msra.mxu0 0.0
        %3693 = vmatprep.mubr.f32.mxu0 %v3627
        %3694 = vmatmul.mubr.f32.gmra.mrb[0].mxu0 %v3621
        %v3695 = vpop.f32.mrb[0].mxu0
        %v3696 = vadd.f32 0.0, %v3695
        %v3697 = vpop.f32.mrb[0].mxu0
        %3698 = vdwg.mxu0
        %v3699 = vadd.f32 %v3593, %v3696
        %s3700 = scalar_lea.vmem [#allocation5], 16
        %v3701 = vld [vmem:[%s3700] ss:$8 sm:$0x3]
        %s3702 = scalar_lea.vmem %s7, 1280
        %v3703 = vld [vmem:[%s3702] sm:$0xff]
        %v3704 = vld [vmem:[%s3702 + $0x8] sm:$0xff]
        %v3705 = vld [vmem:[%s3702 + $0x10] sm:$0xff]
        %v3706 = vld [vmem:[%s3702 + $0x18] sm:$0xff]
        %v3707 = vld [vmem:[%s3702 + $0x20] sm:$0xff]
        %v3708 = vld [vmem:[%s3702 + $0x28] sm:$0xff]
        %v3709 = vld [vmem:[%s3702 + $0x30] sm:$0xff]
        %v3710 = vld [vmem:[%s3702 + $0x38] sm:$0xff]
        %v3711 = vld [vmem:[%s3702 + $0x40] sm:$0xff]
        %v3712 = vld [vmem:[%s3702 + $0x48] sm:$0xff]
        %v3713 = vld [vmem:[%s3702 + $0x50] sm:$0xff]
        %v3714 = vld [vmem:[%s3702 + $0x58] sm:$0xff]
        %v3715 = vld [vmem:[%s3702 + $0x60] sm:$0xff]
        %v3716 = vld [vmem:[%s3702 + $0x68] sm:$0xff]
        %v3717 = vld [vmem:[%s3702 + $0x70] sm:$0xff]
        %v3718 = vld [vmem:[%s3702 + $0x78] sm:$0xff]
        %v3719 = vld [vmem:[%s3702 + $0x80] sm:$0xff]
        %v3720 = vld [vmem:[%s3702 + $0x88] sm:$0xff]
        %v3721 = vld [vmem:[%s3702 + $0x90] sm:$0xff]
        %v3722 = vld [vmem:[%s3702 + $0x98] sm:$0xff]
        %v3724 = vlaneseq
        %v3725 = vshrl.u32 %v3724, 7
        %v3726 = vsub.s32 0, %v3725
        %v3727 = vrot.slane %v3701, %v3726
        %v3728 = vlaneseq
        %v3729 = vshrl.u32 %v3728, 7
        %v3730 = vsub.s32 1, %v3729
        %v3731 = vrot.slane %v3701, %v3730
        %v3733 = vsel %vm2849, %v3731, 0
        %3735 = vmatprep.subr.mxu0 0.0
        %3736 = vmatpush1.msra.mxu0 %v3703
        %3737 = vmatprep.subr.mxu0 0.0
        %3738 = vmatpush1.msra.mxu0 %v3704
        %3739 = vmatprep.subr.mxu0 0.0
        %3740 = vmatpush1.msra.mxu0 %v3705
        %3741 = vmatprep.subr.mxu0 0.0
        %3742 = vmatpush1.msra.mxu0 %v3706
        %3743 = vmatprep.subr.mxu0 0.0
        %3744 = vmatpush1.msra.mxu0 %v3707
        %3745 = vmatprep.subr.mxu0 0.0
        %3746 = vmatpush1.msra.mxu0 %v3708
        %3747 = vmatprep.subr.mxu0 0.0
        %3748 = vmatpush1.msra.mxu0 %v3709
        %3749 = vmatprep.subr.mxu0 0.0
        %3750 = vmatpush1.msra.mxu0 %v3710
        %3751 = vmatprep.subr.mxu0 0.0
        %3752 = vmatpush1.msra.mxu0 %v3711
        %3753 = vmatprep.subr.mxu0 0.0
        %3754 = vmatpush1.msra.mxu0 %v3712
        %3755 = vmatprep.subr.mxu0 0.0
        %3756 = vmatpush1.msra.mxu0 %v3713
        %3757 = vmatprep.subr.mxu0 0.0
        %3758 = vmatpush1.msra.mxu0 %v3714
        %3759 = vmatprep.subr.mxu0 0.0
        %3760 = vmatpush1.msra.mxu0 %v3715
        %3761 = vmatprep.subr.mxu0 0.0
        %3762 = vmatpush1.msra.mxu0 %v3716
        %3763 = vmatprep.subr.mxu0 0.0
        %3764 = vmatpush1.msra.mxu0 %v3717
        %3765 = vmatprep.subr.mxu0 0.0
        %3766 = vmatpush1.msra.mxu0 %v3718
        %3767 = vmatprep.subr.mxu0 0.0
        %3768 = vmatpush1.msra.mxu0 %v3719
        %3769 = vmatprep.subr.mxu0 0.0
        %3770 = vmatpush1.msra.mxu0 %v3720
        %3771 = vmatprep.subr.mxu0 0.0
        %3772 = vmatpush1.msra.mxu0 %v3721
        %3773 = vmatprep.subr.mxu0 0.0
        %3774 = vmatpush1.msra.mxu0 %v3722
        %3775 = vmatprep.subr.mxu0 0.0
        %3776 = vmatpush1.msra.mxu0 0.0
        %3777 = vmatprep.subr.mxu0 0.0
        %3778 = vmatpush1.msra.mxu0 0.0
        %3779 = vmatprep.subr.mxu0 0.0
        %3780 = vmatpush1.msra.mxu0 0.0
        %3781 = vmatprep.subr.mxu0 0.0
        %3782 = vmatpush1.msra.mxu0 0.0
        %3783 = vmatprep.subr.mxu0 0.0
        %3784 = vmatpush1.msra.mxu0 0.0
        %3785 = vmatprep.subr.mxu0 0.0
        %3786 = vmatpush1.msra.mxu0 0.0
        %3787 = vmatprep.subr.mxu0 0.0
        %3788 = vmatpush1.msra.mxu0 0.0
        %3789 = vmatprep.subr.mxu0 0.0
        %3790 = vmatpush1.msra.mxu0 0.0
        %3791 = vmatprep.subr.mxu0 0.0
        %3792 = vmatpush1.msra.mxu0 0.0
        %3793 = vmatprep.subr.mxu0 0.0
        %3794 = vmatpush1.msra.mxu0 0.0
        %3795 = vmatprep.subr.mxu0 0.0
        %3796 = vmatpush1.msra.mxu0 0.0
        %3797 = vmatprep.subr.mxu0 0.0
        %3798 = vmatpush1.msra.mxu0 0.0
        %3799 = vmatprep.mubr.f32.mxu0 %v3733
        %3800 = vmatmul.mubr.f32.gmra.mrb[0].mxu0 %v3727
        %v3801 = vpop.f32.mrb[0].mxu0
        %v3802 = vadd.f32 0.0, %v3801
        %v3803 = vpop.f32.mrb[0].mxu0
        %3804 = vdwg.mxu0
        %v3805 = vadd.f32 %v3699, %v3802
        %s3806 = scalar_lea.vmem [#allocation5], 17
        %v3807 = vld [vmem:[%s3806] ss:$8 sm:$0x3]
        %s3808 = scalar_lea.vmem %s7, 1440
        %v3809 = vld [vmem:[%s3808] sm:$0xff]
        %v3810 = vld [vmem:[%s3808 + $0x8] sm:$0xff]
        %v3811 = vld [vmem:[%s3808 + $0x10] sm:$0xff]
        %v3812 = vld [vmem:[%s3808 + $0x18] sm:$0xff]
        %v3813 = vld [vmem:[%s3808 + $0x20] sm:$0xff]
        %v3814 = vld [vmem:[%s3808 + $0x28] sm:$0xff]
        %v3815 = vld [vmem:[%s3808 + $0x30] sm:$0xff]
        %v3816 = vld [vmem:[%s3808 + $0x38] sm:$0xff]
        %v3817 = vld [vmem:[%s3808 + $0x40] sm:$0xff]
        %v3818 = vld [vmem:[%s3808 + $0x48] sm:$0xff]
        %v3819 = vld [vmem:[%s3808 + $0x50] sm:$0xff]
        %v3820 = vld [vmem:[%s3808 + $0x58] sm:$0xff]
        %v3821 = vld [vmem:[%s3808 + $0x60] sm:$0xff]
        %v3822 = vld [vmem:[%s3808 + $0x68] sm:$0xff]
        %v3823 = vld [vmem:[%s3808 + $0x70] sm:$0xff]
        %v3824 = vld [vmem:[%s3808 + $0x78] sm:$0xff]
        %v3825 = vld [vmem:[%s3808 + $0x80] sm:$0xff]
        %v3826 = vld [vmem:[%s3808 + $0x88] sm:$0xff]
        %v3827 = vld [vmem:[%s3808 + $0x90] sm:$0xff]
        %v3828 = vld [vmem:[%s3808 + $0x98] sm:$0xff]
        %v3830 = vlaneseq
        %v3831 = vshrl.u32 %v3830, 7
        %v3832 = vsub.s32 0, %v3831
        %v3833 = vrot.slane %v3807, %v3832
        %v3834 = vlaneseq
        %v3835 = vshrl.u32 %v3834, 7
        %v3836 = vsub.s32 1, %v3835
        %v3837 = vrot.slane %v3807, %v3836
        %v3839 = vsel %vm2849, %v3837, 0
        %3841 = vmatprep.subr.mxu0 0.0
        %3842 = vmatpush1.msra.mxu0 %v3809
        %3843 = vmatprep.subr.mxu0 0.0
        %3844 = vmatpush1.msra.mxu0 %v3810
        %3845 = vmatprep.subr.mxu0 0.0
        %3846 = vmatpush1.msra.mxu0 %v3811
        %3847 = vmatprep.subr.mxu0 0.0
        %3848 = vmatpush1.msra.mxu0 %v3812
        %3849 = vmatprep.subr.mxu0 0.0
        %3850 = vmatpush1.msra.mxu0 %v3813
        %3851 = vmatprep.subr.mxu0 0.0
        %3852 = vmatpush1.msra.mxu0 %v3814
        %3853 = vmatprep.subr.mxu0 0.0
        %3854 = vmatpush1.msra.mxu0 %v3815
        %3855 = vmatprep.subr.mxu0 0.0
        %3856 = vmatpush1.msra.mxu0 %v3816
        %3857 = vmatprep.subr.mxu0 0.0
        %3858 = vmatpush1.msra.mxu0 %v3817
        %3859 = vmatprep.subr.mxu0 0.0
        %3860 = vmatpush1.msra.mxu0 %v3818
        %3861 = vmatprep.subr.mxu0 0.0
        %3862 = vmatpush1.msra.mxu0 %v3819
        %3863 = vmatprep.subr.mxu0 0.0
        %3864 = vmatpush1.msra.mxu0 %v3820
        %3865 = vmatprep.subr.mxu0 0.0
        %3866 = vmatpush1.msra.mxu0 %v3821
        %3867 = vmatprep.subr.mxu0 0.0
        %3868 = vmatpush1.msra.mxu0 %v3822
        %3869 = vmatprep.subr.mxu0 0.0
        %3870 = vmatpush1.msra.mxu0 %v3823
        %3871 = vmatprep.subr.mxu0 0.0
        %3872 = vmatpush1.msra.mxu0 %v3824
        %3873 = vmatprep.subr.mxu0 0.0
        %3874 = vmatpush1.msra.mxu0 %v3825
        %3875 = vmatprep.subr.mxu0 0.0
        %3876 = vmatpush1.msra.mxu0 %v3826
        %3877 = vmatprep.subr.mxu0 0.0
        %3878 = vmatpush1.msra.mxu0 %v3827
        %3879 = vmatprep.subr.mxu0 0.0
        %3880 = vmatpush1.msra.mxu0 %v3828
        %3881 = vmatprep.subr.mxu0 0.0
        %3882 = vmatpush1.msra.mxu0 0.0
        %3883 = vmatprep.subr.mxu0 0.0
        %3884 = vmatpush1.msra.mxu0 0.0
        %3885 = vmatprep.subr.mxu0 0.0
        %3886 = vmatpush1.msra.mxu0 0.0
        %3887 = vmatprep.subr.mxu0 0.0
        %3888 = vmatpush1.msra.mxu0 0.0
        %3889 = vmatprep.subr.mxu0 0.0
        %3890 = vmatpush1.msra.mxu0 0.0
        %3891 = vmatprep.subr.mxu0 0.0
        %3892 = vmatpush1.msra.mxu0 0.0
        %3893 = vmatprep.subr.mxu0 0.0
        %3894 = vmatpush1.msra.mxu0 0.0
        %3895 = vmatprep.subr.mxu0 0.0
        %3896 = vmatpush1.msra.mxu0 0.0
        %3897 = vmatprep.subr.mxu0 0.0
        %3898 = vmatpush1.msra.mxu0 0.0
        %3899 = vmatprep.subr.mxu0 0.0
        %3900 = vmatpush1.msra.mxu0 0.0
        %3901 = vmatprep.subr.mxu0 0.0
        %3902 = vmatpush1.msra.mxu0 0.0
        %3903 = vmatprep.subr.mxu0 0.0
        %3904 = vmatpush1.msra.mxu0 0.0
        %3905 = vmatprep.mubr.f32.mxu0 %v3839
        %3906 = vmatmul.mubr.f32.gmra.mrb[0].mxu0 %v3833
        %v3907 = vpop.f32.mrb[0].mxu0
        %v3908 = vadd.f32 0.0, %v3907
        %v3909 = vpop.f32.mrb[0].mxu0
        %3910 = vdwg.mxu0
        %v3911 = vadd.f32 %v3805, %v3908
        %s3912 = scalar_lea.vmem [#allocation5], 18
        %v3913 = vld [vmem:[%s3912] ss:$8 sm:$0x3]
        %s3914 = scalar_lea.vmem %s7, 1600
        %v3915 = vld [vmem:[%s3914] sm:$0xff]
        %v3916 = vld [vmem:[%s3914 + $0x8] sm:$0xff]
        %v3917 = vld [vmem:[%s3914 + $0x10] sm:$0xff]
        %v3918 = vld [vmem:[%s3914 + $0x18] sm:$0xff]
        %v3919 = vld [vmem:[%s3914 + $0x20] sm:$0xff]
        %v3920 = vld [vmem:[%s3914 + $0x28] sm:$0xff]
        %v3921 = vld [vmem:[%s3914 + $0x30] sm:$0xff]
        %v3922 = vld [vmem:[%s3914 + $0x38] sm:$0xff]
        %v3923 = vld [vmem:[%s3914 + $0x40] sm:$0xff]
        %v3924 = vld [vmem:[%s3914 + $0x48] sm:$0xff]
        %v3925 = vld [vmem:[%s3914 + $0x50] sm:$0xff]
        %v3926 = vld [vmem:[%s3914 + $0x58] sm:$0xff]
        %v3927 = vld [vmem:[%s3914 + $0x60] sm:$0xff]
        %v3928 = vld [vmem:[%s3914 + $0x68] sm:$0xff]
        %v3929 = vld [vmem:[%s3914 + $0x70] sm:$0xff]
        %v3930 = vld [vmem:[%s3914 + $0x78] sm:$0xff]
        %v3931 = vld [vmem:[%s3914 + $0x80] sm:$0xff]
        %v3932 = vld [vmem:[%s3914 + $0x88] sm:$0xff]
        %v3933 = vld [vmem:[%s3914 + $0x90] sm:$0xff]
        %v3934 = vld [vmem:[%s3914 + $0x98] sm:$0xff]
        %v3936 = vlaneseq
        %v3937 = vshrl.u32 %v3936, 7
        %v3938 = vsub.s32 0, %v3937
        %v3939 = vrot.slane %v3913, %v3938
        %v3940 = vlaneseq
        %v3941 = vshrl.u32 %v3940, 7
        %v3942 = vsub.s32 1, %v3941
        %v3943 = vrot.slane %v3913, %v3942
        %v3945 = vsel %vm2849, %v3943, 0
        %3947 = vmatprep.subr.mxu0 0.0
        %3948 = vmatpush1.msra.mxu0 %v3915
        %3949 = vmatprep.subr.mxu0 0.0
        %3950 = vmatpush1.msra.mxu0 %v3916
        %3951 = vmatprep.subr.mxu0 0.0
        %3952 = vmatpush1.msra.mxu0 %v3917
        %3953 = vmatprep.subr.mxu0 0.0
        %3954 = vmatpush1.msra.mxu0 %v3918
        %3955 = vmatprep.subr.mxu0 0.0
        %3956 = vmatpush1.msra.mxu0 %v3919
        %3957 = vmatprep.subr.mxu0 0.0
        %3958 = vmatpush1.msra.mxu0 %v3920
        %3959 = vmatprep.subr.mxu0 0.0
        %3960 = vmatpush1.msra.mxu0 %v3921
        %3961 = vmatprep.subr.mxu0 0.0
        %3962 = vmatpush1.msra.mxu0 %v3922
        %3963 = vmatprep.subr.mxu0 0.0
        %3964 = vmatpush1.msra.mxu0 %v3923
        %3965 = vmatprep.subr.mxu0 0.0
        %3966 = vmatpush1.msra.mxu0 %v3924
        %3967 = vmatprep.subr.mxu0 0.0
        %3968 = vmatpush1.msra.mxu0 %v3925
        %3969 = vmatprep.subr.mxu0 0.0
        %3970 = vmatpush1.msra.mxu0 %v3926
        %3971 = vmatprep.subr.mxu0 0.0
        %3972 = vmatpush1.msra.mxu0 %v3927
        %3973 = vmatprep.subr.mxu0 0.0
        %3974 = vmatpush1.msra.mxu0 %v3928
        %3975 = vmatprep.subr.mxu0 0.0
        %3976 = vmatpush1.msra.mxu0 %v3929
        %3977 = vmatprep.subr.mxu0 0.0
        %3978 = vmatpush1.msra.mxu0 %v3930
        %3979 = vmatprep.subr.mxu0 0.0
        %3980 = vmatpush1.msra.mxu0 %v3931
        %3981 = vmatprep.subr.mxu0 0.0
        %3982 = vmatpush1.msra.mxu0 %v3932
        %3983 = vmatprep.subr.mxu0 0.0
        %3984 = vmatpush1.msra.mxu0 %v3933
        %3985 = vmatprep.subr.mxu0 0.0
        %3986 = vmatpush1.msra.mxu0 %v3934
        %3987 = vmatprep.subr.mxu0 0.0
        %3988 = vmatpush1.msra.mxu0 0.0
        %3989 = vmatprep.subr.mxu0 0.0
        %3990 = vmatpush1.msra.mxu0 0.0
        %3991 = vmatprep.subr.mxu0 0.0
        %3992 = vmatpush1.msra.mxu0 0.0
        %3993 = vmatprep.subr.mxu0 0.0
        %3994 = vmatpush1.msra.mxu0 0.0
        %3995 = vmatprep.subr.mxu0 0.0
        %3996 = vmatpush1.msra.mxu0 0.0
        %3997 = vmatprep.subr.mxu0 0.0
        %3998 = vmatpush1.msra.mxu0 0.0
        %3999 = vmatprep.subr.mxu0 0.0
        %4000 = vmatpush1.msra.mxu0 0.0
        %4001 = vmatprep.subr.mxu0 0.0
        %4002 = vmatpush1.msra.mxu0 0.0
        %4003 = vmatprep.subr.mxu0 0.0
        %4004 = vmatpush1.msra.mxu0 0.0
        %4005 = vmatprep.subr.mxu0 0.0
        %4006 = vmatpush1.msra.mxu0 0.0
        %4007 = vmatprep.subr.mxu0 0.0
        %4008 = vmatpush1.msra.mxu0 0.0
        %4009 = vmatprep.subr.mxu0 0.0
        %4010 = vmatpush1.msra.mxu0 0.0
        %4011 = vmatprep.mubr.f32.mxu0 %v3945
        %4012 = vmatmul.mubr.f32.gmra.mrb[0].mxu0 %v3939
        %v4013 = vpop.f32.mrb[0].mxu0
        %v4014 = vadd.f32 0.0, %v4013
        %v4015 = vpop.f32.mrb[0].mxu0
        %4016 = vdwg.mxu0
        %v4017 = vadd.f32 %v3911, %v4014
        %s4018 = scalar_lea.vmem [#allocation5], 19
        %v4019 = vld [vmem:[%s4018] ss:$8 sm:$0x3]
        %s4020 = scalar_lea.vmem %s7, 1760
        %v4021 = vld [vmem:[%s4020] sm:$0xff]
        %v4022 = vld [vmem:[%s4020 + $0x8] sm:$0xff]
        %v4023 = vld [vmem:[%s4020 + $0x10] sm:$0xff]
        %v4024 = vld [vmem:[%s4020 + $0x18] sm:$0xff]
        %v4025 = vld [vmem:[%s4020 + $0x20] sm:$0xff]
        %v4026 = vld [vmem:[%s4020 + $0x28] sm:$0xff]
        %v4027 = vld [vmem:[%s4020 + $0x30] sm:$0xff]
        %v4028 = vld [vmem:[%s4020 + $0x38] sm:$0xff]
        %v4029 = vld [vmem:[%s4020 + $0x40] sm:$0xff]
        %v4030 = vld [vmem:[%s4020 + $0x48] sm:$0xff]
        %v4031 = vld [vmem:[%s4020 + $0x50] sm:$0xff]
        %v4032 = vld [vmem:[%s4020 + $0x58] sm:$0xff]
        %v4033 = vld [vmem:[%s4020 + $0x60] sm:$0xff]
        %v4034 = vld [vmem:[%s4020 + $0x68] sm:$0xff]
        %v4035 = vld [vmem:[%s4020 + $0x70] sm:$0xff]
        %v4036 = vld [vmem:[%s4020 + $0x78] sm:$0xff]
        %v4037 = vld [vmem:[%s4020 + $0x80] sm:$0xff]
        %v4038 = vld [vmem:[%s4020 + $0x88] sm:$0xff]
        %v4039 = vld [vmem:[%s4020 + $0x90] sm:$0xff]
        %v4040 = vld [vmem:[%s4020 + $0x98] sm:$0xff]
        %v4042 = vlaneseq
        %v4043 = vshrl.u32 %v4042, 7
        %v4044 = vsub.s32 0, %v4043
        %v4045 = vrot.slane %v4019, %v4044
        %v4046 = vlaneseq
        %v4047 = vshrl.u32 %v4046, 7
        %v4048 = vsub.s32 1, %v4047
        %v4049 = vrot.slane %v4019, %v4048
        %v4051 = vsel %vm2849, %v4049, 0
        %4053 = vmatprep.subr.mxu0 0.0
        %4054 = vmatpush1.msra.mxu0 %v4021
        %4055 = vmatprep.subr.mxu0 0.0
        %4056 = vmatpush1.msra.mxu0 %v4022
        %4057 = vmatprep.subr.mxu0 0.0
        %4058 = vmatpush1.msra.mxu0 %v4023
        %4059 = vmatprep.subr.mxu0 0.0
        %4060 = vmatpush1.msra.mxu0 %v4024
        %4061 = vmatprep.subr.mxu0 0.0
        %4062 = vmatpush1.msra.mxu0 %v4025
        %4063 = vmatprep.subr.mxu0 0.0
        %4064 = vmatpush1.msra.mxu0 %v4026
        %4065 = vmatprep.subr.mxu0 0.0
        %4066 = vmatpush1.msra.mxu0 %v4027
        %4067 = vmatprep.subr.mxu0 0.0
        %4068 = vmatpush1.msra.mxu0 %v4028
        %4069 = vmatprep.subr.mxu0 0.0
        %4070 = vmatpush1.msra.mxu0 %v4029
        %4071 = vmatprep.subr.mxu0 0.0
        %4072 = vmatpush1.msra.mxu0 %v4030
        %4073 = vmatprep.subr.mxu0 0.0
        %4074 = vmatpush1.msra.mxu0 %v4031
        %4075 = vmatprep.subr.mxu0 0.0
        %4076 = vmatpush1.msra.mxu0 %v4032
        %4077 = vmatprep.subr.mxu0 0.0
        %4078 = vmatpush1.msra.mxu0 %v4033
        %4079 = vmatprep.subr.mxu0 0.0
        %4080 = vmatpush1.msra.mxu0 %v4034
        %4081 = vmatprep.subr.mxu0 0.0
        %4082 = vmatpush1.msra.mxu0 %v4035
        %4083 = vmatprep.subr.mxu0 0.0
        %4084 = vmatpush1.msra.mxu0 %v4036
        %4085 = vmatprep.subr.mxu0 0.0
        %4086 = vmatpush1.msra.mxu0 %v4037
        %4087 = vmatprep.subr.mxu0 0.0
        %4088 = vmatpush1.msra.mxu0 %v4038
        %4089 = vmatprep.subr.mxu0 0.0
        %4090 = vmatpush1.msra.mxu0 %v4039
        %4091 = vmatprep.subr.mxu0 0.0
        %4092 = vmatpush1.msra.mxu0 %v4040
        %4093 = vmatprep.subr.mxu0 0.0
        %4094 = vmatpush1.msra.mxu0 0.0
        %4095 = vmatprep.subr.mxu0 0.0
        %4096 = vmatpush1.msra.mxu0 0.0
        %4097 = vmatprep.subr.mxu0 0.0
        %4098 = vmatpush1.msra.mxu0 0.0
        %4099 = vmatprep.subr.mxu0 0.0
        %4100 = vmatpush1.msra.mxu0 0.0
        %4101 = vmatprep.subr.mxu0 0.0
        %4102 = vmatpush1.msra.mxu0 0.0
        %4103 = vmatprep.subr.mxu0 0.0
        %4104 = vmatpush1.msra.mxu0 0.0
        %4105 = vmatprep.subr.mxu0 0.0
        %4106 = vmatpush1.msra.mxu0 0.0
        %4107 = vmatprep.subr.mxu0 0.0
        %4108 = vmatpush1.msra.mxu0 0.0
        %4109 = vmatprep.subr.mxu0 0.0
        %4110 = vmatpush1.msra.mxu0 0.0
        %4111 = vmatprep.subr.mxu0 0.0
        %4112 = vmatpush1.msra.mxu0 0.0
        %4113 = vmatprep.subr.mxu0 0.0
        %4114 = vmatpush1.msra.mxu0 0.0
        %4115 = vmatprep.subr.mxu0 0.0
        %4116 = vmatpush1.msra.mxu0 0.0
        %4117 = vmatprep.mubr.f32.mxu0 %v4051
        %4118 = vmatmul.mubr.f32.gmra.mrb[0].mxu0 %v4045
        %v4119 = vpop.f32.mrb[0].mxu0
        %v4120 = vadd.f32 0.0, %v4119
        %v4121 = vpop.f32.mrb[0].mxu0
        %4122 = vdwg.mxu0
        %v4123 = vadd.f32 %v4017, %v4120
        %s4124 = scalar_lea.vmem [#allocation5], 20
        %v4125 = vld [vmem:[%s4124] ss:$8 sm:$0x3]
        %s4126 = scalar_lea.vmem %s7, 1920
        %v4127 = vld [vmem:[%s4126] sm:$0xff]
        %v4128 = vld [vmem:[%s4126 + $0x8] sm:$0xff]
        %v4129 = vld [vmem:[%s4126 + $0x10] sm:$0xff]
        %v4130 = vld [vmem:[%s4126 + $0x18] sm:$0xff]
        %v4131 = vld [vmem:[%s4126 + $0x20] sm:$0xff]
        %v4132 = vld [vmem:[%s4126 + $0x28] sm:$0xff]
        %v4133 = vld [vmem:[%s4126 + $0x30] sm:$0xff]
        %v4134 = vld [vmem:[%s4126 + $0x38] sm:$0xff]
        %v4135 = vld [vmem:[%s4126 + $0x40] sm:$0xff]
        %v4136 = vld [vmem:[%s4126 + $0x48] sm:$0xff]
        %v4137 = vld [vmem:[%s4126 + $0x50] sm:$0xff]
        %v4138 = vld [vmem:[%s4126 + $0x58] sm:$0xff]
        %v4139 = vld [vmem:[%s4126 + $0x60] sm:$0xff]
        %v4140 = vld [vmem:[%s4126 + $0x68] sm:$0xff]
        %v4141 = vld [vmem:[%s4126 + $0x70] sm:$0xff]
        %v4142 = vld [vmem:[%s4126 + $0x78] sm:$0xff]
        %v4143 = vld [vmem:[%s4126 + $0x80] sm:$0xff]
        %v4144 = vld [vmem:[%s4126 + $0x88] sm:$0xff]
        %v4145 = vld [vmem:[%s4126 + $0x90] sm:$0xff]
        %v4146 = vld [vmem:[%s4126 + $0x98] sm:$0xff]
        %v4148 = vlaneseq
        %v4149 = vshrl.u32 %v4148, 7
        %v4150 = vsub.s32 0, %v4149
        %v4151 = vrot.slane %v4125, %v4150
        %v4152 = vlaneseq
        %v4153 = vshrl.u32 %v4152, 7
        %v4154 = vsub.s32 1, %v4153
        %v4155 = vrot.slane %v4125, %v4154
        %v4157 = vsel %vm2849, %v4155, 0
        %4159 = vmatprep.subr.mxu0 0.0
        %4160 = vmatpush1.msra.mxu0 %v4127
        %4161 = vmatprep.subr.mxu0 0.0
        %4162 = vmatpush1.msra.mxu0 %v4128
        %4163 = vmatprep.subr.mxu0 0.0
        %4164 = vmatpush1.msra.mxu0 %v4129
        %4165 = vmatprep.subr.mxu0 0.0
        %4166 = vmatpush1.msra.mxu0 %v4130
        %4167 = vmatprep.subr.mxu0 0.0
        %4168 = vmatpush1.msra.mxu0 %v4131
        %4169 = vmatprep.subr.mxu0 0.0
        %4170 = vmatpush1.msra.mxu0 %v4132
        %4171 = vmatprep.subr.mxu0 0.0
        %4172 = vmatpush1.msra.mxu0 %v4133
        %4173 = vmatprep.subr.mxu0 0.0
        %4174 = vmatpush1.msra.mxu0 %v4134
        %4175 = vmatprep.subr.mxu0 0.0
        %4176 = vmatpush1.msra.mxu0 %v4135
        %4177 = vmatprep.subr.mxu0 0.0
        %4178 = vmatpush1.msra.mxu0 %v4136
        %4179 = vmatprep.subr.mxu0 0.0
        %4180 = vmatpush1.msra.mxu0 %v4137
        %4181 = vmatprep.subr.mxu0 0.0
        %4182 = vmatpush1.msra.mxu0 %v4138
        %4183 = vmatprep.subr.mxu0 0.0
        %4184 = vmatpush1.msra.mxu0 %v4139
        %4185 = vmatprep.subr.mxu0 0.0
        %4186 = vmatpush1.msra.mxu0 %v4140
        %4187 = vmatprep.subr.mxu0 0.0
        %4188 = vmatpush1.msra.mxu0 %v4141
        %4189 = vmatprep.subr.mxu0 0.0
        %4190 = vmatpush1.msra.mxu0 %v4142
        %4191 = vmatprep.subr.mxu0 0.0
        %4192 = vmatpush1.msra.mxu0 %v4143
        %4193 = vmatprep.subr.mxu0 0.0
        %4194 = vmatpush1.msra.mxu0 %v4144
        %4195 = vmatprep.subr.mxu0 0.0
        %4196 = vmatpush1.msra.mxu0 %v4145
        %4197 = vmatprep.subr.mxu0 0.0
        %4198 = vmatpush1.msra.mxu0 %v4146
        %4199 = vmatprep.subr.mxu0 0.0
        %4200 = vmatpush1.msra.mxu0 0.0
        %4201 = vmatprep.subr.mxu0 0.0
        %4202 = vmatpush1.msra.mxu0 0.0
        %4203 = vmatprep.subr.mxu0 0.0
        %4204 = vmatpush1.msra.mxu0 0.0
        %4205 = vmatprep.subr.mxu0 0.0
        %4206 = vmatpush1.msra.mxu0 0.0
        %4207 = vmatprep.subr.mxu0 0.0
        %4208 = vmatpush1.msra.mxu0 0.0
        %4209 = vmatprep.subr.mxu0 0.0
        %4210 = vmatpush1.msra.mxu0 0.0
        %4211 = vmatprep.subr.mxu0 0.0
        %4212 = vmatpush1.msra.mxu0 0.0
        %4213 = vmatprep.subr.mxu0 0.0
        %4214 = vmatpush1.msra.mxu0 0.0
        %4215 = vmatprep.subr.mxu0 0.0
        %4216 = vmatpush1.msra.mxu0 0.0
        %4217 = vmatprep.subr.mxu0 0.0
        %4218 = vmatpush1.msra.mxu0 0.0
        %4219 = vmatprep.subr.mxu0 0.0
        %4220 = vmatpush1.msra.mxu0 0.0
        %4221 = vmatprep.subr.mxu0 0.0
        %4222 = vmatpush1.msra.mxu0 0.0
        %4223 = vmatprep.mubr.f32.mxu0 %v4157
        %4224 = vmatmul.mubr.f32.gmra.mrb[0].mxu0 %v4151
        %v4225 = vpop.f32.mrb[0].mxu0
        %v4226 = vadd.f32 0.0, %v4225
        %v4227 = vpop.f32.mrb[0].mxu0
        %4228 = vdwg.mxu0
        %v4229 = vadd.f32 %v4123, %v4226
        %s4230 = scalar_lea.vmem [#allocation5], 21
        %v4231 = vld [vmem:[%s4230] ss:$8 sm:$0x3]
        %s4232 = scalar_lea.vmem %s7, 2080
        %v4233 = vld [vmem:[%s4232] sm:$0xff]
        %v4234 = vld [vmem:[%s4232 + $0x8] sm:$0xff]
        %v4235 = vld [vmem:[%s4232 + $0x10] sm:$0xff]
        %v4236 = vld [vmem:[%s4232 + $0x18] sm:$0xff]
        %v4237 = vld [vmem:[%s4232 + $0x20] sm:$0xff]
        %v4238 = vld [vmem:[%s4232 + $0x28] sm:$0xff]
        %v4239 = vld [vmem:[%s4232 + $0x30] sm:$0xff]
        %v4240 = vld [vmem:[%s4232 + $0x38] sm:$0xff]
        %v4241 = vld [vmem:[%s4232 + $0x40] sm:$0xff]
        %v4242 = vld [vmem:[%s4232 + $0x48] sm:$0xff]
        %v4243 = vld [vmem:[%s4232 + $0x50] sm:$0xff]
        %v4244 = vld [vmem:[%s4232 + $0x58] sm:$0xff]
        %v4245 = vld [vmem:[%s4232 + $0x60] sm:$0xff]
        %v4246 = vld [vmem:[%s4232 + $0x68] sm:$0xff]
        %v4247 = vld [vmem:[%s4232 + $0x70] sm:$0xff]
        %v4248 = vld [vmem:[%s4232 + $0x78] sm:$0xff]
        %v4249 = vld [vmem:[%s4232 + $0x80] sm:$0xff]
        %v4250 = vld [vmem:[%s4232 + $0x88] sm:$0xff]
        %v4251 = vld [vmem:[%s4232 + $0x90] sm:$0xff]
        %v4252 = vld [vmem:[%s4232 + $0x98] sm:$0xff]
        %v4254 = vlaneseq
        %v4255 = vshrl.u32 %v4254, 7
        %v4256 = vsub.s32 0, %v4255
        %v4257 = vrot.slane %v4231, %v4256
        %v4258 = vlaneseq
        %v4259 = vshrl.u32 %v4258, 7
        %v4260 = vsub.s32 1, %v4259
        %v4261 = vrot.slane %v4231, %v4260
        %v4263 = vsel %vm2849, %v4261, 0
        %4265 = vmatprep.subr.mxu0 0.0
        %4266 = vmatpush1.msra.mxu0 %v4233
        %4267 = vmatprep.subr.mxu0 0.0
        %4268 = vmatpush1.msra.mxu0 %v4234
        %4269 = vmatprep.subr.mxu0 0.0
        %4270 = vmatpush1.msra.mxu0 %v4235
        %4271 = vmatprep.subr.mxu0 0.0
        %4272 = vmatpush1.msra.mxu0 %v4236
        %4273 = vmatprep.subr.mxu0 0.0
        %4274 = vmatpush1.msra.mxu0 %v4237
        %4275 = vmatprep.subr.mxu0 0.0
        %4276 = vmatpush1.msra.mxu0 %v4238
        %4277 = vmatprep.subr.mxu0 0.0
        %4278 = vmatpush1.msra.mxu0 %v4239
        %4279 = vmatprep.subr.mxu0 0.0
        %4280 = vmatpush1.msra.mxu0 %v4240
        %4281 = vmatprep.subr.mxu0 0.0
        %4282 = vmatpush1.msra.mxu0 %v4241
        %4283 = vmatprep.subr.mxu0 0.0
        %4284 = vmatpush1.msra.mxu0 %v4242
        %4285 = vmatprep.subr.mxu0 0.0
        %4286 = vmatpush1.msra.mxu0 %v4243
        %4287 = vmatprep.subr.mxu0 0.0
        %4288 = vmatpush1.msra.mxu0 %v4244
        %4289 = vmatprep.subr.mxu0 0.0
        %4290 = vmatpush1.msra.mxu0 %v4245
        %4291 = vmatprep.subr.mxu0 0.0
        %4292 = vmatpush1.msra.mxu0 %v4246
        %4293 = vmatprep.subr.mxu0 0.0
        %4294 = vmatpush1.msra.mxu0 %v4247
        %4295 = vmatprep.subr.mxu0 0.0
        %4296 = vmatpush1.msra.mxu0 %v4248
        %4297 = vmatprep.subr.mxu0 0.0
        %4298 = vmatpush1.msra.mxu0 %v4249
        %4299 = vmatprep.subr.mxu0 0.0
        %4300 = vmatpush1.msra.mxu0 %v4250
        %4301 = vmatprep.subr.mxu0 0.0
        %4302 = vmatpush1.msra.mxu0 %v4251
        %4303 = vmatprep.subr.mxu0 0.0
        %4304 = vmatpush1.msra.mxu0 %v4252
        %4305 = vmatprep.subr.mxu0 0.0
        %4306 = vmatpush1.msra.mxu0 0.0
        %4307 = vmatprep.subr.mxu0 0.0
        %4308 = vmatpush1.msra.mxu0 0.0
        %4309 = vmatprep.subr.mxu0 0.0
        %4310 = vmatpush1.msra.mxu0 0.0
        %4311 = vmatprep.subr.mxu0 0.0
        %4312 = vmatpush1.msra.mxu0 0.0
        %4313 = vmatprep.subr.mxu0 0.0
        %4314 = vmatpush1.msra.mxu0 0.0
        %4315 = vmatprep.subr.mxu0 0.0
        %4316 = vmatpush1.msra.mxu0 0.0
        %4317 = vmatprep.subr.mxu0 0.0
        %4318 = vmatpush1.msra.mxu0 0.0
        %4319 = vmatprep.subr.mxu0 0.0
        %4320 = vmatpush1.msra.mxu0 0.0
        %4321 = vmatprep.subr.mxu0 0.0
        %4322 = vmatpush1.msra.mxu0 0.0
        %4323 = vmatprep.subr.mxu0 0.0
        %4324 = vmatpush1.msra.mxu0 0.0
        %4325 = vmatprep.subr.mxu0 0.0
        %4326 = vmatpush1.msra.mxu0 0.0
        %4327 = vmatprep.subr.mxu0 0.0
        %4328 = vmatpush1.msra.mxu0 0.0
        %4329 = vmatprep.mubr.f32.mxu0 %v4263
        %4330 = vmatmul.mubr.f32.gmra.mrb[0].mxu0 %v4257
        %v4331 = vpop.f32.mrb[0].mxu0
        %v4332 = vadd.f32 0.0, %v4331
        %v4333 = vpop.f32.mrb[0].mxu0
        %4334 = vdwg.mxu0
        %v4335 = vadd.f32 %v4229, %v4332
        %s4336 = scalar_lea.vmem [#allocation5], 22
        %v4337 = vld [vmem:[%s4336] ss:$8 sm:$0x3]
        %s4338 = scalar_lea.vmem %s7, 2240
        %v4339 = vld [vmem:[%s4338] sm:$0xff]
        %v4340 = vld [vmem:[%s4338 + $0x8] sm:$0xff]
        %v4341 = vld [vmem:[%s4338 + $0x10] sm:$0xff]
        %v4342 = vld [vmem:[%s4338 + $0x18] sm:$0xff]
        %v4343 = vld [vmem:[%s4338 + $0x20] sm:$0xff]
        %v4344 = vld [vmem:[%s4338 + $0x28] sm:$0xff]
        %v4345 = vld [vmem:[%s4338 + $0x30] sm:$0xff]
        %v4346 = vld [vmem:[%s4338 + $0x38] sm:$0xff]
        %v4347 = vld [vmem:[%s4338 + $0x40] sm:$0xff]
        %v4348 = vld [vmem:[%s4338 + $0x48] sm:$0xff]
        %v4349 = vld [vmem:[%s4338 + $0x50] sm:$0xff]
        %v4350 = vld [vmem:[%s4338 + $0x58] sm:$0xff]
        %v4351 = vld [vmem:[%s4338 + $0x60] sm:$0xff]
        %v4352 = vld [vmem:[%s4338 + $0x68] sm:$0xff]
        %v4353 = vld [vmem:[%s4338 + $0x70] sm:$0xff]
        %v4354 = vld [vmem:[%s4338 + $0x78] sm:$0xff]
        %v4355 = vld [vmem:[%s4338 + $0x80] sm:$0xff]
        %v4356 = vld [vmem:[%s4338 + $0x88] sm:$0xff]
        %v4357 = vld [vmem:[%s4338 + $0x90] sm:$0xff]
        %v4358 = vld [vmem:[%s4338 + $0x98] sm:$0xff]
        %v4360 = vlaneseq
        %v4361 = vshrl.u32 %v4360, 7
        %v4362 = vsub.s32 0, %v4361
        %v4363 = vrot.slane %v4337, %v4362
        %v4364 = vlaneseq
        %v4365 = vshrl.u32 %v4364, 7
        %v4366 = vsub.s32 1, %v4365
        %v4367 = vrot.slane %v4337, %v4366
        %v4369 = vsel %vm2849, %v4367, 0
        %4371 = vmatprep.subr.mxu0 0.0
        %4372 = vmatpush1.msra.mxu0 %v4339
        %4373 = vmatprep.subr.mxu0 0.0
        %4374 = vmatpush1.msra.mxu0 %v4340
        %4375 = vmatprep.subr.mxu0 0.0
        %4376 = vmatpush1.msra.mxu0 %v4341
        %4377 = vmatprep.subr.mxu0 0.0
        %4378 = vmatpush1.msra.mxu0 %v4342
        %4379 = vmatprep.subr.mxu0 0.0
        %4380 = vmatpush1.msra.mxu0 %v4343
        %4381 = vmatprep.subr.mxu0 0.0
        %4382 = vmatpush1.msra.mxu0 %v4344
        %4383 = vmatprep.subr.mxu0 0.0
        %4384 = vmatpush1.msra.mxu0 %v4345
        %4385 = vmatprep.subr.mxu0 0.0
        %4386 = vmatpush1.msra.mxu0 %v4346
        %4387 = vmatprep.subr.mxu0 0.0
        %4388 = vmatpush1.msra.mxu0 %v4347
        %4389 = vmatprep.subr.mxu0 0.0
        %4390 = vmatpush1.msra.mxu0 %v4348
        %4391 = vmatprep.subr.mxu0 0.0
        %4392 = vmatpush1.msra.mxu0 %v4349
        %4393 = vmatprep.subr.mxu0 0.0
        %4394 = vmatpush1.msra.mxu0 %v4350
        %4395 = vmatprep.subr.mxu0 0.0
        %4396 = vmatpush1.msra.mxu0 %v4351
        %4397 = vmatprep.subr.mxu0 0.0
        %4398 = vmatpush1.msra.mxu0 %v4352
        %4399 = vmatprep.subr.mxu0 0.0
        %4400 = vmatpush1.msra.mxu0 %v4353
        %4401 = vmatprep.subr.mxu0 0.0
        %4402 = vmatpush1.msra.mxu0 %v4354
        %4403 = vmatprep.subr.mxu0 0.0
        %4404 = vmatpush1.msra.mxu0 %v4355
        %4405 = vmatprep.subr.mxu0 0.0
        %4406 = vmatpush1.msra.mxu0 %v4356
        %4407 = vmatprep.subr.mxu0 0.0
        %4408 = vmatpush1.msra.mxu0 %v4357
        %4409 = vmatprep.subr.mxu0 0.0
        %4410 = vmatpush1.msra.mxu0 %v4358
        %4411 = vmatprep.subr.mxu0 0.0
        %4412 = vmatpush1.msra.mxu0 0.0
        %4413 = vmatprep.subr.mxu0 0.0
        %4414 = vmatpush1.msra.mxu0 0.0
        %4415 = vmatprep.subr.mxu0 0.0
        %4416 = vmatpush1.msra.mxu0 0.0
        %4417 = vmatprep.subr.mxu0 0.0
        %4418 = vmatpush1.msra.mxu0 0.0
        %4419 = vmatprep.subr.mxu0 0.0
        %4420 = vmatpush1.msra.mxu0 0.0
        %4421 = vmatprep.subr.mxu0 0.0
        %4422 = vmatpush1.msra.mxu0 0.0
        %4423 = vmatprep.subr.mxu0 0.0
        %4424 = vmatpush1.msra.mxu0 0.0
        %4425 = vmatprep.subr.mxu0 0.0
        %4426 = vmatpush1.msra.mxu0 0.0
        %4427 = vmatprep.subr.mxu0 0.0
        %4428 = vmatpush1.msra.mxu0 0.0
        %4429 = vmatprep.subr.mxu0 0.0
        %4430 = vmatpush1.msra.mxu0 0.0
        %4431 = vmatprep.subr.mxu0 0.0
        %4432 = vmatpush1.msra.mxu0 0.0
        %4433 = vmatprep.subr.mxu0 0.0
        %4434 = vmatpush1.msra.mxu0 0.0
        %4435 = vmatprep.mubr.f32.mxu0 %v4369
        %4436 = vmatmul.mubr.f32.gmra.mrb[0].mxu0 %v4363
        %v4437 = vpop.f32.mrb[0].mxu0
        %v4438 = vadd.f32 0.0, %v4437
        %v4439 = vpop.f32.mrb[0].mxu0
        %4440 = vdwg.mxu0
        %v4441 = vadd.f32 %v4335, %v4438
        %s4442 = scalar_lea.vmem [#allocation5], 23
        %v4443 = vld [vmem:[%s4442] ss:$8 sm:$0x3]
        %s4444 = scalar_lea.vmem %s7, 2400
        %v4445 = vld [vmem:[%s4444] sm:$0xff]
        %v4446 = vld [vmem:[%s4444 + $0x8] sm:$0xff]
        %v4447 = vld [vmem:[%s4444 + $0x10] sm:$0xff]
        %v4448 = vld [vmem:[%s4444 + $0x18] sm:$0xff]
        %v4449 = vld [vmem:[%s4444 + $0x20] sm:$0xff]
        %v4450 = vld [vmem:[%s4444 + $0x28] sm:$0xff]
        %v4451 = vld [vmem:[%s4444 + $0x30] sm:$0xff]
        %v4452 = vld [vmem:[%s4444 + $0x38] sm:$0xff]
        %v4453 = vld [vmem:[%s4444 + $0x40] sm:$0xff]
        %v4454 = vld [vmem:[%s4444 + $0x48] sm:$0xff]
        %v4455 = vld [vmem:[%s4444 + $0x50] sm:$0xff]
        %v4456 = vld [vmem:[%s4444 + $0x58] sm:$0xff]
        %v4457 = vld [vmem:[%s4444 + $0x60] sm:$0xff]
        %v4458 = vld [vmem:[%s4444 + $0x68] sm:$0xff]
        %v4459 = vld [vmem:[%s4444 + $0x70] sm:$0xff]
        %v4460 = vld [vmem:[%s4444 + $0x78] sm:$0xff]
        %v4461 = vld [vmem:[%s4444 + $0x80] sm:$0xff]
        %v4462 = vld [vmem:[%s4444 + $0x88] sm:$0xff]
        %v4463 = vld [vmem:[%s4444 + $0x90] sm:$0xff]
        %v4464 = vld [vmem:[%s4444 + $0x98] sm:$0xff]
        %v4466 = vlaneseq
        %v4467 = vshrl.u32 %v4466, 7
        %v4468 = vsub.s32 0, %v4467
        %v4469 = vrot.slane %v4443, %v4468
        %v4470 = vlaneseq
        %v4471 = vshrl.u32 %v4470, 7
        %v4472 = vsub.s32 1, %v4471
        %v4473 = vrot.slane %v4443, %v4472
        %v4475 = vsel %vm2849, %v4473, 0
        %4477 = vmatprep.subr.mxu0 0.0
        %4478 = vmatpush1.msra.mxu0 %v4445
        %4479 = vmatprep.subr.mxu0 0.0
        %4480 = vmatpush1.msra.mxu0 %v4446
        %4481 = vmatprep.subr.mxu0 0.0
        %4482 = vmatpush1.msra.mxu0 %v4447
        %4483 = vmatprep.subr.mxu0 0.0
        %4484 = vmatpush1.msra.mxu0 %v4448
        %4485 = vmatprep.subr.mxu0 0.0
        %4486 = vmatpush1.msra.mxu0 %v4449
        %4487 = vmatprep.subr.mxu0 0.0
        %4488 = vmatpush1.msra.mxu0 %v4450
        %4489 = vmatprep.subr.mxu0 0.0
        %4490 = vmatpush1.msra.mxu0 %v4451
        %4491 = vmatprep.subr.mxu0 0.0
        %4492 = vmatpush1.msra.mxu0 %v4452
        %4493 = vmatprep.subr.mxu0 0.0
        %4494 = vmatpush1.msra.mxu0 %v4453
        %4495 = vmatprep.subr.mxu0 0.0
        %4496 = vmatpush1.msra.mxu0 %v4454
        %4497 = vmatprep.subr.mxu0 0.0
        %4498 = vmatpush1.msra.mxu0 %v4455
        %4499 = vmatprep.subr.mxu0 0.0
        %4500 = vmatpush1.msra.mxu0 %v4456
        %4501 = vmatprep.subr.mxu0 0.0
        %4502 = vmatpush1.msra.mxu0 %v4457
        %4503 = vmatprep.subr.mxu0 0.0
        %4504 = vmatpush1.msra.mxu0 %v4458
        %4505 = vmatprep.subr.mxu0 0.0
        %4506 = vmatpush1.msra.mxu0 %v4459
        %4507 = vmatprep.subr.mxu0 0.0
        %4508 = vmatpush1.msra.mxu0 %v4460
        %4509 = vmatprep.subr.mxu0 0.0
        %4510 = vmatpush1.msra.mxu0 %v4461
        %4511 = vmatprep.subr.mxu0 0.0
        %4512 = vmatpush1.msra.mxu0 %v4462
        %4513 = vmatprep.subr.mxu0 0.0
        %4514 = vmatpush1.msra.mxu0 %v4463
        %4515 = vmatprep.subr.mxu0 0.0
        %4516 = vmatpush1.msra.mxu0 %v4464
        %4517 = vmatprep.subr.mxu0 0.0
        %4518 = vmatpush1.msra.mxu0 0.0
        %4519 = vmatprep.subr.mxu0 0.0
        %4520 = vmatpush1.msra.mxu0 0.0
        %4521 = vmatprep.subr.mxu0 0.0
        %4522 = vmatpush1.msra.mxu0 0.0
        %4523 = vmatprep.subr.mxu0 0.0
        %4524 = vmatpush1.msra.mxu0 0.0
        %4525 = vmatprep.subr.mxu0 0.0
        %4526 = vmatpush1.msra.mxu0 0.0
        %4527 = vmatprep.subr.mxu0 0.0
        %4528 = vmatpush1.msra.mxu0 0.0
        %4529 = vmatprep.subr.mxu0 0.0
        %4530 = vmatpush1.msra.mxu0 0.0
        %4531 = vmatprep.subr.mxu0 0.0
        %4532 = vmatpush1.msra.mxu0 0.0
        %4533 = vmatprep.subr.mxu0 0.0
        %4534 = vmatpush1.msra.mxu0 0.0
        %4535 = vmatprep.subr.mxu0 0.0
        %4536 = vmatpush1.msra.mxu0 0.0
        %4537 = vmatprep.subr.mxu0 0.0
        %4538 = vmatpush1.msra.mxu0 0.0
        %4539 = vmatprep.subr.mxu0 0.0
        %4540 = vmatpush1.msra.mxu0 0.0
        %4541 = vmatprep.mubr.f32.mxu0 %v4475
        %4542 = vmatmul.mubr.f32.gmra.mrb[0].mxu0 %v4469
        %v4543 = vpop.f32.mrb[0].mxu0
        %v4544 = vadd.f32 0.0, %v4543
        %v4545 = vpop.f32.mrb[0].mxu0
        %4546 = vdwg.mxu0
        %v4547 = vadd.f32 %v4441, %v4544
        %v4548 = vsub.f32 0.0, %v4547
        %v4549 = vmul.f32 %v4548, 1.442695
        %v4550 = vpow.pop %v4549
        %v4551 = vadd.f32 %v4550, 1.0
        %v4552 = vrcp.pop %v4551
        %v4553 = vmul.f32 1.0, %v4552
        %vm4554 = vcmask 8192
        %4555 = vst.msk [vmem:[%s324] sm:$0x1] %vm4554, %v4553
        %s4556 = sand.u32 %s225, 1
        %s4557 = scalar_lea.sflag [#allocation7], %s4556
        %s4558 = sand.u32 %s225, 1
        %s4559 = scalar_lea.vmem [#allocation6], %s4558
        // Predicated region
        $region57: #{_lambda_.1} parent=55 // pred_check
          %p4560 = pneg %p235
        $region58: #{_lambda_.1} parent=55 // pred_check_branch
          %4562 = sbr.rel (%p4560) target = $region60
        $region59: #{_lambda_.1} parent=55 // pred_region
          %s4564 = ssub.s32 16, 16
          %4565 = vsyncadd %s4557, %s4564
          %s4566 = smul.addr %s23, 16
          %s4567 = scalar_lea.hbm %s9, %s4566
          %s4569 = sshll.u32 %s4559, 4
          %s4570 = int_to_ptr.vmem [resolvable:$true] %s4569
          %4572 = dma.vmem_to_hbm [thread:$0]  %s4570, 16, %s4567, %s4557
        $region60: #{_lambda_.1} parent=55 // pred_fallthru
          _
      $region56: #{_lambda_.1} parent=5 // pred_fallthru
        _
      %p4573 = scmp.le.s32.totalorder 2, %s18
      // Predicated region
      $region61: #{_lambda_.1} parent=5 // pred_check
        %p4574 = pneg %p4573
      $region62: #{_lambda_.1} parent=5 // pred_check_branch
        %4576 = sbr.rel (%p4574) target = $region64
      $region63: #{_lambda_.1} parent=5 // pred_region
        %s4577 = ssub.s32 %s18, 2
        // Predicated region
        $region65: #{_lambda_.1} parent=63 // pred_check
          %p4578 = pneg %p241
        $region66: #{_lambda_.1} parent=63 // pred_check_branch
          %4580 = sbr.rel (%p4578) target = $region68
        $region67: #{_lambda_.1} parent=63 // pred_region
          %s4581 = sand.u32 %s226, 1
          %s4582 = scalar_lea.sflag [#allocation7], %s4581
          %s4583 = sand.u32 %s226, 1
          %s4584 = scalar_lea.vmem [#allocation6], %s4583
          %4585 = dma.done %s4582, 16
        $region68: #{_lambda_.1} parent=63 // pred_fallthru
          _
      $region64: #{_lambda_.1} parent=5 // pred_fallthru
        _
    $region6: #{_lambda_.1} parent=1 // loop_footer
      %s22 = sadd.s32 1, %s18
    $region7: #{_lambda_.1} parent=1 // loop_footer_branch
      %17 = sbr.rel target = $region3
    $region8: #{_lambda_.1} parent=1 // loop_exit
      _
    %4586 = vsyncpa [#allocation7], 1
    %s4587 = scalar_lea.sflag [#allocation7], 1
    %4588 = vsyncpa %s4587, 1

</llo_original>
